<compile_context>
chip_gen: v6e
topology: v6e:2x2x1
jax: 0.10.0
libtpu: 0.0.40
codegen_flags: <defaults>
</compile_context>

<pallas_src>
import numpy as np

import jax
import jax.numpy as jnp
from jax.experimental import pallas as pl
from jax.experimental.pallas import tpu as pltpu


# ----------------------------------------------------------------------------
# Fused kernel: one image per grid step.
#
# Layouts (per image):
#   x         : (7, 4, 28) host-side -> passed as (4, 7, 28): image row 4a+r
#               lives at [r, a, :].
#   h1        : row-phase split h1E/h1O, each (7, 224), lane = 14*w + ... = w*16 + c
#   h2        : (7, 224), lane = w*32 + c
#   d1, d2E/O : (7, 224)
#   recon     : (7, 112), lane = r*28 + ow, row = a  (image row = 4a + r)
# ----------------------------------------------------------------------------
def _vae_kernel(x_ref, eps_ref,
                m1_ref, b1_ref, m2_ref, b2_ref, w3_ref, b3_ref,
                wh_ref, bh_ref, wd1_ref, bd1_ref,
                md2_ref, bd2_ref, md3_ref, bd3_ref,
                stats_ref, recon_ref):
    f32 = jnp.float32
    bf16 = jnp.bfloat16

    def mm(a, w):
        # bf16 MXU matmul, f32 accumulation.
        return jnp.dot(a.astype(bf16), w, preferred_element_type=f32)

    zrow28 = jnp.zeros((1, 28), f32)
    zrow224 = jnp.zeros((1, 224), f32)

    # ---------------- encoder ----------------
    # mod-4 row phases of the 28x28 image: p_r[a, :] = x[4a + r, :]
    p0 = x_ref[0]
    p1 = x_ref[1]
    p2 = x_ref[2]
    p3 = x_ref[3]
    p3m = jnp.concatenate([zrow28, p3[:6, :]], axis=0)        # p3[a-1], zero at a=0

    # enc1: Conv2d(1,16,3,s2,p1). h1 row 2a uses x rows 4a-1,4a,4a+1;
    # row 2a+1 uses 4a+1,4a+2,4a+3. Width taps + channels folded into m1[kh].
    m1_0, m1_1, m1_2 = m1_ref[0], m1_ref[1], m1_ref[2]
    b1 = b1_ref[...]
    h1e = jnp.maximum(mm(p3m, m1_0) + mm(p0, m1_1) + mm(p1, m1_2) + b1, 0.0)  # (7,224)
    h1o = jnp.maximum(mm(p1, m1_0) + mm(p2, m1_1) + mm(p3, m1_2) + b1, 0.0)   # (7,224)

    # enc2: Conv2d(16,32,3,s2,p1). Output row i uses h1 rows 2i-1, 2i, 2i+1.
    h1om = jnp.concatenate([zrow224, h1o[:6, :]], axis=0)      # h1 row 2i-1
    m2_0, m2_1, m2_2 = m2_ref[0], m2_ref[1], m2_ref[2]
    h2 = jnp.maximum(mm(h1om, m2_0) + mm(h1e, m2_1) + mm(h1o, m2_2)
                     + b2_ref[...], 0.0)                        # (7,224)

    # enc3: Conv2d(32,64,7) valid on 7x7 == Linear over the (kh, kw, ci) flat vector.
    h2row = jnp.concatenate([h2[kh:kh + 1, :] for kh in range(7)], axis=1)    # (1,1568)
    h3 = jnp.maximum(mm(h2row, w3_ref[...]) + b3_ref[...], 0.0)               # (1,64)

    # ---------------- latent heads + reparameterisation ----------------
    stats = mm(h3, wh_ref[...]) + bh_ref[...]                   # (1,128) = [mu | logvar]
    stats_ref[...] = stats
    mu = stats[:, :64]
    logvar = stats[:, 64:]
    z = mu + jnp.exp(0.5 * logvar) * eps_ref[...]               # (1,64)

    # ---------------- decoder ----------------
    # dec1: ConvTranspose2d(64,32,7) on a 1x1 input == per-output-row Linear.
    d1 = jnp.concatenate([mm(z, wd1_ref[h]) for h in range(7)], axis=0)       # (7,224)
    d1 = jnp.maximum(d1 + bd1_ref[...], 0.0)
    d1m = jnp.concatenate([d1[1:, :], zrow224], axis=0)         # d1[a+1], zero at a=6

    # dec2: ConvTranspose2d(32,16,3,s2,p1,op1). Output rows split by parity:
    #   row 2a   <- d1[a]            (kh=1)
    #   row 2a+1 <- d1[a], d1[a+1]   (kh=2, kh=0)
    md2_0, md2_1, md2_2 = md2_ref[0], md2_ref[1], md2_ref[2]
    bd2 = bd2_ref[...]
    d2e = jnp.maximum(mm(d1, md2_1) + bd2, 0.0)                 # d2 rows 2a   (7,224)
    d2o = jnp.maximum(mm(d1, md2_2) + mm(d1m, md2_0) + bd2, 0.0)  # d2 rows 2a+1 (7,224)
    d2em = jnp.concatenate([d2e[1:, :], zrow224], axis=0)       # d2e[a+1]

    # dec3: ConvTranspose2d(16,1,3,s2,p1,op1). Output row 4a+r:
    #   r=0: d2e[a](kh=1)  r=1: d2e[a](kh=2)+d2o[a](kh=0)
    #   r=2: d2o[a](kh=1)  r=3: d2o[a](kh=2)+d2e[a+1](kh=0)
    md3_0, md3_1, md3_2 = md3_ref[0], md3_ref[1], md3_ref[2]
    r0 = mm(d2e, md3_1)
    r1 = mm(d2e, md3_2) + mm(d2o, md3_0)
    r2 = mm(d2o, md3_1)
    r3 = mm(d2o, md3_2) + mm(d2em, md3_0)
    pre = jnp.concatenate([r0, r1, r2, r3], axis=1) + bd3_ref[...]            # (7,112)
    recon_ref[...] = jax.nn.sigmoid(pre)


# ----------------------------------------------------------------------------
# Parameter preparation: PyTorch-layout weights -> kernel-ready matmul form.
# ----------------------------------------------------------------------------
def init_raw_params(key):
    """Deterministic PyTorch-layout f32 parameters."""
    def u(k, shape, fan_in):
        bound = 1.0 / float(np.sqrt(fan_in))
        return jax.random.uniform(k, shape, jnp.float32, -bound, bound)

    ks = jax.random.split(key, 16)
    return {
        "w_enc1": u(ks[0], (16, 1, 3, 3), 9),      "b_enc1": u(ks[1], (16,), 9),
        "w_enc2": u(ks[2], (32, 16, 3, 3), 144),   "b_enc2": u(ks[3], (32,), 144),
        "w_enc3": u(ks[4], (64, 32, 7, 7), 1568),  "b_enc3": u(ks[5], (64,), 1568),
        "w_mu":   u(ks[6], (64, 64), 64),          "b_mu":   u(ks[7], (64,), 64),
        "w_lv":   u(ks[8], (64, 64), 64),          "b_lv":   u(ks[9], (64,), 64),
        "w_dec1": u(ks[10], (64, 32, 7, 7), 64 * 49), "b_dec1": u(ks[11], (32,), 64 * 49),
        "w_dec2": u(ks[12], (32, 16, 3, 3), 32 * 9),  "b_dec2": u(ks[13], (16,), 32 * 9),
        "w_dec3": u(ks[14], (16, 1, 3, 3), 16 * 9),   "b_dec3": u(ks[15], (1,), 16 * 9),
    }


def prepare_kernel_params(raw):
    """Fold width taps / channel mixing of every (transposed) conv into per-kh
    dense matrices so the kernel only needs row shifts + matmuls."""
    r = {k: np.asarray(v, np.float32) for k, v in raw.items()}
    w1, w2, w3 = r["w_enc1"], r["w_enc2"], r["w_enc3"]
    wd1, wd2, wd3 = r["w_dec1"], r["w_dec2"], r["w_dec3"]

    # enc1: rows iw in [0,28), cols (ow, co) -> W1[co,0,kh,kw] at iw = 2ow-1+kw
    m1 = np.zeros((3, 28, 14 * 16), np.float32)
    for kh in range(3):
        for ow in range(14):
            for kw in range(3):
                iw = 2 * ow - 1 + kw
                if 0 <= iw < 28:
                    m1[kh, iw, ow * 16:(ow + 1) * 16] = w1[:, 0, kh, kw]

    # enc2: rows (iw, ci), cols (ow, co)
    m2 = np.zeros((3, 14 * 16, 7 * 32), np.float32)
    for kh in range(3):
        for ow in range(7):
            for kw in range(3):
                iw = 2 * ow - 1 + kw
                if 0 <= iw < 14:
                    m2[kh, iw * 16:(iw + 1) * 16, ow * 32:(ow + 1) * 32] = w2[:, :, kh, kw].T

    # enc3: Linear over (kh, kw, ci)-flattened activation
    w3f = np.transpose(w3, (2, 3, 1, 0)).reshape(7 * 7 * 32, 64)

    # concatenated mu|logvar head -> lane-dense (64, 128)
    wh = np.concatenate([r["w_mu"].T, r["w_lv"].T], axis=1)
    bh = np.concatenate([r["b_mu"], r["b_lv"]])

    # dec1: ConvTranspose on 1x1 input -> per-output-row Linear (64 -> 7*32)
    wd1s = np.transpose(wd1, (2, 0, 3, 1)).reshape(7, 64, 7 * 32)

    # dec2: rows (iw, ci), cols (ow, co) -> Wd2[ci,co,kh,kw] at ow = 2iw-1+kw
    md2 = np.zeros((3, 7 * 32, 14 * 16), np.float32)
    for kh in range(3):
        for iw in range(7):
            for kw in range(3):
                ow = 2 * iw - 1 + kw
                if 0 <= ow < 14:
                    md2[kh, iw * 32:(iw + 1) * 32, ow * 16:(ow + 1) * 16] = wd2[:, :, kh, kw]

    # dec3: rows (iw, ci), cols ow
    md3 = np.zeros((3, 14 * 16, 28), np.float32)
    for kh in range(3):
        for iw in range(14):
            for kw in range(3):
                ow = 2 * iw - 1 + kw
                if 0 <= ow < 28:
                    md3[kh, iw * 16:(iw + 1) * 16, ow] = wd3[:, 0, kh, kw]

    bf, f32 = jnp.bfloat16, jnp.float32
    return {
        "m1": jnp.asarray(m1, bf),  "b1": jnp.asarray(np.tile(r["b_enc1"], 14)[None, :], f32),
        "m2": jnp.asarray(m2, bf),  "b2": jnp.asarray(np.tile(r["b_enc2"], 7)[None, :], f32),
        "w3": jnp.asarray(w3f, bf), "b3": jnp.asarray(r["b_enc3"][None, :], f32),
        "wh": jnp.asarray(wh, bf),  "bh": jnp.asarray(bh[None, :], f32),
        "wd1": jnp.asarray(wd1s, bf), "bd1": jnp.asarray(np.tile(r["b_dec1"], 7)[None, :], f32),
        "md2": jnp.asarray(md2, bf),  "bd2": jnp.asarray(np.tile(r["b_dec2"], 14)[None, :], f32),
        "md3": jnp.asarray(md3, bf),  "bd3": jnp.asarray(r["b_dec3"].reshape(1, 1), f32),
    }


# ----------------------------------------------------------------------------
# Forward pass (NCHW API, matching the PyTorch module)
# ----------------------------------------------------------------------------
@jax.jit
def vae_forward(kp, x, eps):
    B = x.shape[0]
    assert x.shape[1:] == (1, 28, 28), "architecture requires 1x28x28 input"

    # mod-4 row-phase view of the image: (4, B, 7, 28); element (r,b,a,w) = x[b,0,4a+r,w]
    x_ph = x.reshape(B, 7, 4, 28).transpose(2, 0, 1, 3)
    eps3 = eps.reshape(B, 1, 64)

    weight_args = (kp["m1"], kp["b1"], kp["m2"], kp["b2"], kp["w3"], kp["b3"],
                   kp["wh"], kp["bh"], kp["wd1"], kp["bd1"],
                   kp["md2"], kp["bd2"], kp["md3"], kp["bd3"])

    def const_spec(a):
        nd = a.ndim
        return pl.BlockSpec(a.shape, lambda b, nd=nd: (0,) * nd)

    in_specs = ([pl.BlockSpec((4, None, 7, 28), lambda b: (0, b, 0, 0)),
                 pl.BlockSpec((None, 1, 64), lambda b: (b, 0, 0))]
                + [const_spec(a) for a in weight_args])
    out_specs = (pl.BlockSpec((None, 1, 128), lambda b: (b, 0, 0)),
                 pl.BlockSpec((None, 7, 112), lambda b: (b, 0, 0)))
    out_shape = (jax.ShapeDtypeStruct((B, 1, 128), jnp.float32),
                 jax.ShapeDtypeStruct((B, 7, 112), jnp.float32))

    stats, recon = pl.pallas_call(
        _vae_kernel,
        grid=(B,),
        in_specs=in_specs,
        out_specs=out_specs,
        out_shape=out_shape,
        compiler_params=pltpu.CompilerParams(dimension_semantics=("parallel",)),
        cost_estimate=pl.CostEstimate(flops=6_000_000 * B,
                                      transcendentals=1_000 * B,
                                      bytes_accessed=1_250_000 + 8_000 * B),
    )(x_ph, eps3, *weight_args)

    stats = stats.reshape(B, 128)
    mu, logvar = stats[:, :64], stats[:, 64:]
    recon = recon.reshape(B, 1, 28, 28)   # rows come out in (a, r) = 4a+r order: free reshape
    return recon, mu, logvar


# ----------------------------------------------------------------------------
# Pure-JAX f32 reference (lax.conv_general_dilated) for numerical validation.
# ----------------------------------------------------------------------------
def ref_forward(raw, x, eps):
    P = jax.lax.Precision.HIGHEST

    def conv(h, w, b, stride, pad):
        y = jax.lax.conv_general_dilated(
            h, w, (stride, stride), ((pad, pad), (pad, pad)),
            dimension_numbers=("NCHW", "OIHW", "NCHW"), precision=P)
        return y + b[None, :, None, None]

    def convT(h, w, b, stride, pad, out_pad):
        k = w.shape[2]
        lo, hi = k - 1 - pad, k - 1 - pad + out_pad
        y = jax.lax.conv_general_dilated(
            h, jnp.flip(w, (2, 3)), (1, 1), ((lo, hi), (lo, hi)),
            lhs_dilation=(stride, stride),
            dimension_numbers=("NCHW", "IOHW", "NCHW"), precision=P)
        return y + b[None, :, None, None]

    h = jax.nn.relu(conv(x, raw["w_enc1"], raw["b_enc1"], 2, 1))
    h = jax.nn.relu(conv(h, raw["w_enc2"], raw["b_enc2"], 2, 1))
    h = jax.nn.relu(conv(h, raw["w_enc3"], raw["b_enc3"], 1, 0))
    h = h.reshape(h.shape[0], 64)
    mu = jnp.dot(h, raw["w_mu"].T, precision=P) + raw["b_mu"]
    logvar = jnp.dot(h, raw["w_lv"].T, precision=P) + raw["b_lv"]
    z = mu + jnp.exp(0.5 * logvar) * eps
    d = z.reshape(-1, 64, 1, 1)
    d = jax.nn.relu(convT(d, raw["w_dec1"], raw["b_dec1"], 1, 0, 0))
    d = jax.nn.relu(convT(d, raw["w_dec2"], raw["b_dec2"], 2, 1, 1))
    recon = jax.nn.sigmoid(convT(d, raw["w_dec3"], raw["b_dec3"], 2, 1, 1))
    return recon, mu, logvar


# ----------------------------------------------------------------------------
if __name__ == "__main__":
    key = jax.random.PRNGKey(0)
    k_param, k_x, k_eps = jax.random.split(key, 3)

    raw = init_raw_params(k_param)
    kp = prepare_kernel_params(raw)

    B = 2
    x = jax.random.normal(k_x, (B, 1, 28, 28), dtype=jnp.float32)
    eps = jax.random.normal(k_eps, (B, 64), dtype=jnp.float32)

    recon, mu, logvar = vae_forward(kp, x, eps)
    jax.block_until_ready((recon, mu, logvar))

    assert recon.shape == (B, 1, 28, 28)
    assert mu.shape == (B, 64) and logvar.shape == (B, 64)

    # Reference check. Kernel matmuls use bf16 inputs with f32 accumulation
    # (~3 decimal digits per layer); tolerance set accordingly.
    recon_r, mu_r, logvar_r = ref_forward(raw, x, eps)
    err_recon = float(jnp.max(jnp.abs(recon - recon_r)))
    err_mu = float(jnp.max(jnp.abs(mu - mu_r)))
    err_lv = float(jnp.max(jnp.abs(logvar - logvar_r)))
    assert err_recon < 3e-2, ("recon mismatch", err_recon)
    assert err_mu < 3e-2, ("mu mismatch", err_mu)
    assert err_lv < 3e-2, ("logvar mismatch", err_lv)

    print("KERNEL_OK")
</pallas_src>

<mosaic_0001>
module attributes {stable_mosaic.version = 11 : i64} {
  func.func @_vae_kernel(%arg0: i32, %arg1: memref<4x1x7x28xf32, #tpu.memory_space<vmem>>, %arg2: memref<1x1x64xf32, #tpu.memory_space<vmem>>, %arg3: memref<3x28x224xbf16, #tpu.memory_space<vmem>>, %arg4: memref<1x224xf32, #tpu.memory_space<vmem>>, %arg5: memref<3x224x224xbf16, #tpu.memory_space<vmem>>, %arg6: memref<1x224xf32, #tpu.memory_space<vmem>>, %arg7: memref<1568x64xbf16, #tpu.memory_space<vmem>>, %arg8: memref<1x64xf32, #tpu.memory_space<vmem>>, %arg9: memref<64x128xbf16, #tpu.memory_space<vmem>>, %arg10: memref<1x128xf32, #tpu.memory_space<vmem>>, %arg11: memref<7x64x224xbf16, #tpu.memory_space<vmem>>, %arg12: memref<1x224xf32, #tpu.memory_space<vmem>>, %arg13: memref<3x224x224xbf16, #tpu.memory_space<vmem>>, %arg14: memref<1x224xf32, #tpu.memory_space<vmem>>, %arg15: memref<3x224x28xbf16, #tpu.memory_space<vmem>>, %arg16: memref<1x1xf32, #tpu.memory_space<vmem>>, %arg17: memref<1x1x128xf32, #tpu.memory_space<vmem>>, %arg18: memref<1x7x112xf32, #tpu.memory_space<vmem>>) attributes {dimension_semantics = [#tpu.dimension_semantics<parallel>], iteration_bounds = array<i64: 2>, scalar_prefetch = 0 : i64, scratch_operands = 0 : i64, tpu.core_type = #tpu.core_type<tc>, window_params = [{transform_indices = @transform_0, window_bounds = array<i64: 4, 1, 7, 28>}, {transform_indices = @transform_1, window_bounds = array<i64: 1, 1, 64>}, {pipeline_mode = #tpu.pipeline_mode<synchronous>, transform_indices = @transform_2, window_bounds = array<i64: 3, 28, 224>}, {pipeline_mode = #tpu.pipeline_mode<synchronous>, transform_indices = @transform_3, window_bounds = array<i64: 1, 224>}, {pipeline_mode = #tpu.pipeline_mode<synchronous>, transform_indices = @transform_4, window_bounds = array<i64: 3, 224, 224>}, {pipeline_mode = #tpu.pipeline_mode<synchronous>, transform_indices = @transform_5, window_bounds = array<i64: 1, 224>}, {pipeline_mode = #tpu.pipeline_mode<synchronous>, transform_indices = @transform_6, window_bounds = array<i64: 1568, 64>}, {pipeline_mode = #tpu.pipeline_mode<synchronous>, transform_indices = @transform_7, window_bounds = array<i64: 1, 64>}, {pipeline_mode = #tpu.pipeline_mode<synchronous>, transform_indices = @transform_8, window_bounds = array<i64: 64, 128>}, {pipeline_mode = #tpu.pipeline_mode<synchronous>, transform_indices = @transform_9, window_bounds = array<i64: 1, 128>}, {pipeline_mode = #tpu.pipeline_mode<synchronous>, transform_indices = @transform_10, window_bounds = array<i64: 7, 64, 224>}, {pipeline_mode = #tpu.pipeline_mode<synchronous>, transform_indices = @transform_11, window_bounds = array<i64: 1, 224>}, {pipeline_mode = #tpu.pipeline_mode<synchronous>, transform_indices = @transform_12, window_bounds = array<i64: 3, 224, 224>}, {pipeline_mode = #tpu.pipeline_mode<synchronous>, transform_indices = @transform_13, window_bounds = array<i64: 1, 224>}, {pipeline_mode = #tpu.pipeline_mode<synchronous>, transform_indices = @transform_14, window_bounds = array<i64: 3, 224, 28>}, {pipeline_mode = #tpu.pipeline_mode<synchronous>, transform_indices = @transform_15, window_bounds = array<i64: 1, 1>}, {transform_indices = @transform_16, window_bounds = array<i64: 1, 1, 128>}, {transform_indices = @transform_17, window_bounds = array<i64: 1, 7, 112>}]} {
    %cst = arith.constant 0.000000e+00 : f32
    %0 = vector.broadcast %cst : f32 to vector<1x28xf32>
    %cst_0 = arith.constant 0.000000e+00 : f32
    %1 = vector.broadcast %cst_0 : f32 to vector<1x224xf32>
    %c0 = arith.constant 0 : index
    %c0_1 = arith.constant 0 : index
    %c0_2 = arith.constant 0 : index
    %c0_3 = arith.constant 0 : index
    %2 = vector.load %arg1[%c0, %c0_1, %c0_2, %c0_3] : memref<4x1x7x28xf32, #tpu.memory_space<vmem>>, vector<1x1x7x28xf32>
    %3 = vector.shape_cast %2 : vector<1x1x7x28xf32> to vector<7x28xf32>
    %c1 = arith.constant 1 : index
    %c0_4 = arith.constant 0 : index
    %c0_5 = arith.constant 0 : index
    %c0_6 = arith.constant 0 : index
    %4 = vector.load %arg1[%c1, %c0_4, %c0_5, %c0_6] : memref<4x1x7x28xf32, #tpu.memory_space<vmem>>, vector<1x1x7x28xf32>
    %5 = vector.shape_cast %4 : vector<1x1x7x28xf32> to vector<7x28xf32>
    %c2 = arith.constant 2 : index
    %c0_7 = arith.constant 0 : index
    %c0_8 = arith.constant 0 : index
    %c0_9 = arith.constant 0 : index
    %6 = vector.load %arg1[%c2, %c0_7, %c0_8, %c0_9] : memref<4x1x7x28xf32, #tpu.memory_space<vmem>>, vector<1x1x7x28xf32>
    %7 = vector.shape_cast %6 : vector<1x1x7x28xf32> to vector<7x28xf32>
    %c3 = arith.constant 3 : index
    %c0_10 = arith.constant 0 : index
    %c0_11 = arith.constant 0 : index
    %c0_12 = arith.constant 0 : index
    %8 = vector.load %arg1[%c3, %c0_10, %c0_11, %c0_12] : memref<4x1x7x28xf32, #tpu.memory_space<vmem>>, vector<1x1x7x28xf32>
    %9 = vector.shape_cast %8 : vector<1x1x7x28xf32> to vector<7x28xf32>
    %10 = vector.extract_strided_slice %9 {offsets = [0, 0], sizes = [6, 28], strides = [1, 1]} : vector<7x28xf32> to vector<6x28xf32>
    %11 = tpu.concatenate %0, %10 in 0 : vector<1x28xf32>, vector<6x28xf32> -> vector<7x28xf32>
    %c0_13 = arith.constant 0 : index
    %c0_14 = arith.constant 0 : index
    %c0_15 = arith.constant 0 : index
    %12 = vector.load %arg3[%c0_13, %c0_14, %c0_15] : memref<3x28x224xbf16, #tpu.memory_space<vmem>>, vector<1x28x224xbf16>
    %13 = vector.shape_cast %12 : vector<1x28x224xbf16> to vector<28x224xbf16>
    %c1_16 = arith.constant 1 : index
    %c0_17 = arith.constant 0 : index
    %c0_18 = arith.constant 0 : index
    %14 = vector.load %arg3[%c1_16, %c0_17, %c0_18] : memref<3x28x224xbf16, #tpu.memory_space<vmem>>, vector<1x28x224xbf16>
    %15 = vector.shape_cast %14 : vector<1x28x224xbf16> to vector<28x224xbf16>
    %c2_19 = arith.constant 2 : index
    %c0_20 = arith.constant 0 : index
    %c0_21 = arith.constant 0 : index
    %16 = vector.load %arg3[%c2_19, %c0_20, %c0_21] : memref<3x28x224xbf16, #tpu.memory_space<vmem>>, vector<1x28x224xbf16>
    %17 = vector.shape_cast %16 : vector<1x28x224xbf16> to vector<28x224xbf16>
    %c0_22 = arith.constant 0 : index
    %c0_23 = arith.constant 0 : index
    %18 = vector.load %arg4[%c0_22, %c0_23] : memref<1x224xf32, #tpu.memory_space<vmem>>, vector<1x224xf32>
    %19 = arith.truncf %11 : vector<7x28xf32> to vector<7x28xbf16>
    %cst_24 = arith.constant dense<0.000000e+00> : vector<7x224xf32>
    %20 = tpu.matmul %19, %13, %cst_24 {dimension_numbers = #tpu.dot_dimension_numbers<[1], [0], [0], [1], [0, 0, 1, 1], [], []>} : vector<7x28xbf16>, vector<28x224xbf16>, vector<7x224xf32> -> vector<7x224xf32>
    %21 = arith.truncf %3 : vector<7x28xf32> to vector<7x28xbf16>
    %cst_25 = arith.constant dense<0.000000e+00> : vector<7x224xf32>
    %22 = tpu.matmul %21, %15, %cst_25 {dimension_numbers = #tpu.dot_dimension_numbers<[1], [0], [0], [1], [0, 0, 1, 1], [], []>} : vector<7x28xbf16>, vector<28x224xbf16>, vector<7x224xf32> -> vector<7x224xf32>
    %23 = arith.addf %20, %22 : vector<7x224xf32>
    %24 = arith.truncf %5 : vector<7x28xf32> to vector<7x28xbf16>
    %cst_26 = arith.constant dense<0.000000e+00> : vector<7x224xf32>
    %25 = tpu.matmul %24, %17, %cst_26 {dimension_numbers = #tpu.dot_dimension_numbers<[1], [0], [0], [1], [0, 0, 1, 1], [], []>} : vector<7x28xbf16>, vector<28x224xbf16>, vector<7x224xf32> -> vector<7x224xf32>
    %26 = arith.addf %23, %25 : vector<7x224xf32>
    %27 = vector.broadcast %18 : vector<1x224xf32> to vector<7x224xf32>
    %28 = arith.addf %26, %27 : vector<7x224xf32>
    %cst_27 = arith.constant 0.000000e+00 : f32
    %29 = vector.broadcast %cst_27 : f32 to vector<7x224xf32>
    %30 = arith.maximumf %28, %29 : vector<7x224xf32>
    %31 = arith.truncf %5 : vector<7x28xf32> to vector<7x28xbf16>
    %cst_28 = arith.constant dense<0.000000e+00> : vector<7x224xf32>
    %32 = tpu.matmul %31, %13, %cst_28 {dimension_numbers = #tpu.dot_dimension_numbers<[1], [0], [0], [1], [0, 0, 1, 1], [], []>} : vector<7x28xbf16>, vector<28x224xbf16>, vector<7x224xf32> -> vector<7x224xf32>
    %33 = arith.truncf %7 : vector<7x28xf32> to vector<7x28xbf16>
    %cst_29 = arith.constant dense<0.000000e+00> : vector<7x224xf32>
    %34 = tpu.matmul %33, %15, %cst_29 {dimension_numbers = #tpu.dot_dimension_numbers<[1], [0], [0], [1], [0, 0, 1, 1], [], []>} : vector<7x28xbf16>, vector<28x224xbf16>, vector<7x224xf32> -> vector<7x224xf32>
    %35 = arith.addf %32, %34 : vector<7x224xf32>
    %36 = arith.truncf %9 : vector<7x28xf32> to vector<7x28xbf16>
    %cst_30 = arith.constant dense<0.000000e+00> : vector<7x224xf32>
    %37 = tpu.matmul %36, %17, %cst_30 {dimension_numbers = #tpu.dot_dimension_numbers<[1], [0], [0], [1], [0, 0, 1, 1], [], []>} : vector<7x28xbf16>, vector<28x224xbf16>, vector<7x224xf32> -> vector<7x224xf32>
    %38 = arith.addf %35, %37 : vector<7x224xf32>
    %39 = vector.broadcast %18 : vector<1x224xf32> to vector<7x224xf32>
    %40 = arith.addf %38, %39 : vector<7x224xf32>
    %cst_31 = arith.constant 0.000000e+00 : f32
    %41 = vector.broadcast %cst_31 : f32 to vector<7x224xf32>
    %42 = arith.maximumf %40, %41 : vector<7x224xf32>
    %43 = vector.extract_strided_slice %42 {offsets = [0, 0], sizes = [6, 224], strides = [1, 1]} : vector<7x224xf32> to vector<6x224xf32>
    %44 = tpu.concatenate %1, %43 in 0 : vector<1x224xf32>, vector<6x224xf32> -> vector<7x224xf32>
    %c0_32 = arith.constant 0 : index
    %c0_33 = arith.constant 0 : index
    %c0_34 = arith.constant 0 : index
    %45 = vector.load %arg5[%c0_32, %c0_33, %c0_34] : memref<3x224x224xbf16, #tpu.memory_space<vmem>>, vector<1x224x224xbf16>
    %46 = vector.shape_cast %45 : vector<1x224x224xbf16> to vector<224x224xbf16>
    %c1_35 = arith.constant 1 : index
    %c0_36 = arith.constant 0 : index
    %c0_37 = arith.constant 0 : index
    %47 = vector.load %arg5[%c1_35, %c0_36, %c0_37] : memref<3x224x224xbf16, #tpu.memory_space<vmem>>, vector<1x224x224xbf16>
    %48 = vector.shape_cast %47 : vector<1x224x224xbf16> to vector<224x224xbf16>
    %c2_38 = arith.constant 2 : index
    %c0_39 = arith.constant 0 : index
    %c0_40 = arith.constant 0 : index
    %49 = vector.load %arg5[%c2_38, %c0_39, %c0_40] : memref<3x224x224xbf16, #tpu.memory_space<vmem>>, vector<1x224x224xbf16>
    %50 = vector.shape_cast %49 : vector<1x224x224xbf16> to vector<224x224xbf16>
    %51 = arith.truncf %44 : vector<7x224xf32> to vector<7x224xbf16>
    %cst_41 = arith.constant dense<0.000000e+00> : vector<7x224xf32>
    %52 = tpu.matmul %51, %46, %cst_41 {dimension_numbers = #tpu.dot_dimension_numbers<[1], [0], [0], [1], [0, 0, 1, 1], [], []>} : vector<7x224xbf16>, vector<224x224xbf16>, vector<7x224xf32> -> vector<7x224xf32>
    %53 = arith.truncf %30 : vector<7x224xf32> to vector<7x224xbf16>
    %cst_42 = arith.constant dense<0.000000e+00> : vector<7x224xf32>
    %54 = tpu.matmul %53, %48, %cst_42 {dimension_numbers = #tpu.dot_dimension_numbers<[1], [0], [0], [1], [0, 0, 1, 1], [], []>} : vector<7x224xbf16>, vector<224x224xbf16>, vector<7x224xf32> -> vector<7x224xf32>
    %55 = arith.addf %52, %54 : vector<7x224xf32>
    %56 = arith.truncf %42 : vector<7x224xf32> to vector<7x224xbf16>
    %cst_43 = arith.constant dense<0.000000e+00> : vector<7x224xf32>
    %57 = tpu.matmul %56, %50, %cst_43 {dimension_numbers = #tpu.dot_dimension_numbers<[1], [0], [0], [1], [0, 0, 1, 1], [], []>} : vector<7x224xbf16>, vector<224x224xbf16>, vector<7x224xf32> -> vector<7x224xf32>
    %58 = arith.addf %55, %57 : vector<7x224xf32>
    %c0_44 = arith.constant 0 : index
    %c0_45 = arith.constant 0 : index
    %59 = vector.load %arg6[%c0_44, %c0_45] : memref<1x224xf32, #tpu.memory_space<vmem>>, vector<1x224xf32>
    %60 = vector.broadcast %59 : vector<1x224xf32> to vector<7x224xf32>
    %61 = arith.addf %58, %60 : vector<7x224xf32>
    %cst_46 = arith.constant 0.000000e+00 : f32
    %62 = vector.broadcast %cst_46 : f32 to vector<7x224xf32>
    %63 = arith.maximumf %61, %62 : vector<7x224xf32>
    %64 = vector.extract_strided_slice %63 {offsets = [0, 0], sizes = [1, 224], strides = [1, 1]} : vector<7x224xf32> to vector<1x224xf32>
    %65 = vector.extract_strided_slice %63 {offsets = [1, 0], sizes = [1, 224], strides = [1, 1]} : vector<7x224xf32> to vector<1x224xf32>
    %66 = vector.extract_strided_slice %63 {offsets = [2, 0], sizes = [1, 224], strides = [1, 1]} : vector<7x224xf32> to vector<1x224xf32>
    %67 = vector.extract_strided_slice %63 {offsets = [3, 0], sizes = [1, 224], strides = [1, 1]} : vector<7x224xf32> to vector<1x224xf32>
    %68 = vector.extract_strided_slice %63 {offsets = [4, 0], sizes = [1, 224], strides = [1, 1]} : vector<7x224xf32> to vector<1x224xf32>
    %69 = vector.extract_strided_slice %63 {offsets = [5, 0], sizes = [1, 224], strides = [1, 1]} : vector<7x224xf32> to vector<1x224xf32>
    %70 = vector.extract_strided_slice %63 {offsets = [6, 0], sizes = [1, 224], strides = [1, 1]} : vector<7x224xf32> to vector<1x224xf32>
    %71 = tpu.concatenate %64, %65, %66, %67, %68, %69, %70 in 1 : vector<1x224xf32>, vector<1x224xf32>, vector<1x224xf32>, vector<1x224xf32>, vector<1x224xf32>, vector<1x224xf32>, vector<1x224xf32> -> vector<1x1568xf32>
    %c0_47 = arith.constant 0 : index
    %c0_48 = arith.constant 0 : index
    %72 = vector.load %arg7[%c0_47, %c0_48] : memref<1568x64xbf16, #tpu.memory_space<vmem>>, vector<1568x64xbf16>
    %73 = arith.truncf %71 : vector<1x1568xf32> to vector<1x1568xbf16>
    %cst_49 = arith.constant dense<0.000000e+00> : vector<1x64xf32>
    %74 = tpu.matmul %73, %72, %cst_49 {dimension_numbers = #tpu.dot_dimension_numbers<[1], [0], [0], [1], [0, 0, 1, 1], [], []>} : vector<1x1568xbf16>, vector<1568x64xbf16>, vector<1x64xf32> -> vector<1x64xf32>
    %c0_50 = arith.constant 0 : index
    %c0_51 = arith.constant 0 : index
    %75 = vector.load %arg8[%c0_50, %c0_51] : memref<1x64xf32, #tpu.memory_space<vmem>>, vector<1x64xf32>
    %76 = arith.addf %74, %75 : vector<1x64xf32>
    %cst_52 = arith.constant 0.000000e+00 : f32
    %77 = vector.broadcast %cst_52 : f32 to vector<1x64xf32>
    %78 = arith.maximumf %76, %77 : vector<1x64xf32>
    %c0_53 = arith.constant 0 : index
    %c0_54 = arith.constant 0 : index
    %79 = vector.load %arg9[%c0_53, %c0_54] : memref<64x128xbf16, #tpu.memory_space<vmem>>, vector<64x128xbf16>
    %80 = arith.truncf %78 : vector<1x64xf32> to vector<1x64xbf16>
    %cst_55 = arith.constant dense<0.000000e+00> : vector<1x128xf32>
    %81 = tpu.matmul %80, %79, %cst_55 {dimension_numbers = #tpu.dot_dimension_numbers<[1], [0], [0], [1], [0, 0, 1, 1], [], []>} : vector<1x64xbf16>, vector<64x128xbf16>, vector<1x128xf32> -> vector<1x128xf32>
    %c0_56 = arith.constant 0 : index
    %c0_57 = arith.constant 0 : index
    %82 = vector.load %arg10[%c0_56, %c0_57] : memref<1x128xf32, #tpu.memory_space<vmem>>, vector<1x128xf32>
    %83 = arith.addf %81, %82 : vector<1x128xf32>
    %c0_58 = arith.constant 0 : index
    %c0_59 = arith.constant 0 : index
    %c0_60 = arith.constant 0 : index
    %84 = vector.load %arg17[%c0_58, %c0_59, %c0_60] : memref<1x1x128xf32, #tpu.memory_space<vmem>>, vector<1x1x128xf32>
    %85 = vector.shape_cast %84 : vector<1x1x128xf32> to vector<1x128xf32>
    %86 = vector.shape_cast %83 : vector<1x128xf32> to vector<1x1x128xf32>
    tpu.vector_store %arg17[%c0_58, %c0_59, %c0_60], %86 {strides = array<i32>} : memref<1x1x128xf32, #tpu.memory_space<vmem>>, vector<1x1x128xf32>,
    %87 = vector.extract_strided_slice %83 {offsets = [0, 0], sizes = [1, 64], strides = [1, 1]} : vector<1x128xf32> to vector<1x64xf32>
    %88 = vector.extract_strided_slice %83 {offsets = [0, 64], sizes = [1, 64], strides = [1, 1]} : vector<1x128xf32> to vector<1x64xf32>
    %cst_61 = arith.constant 5.000000e-01 : f32
    %89 = vector.broadcast %cst_61 : f32 to vector<1x64xf32>
    %90 = arith.mulf %89, %88 : vector<1x64xf32>
    %91 = math.exp %90 : vector<1x64xf32>
    %c0_62 = arith.constant 0 : index
    %c0_63 = arith.constant 0 : index
    %c0_64 = arith.constant 0 : index
    %92 = vector.load %arg2[%c0_62, %c0_63, %c0_64] : memref<1x1x64xf32, #tpu.memory_space<vmem>>, vector<1x1x64xf32>
    %93 = vector.shape_cast %92 : vector<1x1x64xf32> to vector<1x64xf32>
    %94 = arith.mulf %91, %93 : vector<1x64xf32>
    %95 = arith.addf %87, %94 : vector<1x64xf32>
    %c0_65 = arith.constant 0 : index
    %c0_66 = arith.constant 0 : index
    %c0_67 = arith.constant 0 : index
    %96 = vector.load %arg11[%c0_65, %c0_66, %c0_67] : memref<7x64x224xbf16, #tpu.memory_space<vmem>>, vector<1x64x224xbf16>
    %97 = vector.shape_cast %96 : vector<1x64x224xbf16> to vector<64x224xbf16>
    %98 = arith.truncf %95 : vector<1x64xf32> to vector<1x64xbf16>
    %cst_68 = arith.constant dense<0.000000e+00> : vector<1x224xf32>
    %99 = tpu.matmul %98, %97, %cst_68 {dimension_numbers = #tpu.dot_dimension_numbers<[1], [0], [0], [1], [0, 0, 1, 1], [], []>} : vector<1x64xbf16>, vector<64x224xbf16>, vector<1x224xf32> -> vector<1x224xf32>
    %c1_69 = arith.constant 1 : index
    %c0_70 = arith.constant 0 : index
    %c0_71 = arith.constant 0 : index
    %100 = vector.load %arg11[%c1_69, %c0_70, %c0_71] : memref<7x64x224xbf16, #tpu.memory_space<vmem>>, vector<1x64x224xbf16>
    %101 = vector.shape_cast %100 : vector<1x64x224xbf16> to vector<64x224xbf16>
    %102 = arith.truncf %95 : vector<1x64xf32> to vector<1x64xbf16>
    %cst_72 = arith.constant dense<0.000000e+00> : vector<1x224xf32>
    %103 = tpu.matmul %102, %101, %cst_72 {dimension_numbers = #tpu.dot_dimension_numbers<[1], [0], [0], [1], [0, 0, 1, 1], [], []>} : vector<1x64xbf16>, vector<64x224xbf16>, vector<1x224xf32> -> vector<1x224xf32>
    %c2_73 = arith.constant 2 : index
    %c0_74 = arith.constant 0 : index
    %c0_75 = arith.constant 0 : index
    %104 = vector.load %arg11[%c2_73, %c0_74, %c0_75] : memref<7x64x224xbf16, #tpu.memory_space<vmem>>, vector<1x64x224xbf16>
    %105 = vector.shape_cast %104 : vector<1x64x224xbf16> to vector<64x224xbf16>
    %106 = arith.truncf %95 : vector<1x64xf32> to vector<1x64xbf16>
    %cst_76 = arith.constant dense<0.000000e+00> : vector<1x224xf32>
    %107 = tpu.matmul %106, %105, %cst_76 {dimension_numbers = #tpu.dot_dimension_numbers<[1], [0], [0], [1], [0, 0, 1, 1], [], []>} : vector<1x64xbf16>, vector<64x224xbf16>, vector<1x224xf32> -> vector<1x224xf32>
    %c3_77 = arith.constant 3 : index
    %c0_78 = arith.constant 0 : index
    %c0_79 = arith.constant 0 : index
    %108 = vector.load %arg11[%c3_77, %c0_78, %c0_79] : memref<7x64x224xbf16, #tpu.memory_space<vmem>>, vector<1x64x224xbf16>
    %109 = vector.shape_cast %108 : vector<1x64x224xbf16> to vector<64x224xbf16>
    %110 = arith.truncf %95 : vector<1x64xf32> to vector<1x64xbf16>
    %cst_80 = arith.constant dense<0.000000e+00> : vector<1x224xf32>
    %111 = tpu.matmul %110, %109, %cst_80 {dimension_numbers = #tpu.dot_dimension_numbers<[1], [0], [0], [1], [0, 0, 1, 1], [], []>} : vector<1x64xbf16>, vector<64x224xbf16>, vector<1x224xf32> -> vector<1x224xf32>
    %c4 = arith.constant 4 : index
    %c0_81 = arith.constant 0 : index
    %c0_82 = arith.constant 0 : index
    %112 = vector.load %arg11[%c4, %c0_81, %c0_82] : memref<7x64x224xbf16, #tpu.memory_space<vmem>>, vector<1x64x224xbf16>
    %113 = vector.shape_cast %112 : vector<1x64x224xbf16> to vector<64x224xbf16>
    %114 = arith.truncf %95 : vector<1x64xf32> to vector<1x64xbf16>
    %cst_83 = arith.constant dense<0.000000e+00> : vector<1x224xf32>
    %115 = tpu.matmul %114, %113, %cst_83 {dimension_numbers = #tpu.dot_dimension_numbers<[1], [0], [0], [1], [0, 0, 1, 1], [], []>} : vector<1x64xbf16>, vector<64x224xbf16>, vector<1x224xf32> -> vector<1x224xf32>
    %c5 = arith.constant 5 : index
    %c0_84 = arith.constant 0 : index
    %c0_85 = arith.constant 0 : index
    %116 = vector.load %arg11[%c5, %c0_84, %c0_85] : memref<7x64x224xbf16, #tpu.memory_space<vmem>>, vector<1x64x224xbf16>
    %117 = vector.shape_cast %116 : vector<1x64x224xbf16> to vector<64x224xbf16>
    %118 = arith.truncf %95 : vector<1x64xf32> to vector<1x64xbf16>
    %cst_86 = arith.constant dense<0.000000e+00> : vector<1x224xf32>
    %119 = tpu.matmul %118, %117, %cst_86 {dimension_numbers = #tpu.dot_dimension_numbers<[1], [0], [0], [1], [0, 0, 1, 1], [], []>} : vector<1x64xbf16>, vector<64x224xbf16>, vector<1x224xf32> -> vector<1x224xf32>
    %c6 = arith.constant 6 : index
    %c0_87 = arith.constant 0 : index
    %c0_88 = arith.constant 0 : index
    %120 = vector.load %arg11[%c6, %c0_87, %c0_88] : memref<7x64x224xbf16, #tpu.memory_space<vmem>>, vector<1x64x224xbf16>
    %121 = vector.shape_cast %120 : vector<1x64x224xbf16> to vector<64x224xbf16>
    %122 = arith.truncf %95 : vector<1x64xf32> to vector<1x64xbf16>
    %cst_89 = arith.constant dense<0.000000e+00> : vector<1x224xf32>
    %123 = tpu.matmul %122, %121, %cst_89 {dimension_numbers = #tpu.dot_dimension_numbers<[1], [0], [0], [1], [0, 0, 1, 1], [], []>} : vector<1x64xbf16>, vector<64x224xbf16>, vector<1x224xf32> -> vector<1x224xf32>
    %124 = tpu.concatenate %99, %103, %107, %111, %115, %119, %123 in 0 : vector<1x224xf32>, vector<1x224xf32>, vector<1x224xf32>, vector<1x224xf32>, vector<1x224xf32>, vector<1x224xf32>, vector<1x224xf32> -> vector<7x224xf32>
    %c0_90 = arith.constant 0 : index
    %c0_91 = arith.constant 0 : index
    %125 = vector.load %arg12[%c0_90, %c0_91] : memref<1x224xf32, #tpu.memory_space<vmem>>, vector<1x224xf32>
    %126 = vector.broadcast %125 : vector<1x224xf32> to vector<7x224xf32>
    %127 = arith.addf %124, %126 : vector<7x224xf32>
    %cst_92 = arith.constant 0.000000e+00 : f32
    %128 = vector.broadcast %cst_92 : f32 to vector<7x224xf32>
    %129 = arith.maximumf %127, %128 : vector<7x224xf32>
    %130 = vector.extract_strided_slice %129 {offsets = [1, 0], sizes = [6, 224], strides = [1, 1]} : vector<7x224xf32> to vector<6x224xf32>
    %131 = tpu.concatenate %130, %1 in 0 : vector<6x224xf32>, vector<1x224xf32> -> vector<7x224xf32>
    %c0_93 = arith.constant 0 : index
    %c0_94 = arith.constant 0 : index
    %c0_95 = arith.constant 0 : index
    %132 = vector.load %arg13[%c0_93, %c0_94, %c0_95] : memref<3x224x224xbf16, #tpu.memory_space<vmem>>, vector<1x224x224xbf16>
    %133 = vector.shape_cast %132 : vector<1x224x224xbf16> to vector<224x224xbf16>
    %c1_96 = arith.constant 1 : index
    %c0_97 = arith.constant 0 : index
    %c0_98 = arith.constant 0 : index
    %134 = vector.load %arg13[%c1_96, %c0_97, %c0_98] : memref<3x224x224xbf16, #tpu.memory_space<vmem>>, vector<1x224x224xbf16>
    %135 = vector.shape_cast %134 : vector<1x224x224xbf16> to vector<224x224xbf16>
    %c2_99 = arith.constant 2 : index
    %c0_100 = arith.constant 0 : index
    %c0_101 = arith.constant 0 : index
    %136 = vector.load %arg13[%c2_99, %c0_100, %c0_101] : memref<3x224x224xbf16, #tpu.memory_space<vmem>>, vector<1x224x224xbf16>
    %137 = vector.shape_cast %136 : vector<1x224x224xbf16> to vector<224x224xbf16>
    %c0_102 = arith.constant 0 : index
    %c0_103 = arith.constant 0 : index
    %138 = vector.load %arg14[%c0_102, %c0_103] : memref<1x224xf32, #tpu.memory_space<vmem>>, vector<1x224xf32>
    %139 = arith.truncf %129 : vector<7x224xf32> to vector<7x224xbf16>
    %cst_104 = arith.constant dense<0.000000e+00> : vector<7x224xf32>
    %140 = tpu.matmul %139, %135, %cst_104 {dimension_numbers = #tpu.dot_dimension_numbers<[1], [0], [0], [1], [0, 0, 1, 1], [], []>} : vector<7x224xbf16>, vector<224x224xbf16>, vector<7x224xf32> -> vector<7x224xf32>
    %141 = vector.broadcast %138 : vector<1x224xf32> to vector<7x224xf32>
    %142 = arith.addf %140, %141 : vector<7x224xf32>
    %cst_105 = arith.constant 0.000000e+00 : f32
    %143 = vector.broadcast %cst_105 : f32 to vector<7x224xf32>
    %144 = arith.maximumf %142, %143 : vector<7x224xf32>
    %145 = arith.truncf %129 : vector<7x224xf32> to vector<7x224xbf16>
    %cst_106 = arith.constant dense<0.000000e+00> : vector<7x224xf32>
    %146 = tpu.matmul %145, %137, %cst_106 {dimension_numbers = #tpu.dot_dimension_numbers<[1], [0], [0], [1], [0, 0, 1, 1], [], []>} : vector<7x224xbf16>, vector<224x224xbf16>, vector<7x224xf32> -> vector<7x224xf32>
    %147 = arith.truncf %131 : vector<7x224xf32> to vector<7x224xbf16>
    %cst_107 = arith.constant dense<0.000000e+00> : vector<7x224xf32>
    %148 = tpu.matmul %147, %133, %cst_107 {dimension_numbers = #tpu.dot_dimension_numbers<[1], [0], [0], [1], [0, 0, 1, 1], [], []>} : vector<7x224xbf16>, vector<224x224xbf16>, vector<7x224xf32> -> vector<7x224xf32>
    %149 = arith.addf %146, %148 : vector<7x224xf32>
    %150 = vector.broadcast %138 : vector<1x224xf32> to vector<7x224xf32>
    %151 = arith.addf %149, %150 : vector<7x224xf32>
    %cst_108 = arith.constant 0.000000e+00 : f32
    %152 = vector.broadcast %cst_108 : f32 to vector<7x224xf32>
    %153 = arith.maximumf %151, %152 : vector<7x224xf32>
    %154 = vector.extract_strided_slice %144 {offsets = [1, 0], sizes = [6, 224], strides = [1, 1]} : vector<7x224xf32> to vector<6x224xf32>
    %155 = tpu.concatenate %154, %1 in 0 : vector<6x224xf32>, vector<1x224xf32> -> vector<7x224xf32>
    %c0_109 = arith.constant 0 : index
    %c0_110 = arith.constant 0 : index
    %c0_111 = arith.constant 0 : index
    %156 = vector.load %arg15[%c0_109, %c0_110, %c0_111] : memref<3x224x28xbf16, #tpu.memory_space<vmem>>, vector<1x224x28xbf16>
    %157 = vector.shape_cast %156 : vector<1x224x28xbf16> to vector<224x28xbf16>
    %c1_112 = arith.constant 1 : index
    %c0_113 = arith.constant 0 : index
    %c0_114 = arith.constant 0 : index
    %158 = vector.load %arg15[%c1_112, %c0_113, %c0_114] : memref<3x224x28xbf16, #tpu.memory_space<vmem>>, vector<1x224x28xbf16>
    %159 = vector.shape_cast %158 : vector<1x224x28xbf16> to vector<224x28xbf16>
    %c2_115 = arith.constant 2 : index
    %c0_116 = arith.constant 0 : index
    %c0_117 = arith.constant 0 : index
    %160 = vector.load %arg15[%c2_115, %c0_116, %c0_117] : memref<3x224x28xbf16, #tpu.memory_space<vmem>>, vector<1x224x28xbf16>
    %161 = vector.shape_cast %160 : vector<1x224x28xbf16> to vector<224x28xbf16>
    %162 = arith.truncf %144 : vector<7x224xf32> to vector<7x224xbf16>
    %cst_118 = arith.constant dense<0.000000e+00> : vector<7x28xf32>
    %163 = tpu.matmul %162, %159, %cst_118 {dimension_numbers = #tpu.dot_dimension_numbers<[1], [0], [0], [1], [0, 0, 1, 1], [], []>} : vector<7x224xbf16>, vector<224x28xbf16>, vector<7x28xf32> -> vector<7x28xf32>
    %164 = arith.truncf %144 : vector<7x224xf32> to vector<7x224xbf16>
    %cst_119 = arith.constant dense<0.000000e+00> : vector<7x28xf32>
    %165 = tpu.matmul %164, %161, %cst_119 {dimension_numbers = #tpu.dot_dimension_numbers<[1], [0], [0], [1], [0, 0, 1, 1], [], []>} : vector<7x224xbf16>, vector<224x28xbf16>, vector<7x28xf32> -> vector<7x28xf32>
    %166 = arith.truncf %153 : vector<7x224xf32> to vector<7x224xbf16>
    %cst_120 = arith.constant dense<0.000000e+00> : vector<7x28xf32>
    %167 = tpu.matmul %166, %157, %cst_120 {dimension_numbers = #tpu.dot_dimension_numbers<[1], [0], [0], [1], [0, 0, 1, 1], [], []>} : vector<7x224xbf16>, vector<224x28xbf16>, vector<7x28xf32> -> vector<7x28xf32>
    %168 = arith.addf %165, %167 : vector<7x28xf32>
    %169 = arith.truncf %153 : vector<7x224xf32> to vector<7x224xbf16>
    %cst_121 = arith.constant dense<0.000000e+00> : vector<7x28xf32>
    %170 = tpu.matmul %169, %159, %cst_121 {dimension_numbers = #tpu.dot_dimension_numbers<[1], [0], [0], [1], [0, 0, 1, 1], [], []>} : vector<7x224xbf16>, vector<224x28xbf16>, vector<7x28xf32> -> vector<7x28xf32>
    %171 = arith.truncf %153 : vector<7x224xf32> to vector<7x224xbf16>
    %cst_122 = arith.constant dense<0.000000e+00> : vector<7x28xf32>
    %172 = tpu.matmul %171, %161, %cst_122 {dimension_numbers = #tpu.dot_dimension_numbers<[1], [0], [0], [1], [0, 0, 1, 1], [], []>} : vector<7x224xbf16>, vector<224x28xbf16>, vector<7x28xf32> -> vector<7x28xf32>
    %173 = arith.truncf %155 : vector<7x224xf32> to vector<7x224xbf16>
    %cst_123 = arith.constant dense<0.000000e+00> : vector<7x28xf32>
    %174 = tpu.matmul %173, %157, %cst_123 {dimension_numbers = #tpu.dot_dimension_numbers<[1], [0], [0], [1], [0, 0, 1, 1], [], []>} : vector<7x224xbf16>, vector<224x28xbf16>, vector<7x28xf32> -> vector<7x28xf32>
    %175 = arith.addf %172, %174 : vector<7x28xf32>
    %176 = tpu.concatenate %163, %168, %170, %175 in 1 : vector<7x28xf32>, vector<7x28xf32>, vector<7x28xf32>, vector<7x28xf32> -> vector<7x112xf32>
    %c0_124 = arith.constant 0 : index
    %c0_125 = arith.constant 0 : index
    %177 = vector.load %arg16[%c0_124, %c0_125] : memref<1x1xf32, #tpu.memory_space<vmem>>, vector<1x1xf32>
    %178 = vector.broadcast %177 : vector<1x1xf32> to vector<7x112xf32>
    %179 = arith.addf %176, %178 : vector<7x112xf32>
    %180 = arith.negf %179 : vector<7x112xf32>
    %181 = math.exp %180 : vector<7x112xf32>
    %cst_126 = arith.constant 1.000000e+00 : f32
    %182 = vector.broadcast %cst_126 : f32 to vector<7x112xf32>
    %183 = arith.addf %182, %181 : vector<7x112xf32>
    %184 = arith.divf %182, %183 : vector<7x112xf32>
    %c0_127 = arith.constant 0 : index
    %c0_128 = arith.constant 0 : index
    %c0_129 = arith.constant 0 : index
    %185 = vector.load %arg18[%c0_127, %c0_128, %c0_129] : memref<1x7x112xf32, #tpu.memory_space<vmem>>, vector<1x7x112xf32>
    %186 = vector.shape_cast %185 : vector<1x7x112xf32> to vector<7x112xf32>
    %187 = vector.shape_cast %184 : vector<7x112xf32> to vector<1x7x112xf32>
    tpu.vector_store %arg18[%c0_127, %c0_128, %c0_129], %187 {strides = array<i32>} : memref<1x7x112xf32, #tpu.memory_space<vmem>>, vector<1x7x112xf32>,
    return
  }
  func.func @transform_0(%arg0: i32) -> (i32, i32, i32, i32) {
    %c0_i32 = arith.constant 0 : i32
    %c0_i32_0 = arith.constant 0 : i32
    %c0_i32_1 = arith.constant 0 : i32
    %c0_i32_2 = arith.constant 0 : i32
    return %c0_i32, %arg0, %c0_i32_0, %c0_i32_1 : i32, i32, i32, i32
  }
  func.func @transform_1(%arg0: i32) -> (i32, i32, i32) {
    %c0_i32 = arith.constant 0 : i32
    %c0_i32_0 = arith.constant 0 : i32
    %c0_i32_1 = arith.constant 0 : i32
    return %arg0, %c0_i32, %c0_i32_0 : i32, i32, i32
  }
  func.func @transform_2(%arg0: i32) -> (i32, i32, i32) {
    %c0_i32 = arith.constant 0 : i32
    %c0_i32_0 = arith.constant 0 : i32
    %c0_i32_1 = arith.constant 0 : i32
    %c0_i32_2 = arith.constant 0 : i32
    return %c0_i32, %c0_i32_0, %c0_i32_1 : i32, i32, i32
  }
  func.func @transform_3(%arg0: i32) -> (i32, i32) {
    %c0_i32 = arith.constant 0 : i32
    %c0_i32_0 = arith.constant 0 : i32
    %c0_i32_1 = arith.constant 0 : i32
    return %c0_i32, %c0_i32_0 : i32, i32
  }
  func.func @transform_4(%arg0: i32) -> (i32, i32, i32) {
    %c0_i32 = arith.constant 0 : i32
    %c0_i32_0 = arith.constant 0 : i32
    %c0_i32_1 = arith.constant 0 : i32
    %c0_i32_2 = arith.constant 0 : i32
    return %c0_i32, %c0_i32_0, %c0_i32_1 : i32, i32, i32
  }
  func.func @transform_5(%arg0: i32) -> (i32, i32) {
    %c0_i32 = arith.constant 0 : i32
    %c0_i32_0 = arith.constant 0 : i32
    %c0_i32_1 = arith.constant 0 : i32
    return %c0_i32, %c0_i32_0 : i32, i32
  }
  func.func @transform_6(%arg0: i32) -> (i32, i32) {
    %c0_i32 = arith.constant 0 : i32
    %c0_i32_0 = arith.constant 0 : i32
    %c0_i32_1 = arith.constant 0 : i32
    return %c0_i32, %c0_i32_0 : i32, i32
  }
  func.func @transform_7(%arg0: i32) -> (i32, i32) {
    %c0_i32 = arith.constant 0 : i32
    %c0_i32_0 = arith.constant 0 : i32
    %c0_i32_1 = arith.constant 0 : i32
    return %c0_i32, %c0_i32_0 : i32, i32
  }
  func.func @transform_8(%arg0: i32) -> (i32, i32) {
    %c0_i32 = arith.constant 0 : i32
    %c0_i32_0 = arith.constant 0 : i32
    %c0_i32_1 = arith.constant 0 : i32
    return %c0_i32, %c0_i32_0 : i32, i32
  }
  func.func @transform_9(%arg0: i32) -> (i32, i32) {
    %c0_i32 = arith.constant 0 : i32
    %c0_i32_0 = arith.constant 0 : i32
    %c0_i32_1 = arith.constant 0 : i32
    return %c0_i32, %c0_i32_0 : i32, i32
  }
  func.func @transform_10(%arg0: i32) -> (i32, i32, i32) {
    %c0_i32 = arith.constant 0 : i32
    %c0_i32_0 = arith.constant 0 : i32
    %c0_i32_1 = arith.constant 0 : i32
    %c0_i32_2 = arith.constant 0 : i32
    return %c0_i32, %c0_i32_0, %c0_i32_1 : i32, i32, i32
  }
  func.func @transform_11(%arg0: i32) -> (i32, i32) {
    %c0_i32 = arith.constant 0 : i32
    %c0_i32_0 = arith.constant 0 : i32
    %c0_i32_1 = arith.constant 0 : i32
    return %c0_i32, %c0_i32_0 : i32, i32
  }
  func.func @transform_12(%arg0: i32) -> (i32, i32, i32) {
    %c0_i32 = arith.constant 0 : i32
    %c0_i32_0 = arith.constant 0 : i32
    %c0_i32_1 = arith.constant 0 : i32
    %c0_i32_2 = arith.constant 0 : i32
    return %c0_i32, %c0_i32_0, %c0_i32_1 : i32, i32, i32
  }
  func.func @transform_13(%arg0: i32) -> (i32, i32) {
    %c0_i32 = arith.constant 0 : i32
    %c0_i32_0 = arith.constant 0 : i32
    %c0_i32_1 = arith.constant 0 : i32
    return %c0_i32, %c0_i32_0 : i32, i32
  }
  func.func @transform_14(%arg0: i32) -> (i32, i32, i32) {
    %c0_i32 = arith.constant 0 : i32
    %c0_i32_0 = arith.constant 0 : i32
    %c0_i32_1 = arith.constant 0 : i32
    %c0_i32_2 = arith.constant 0 : i32
    return %c0_i32, %c0_i32_0, %c0_i32_1 : i32, i32, i32
  }
  func.func @transform_15(%arg0: i32) -> (i32, i32) {
    %c0_i32 = arith.constant 0 : i32
    %c0_i32_0 = arith.constant 0 : i32
    %c0_i32_1 = arith.constant 0 : i32
    return %c0_i32, %c0_i32_0 : i32, i32
  }
  func.func @transform_16(%arg0: i32) -> (i32, i32, i32) {
    %c0_i32 = arith.constant 0 : i32
    %c0_i32_0 = arith.constant 0 : i32
    %c0_i32_1 = arith.constant 0 : i32
    return %arg0, %c0_i32, %c0_i32_0 : i32, i32, i32
  }
  func.func @transform_17(%arg0: i32) -> (i32, i32, i32) {
    %c0_i32 = arith.constant 0 : i32
    %c0_i32_0 = arith.constant 0 : i32
    %c0_i32_1 = arith.constant 0 : i32
    return %arg0, %c0_i32, %c0_i32_0 : i32, i32, i32
  }
}

</mosaic_0001>

<llo_original>
// kernel: vae_forward.1
$region0: #{vae_forward.1}
  #allocation0 [shape = 'u32[]', space=smem, size = 0x4, offset = 0x4, fixed_abs, tag = 'smem constant byte address 0x4 - core index']
  #allocation1 [shape = 'u32[144,128]{1,0:T(1,128)}', space=vmem, size = 0x12000, scoped, tag = 'internal scratch']
  #allocation2 [shape = 'f32[1,1]{1,0:T(1,128)S(1)}', space=vmem, size = 0x200, scoped, tag = 'scoped memory for vae_forward.1']
  %s0 = inlined_call_operand.vmem [shape: f32[4,2,7,28], index: 0, kind: input, shape index: {}]
  %s1 = inlined_call_operand.vmem [shape: f32[2,1,64], index: 1, kind: input, shape index: {}]
  %s2 = inlined_call_operand.hbm [shape: bf16[3,28,224], index: 2, kind: input, shape index: {}]
  %s3 = inlined_call_operand.vmem [shape: f32[1,224], index: 3, kind: input, shape index: {}]
  %s4 = inlined_call_operand.vmem [shape: bf16[3,224,224], index: 4, kind: input, shape index: {}]
  %s5 = inlined_call_operand.vmem [shape: f32[1,224], index: 5, kind: input, shape index: {}]
  %s6 = inlined_call_operand.vmem [shape: bf16[1568,64], index: 6, kind: input, shape index: {}]
  %s7 = inlined_call_operand.vmem [shape: f32[1,64], index: 7, kind: input, shape index: {}]
  %s8 = inlined_call_operand.hbm [shape: bf16[64,128], index: 8, kind: input, shape index: {}]
  %s9 = inlined_call_operand.vmem [shape: f32[1,128], index: 9, kind: input, shape index: {}]
  %s10 = inlined_call_operand.hbm [shape: bf16[7,64,224], index: 10, kind: input, shape index: {}]
  %s11 = inlined_call_operand.vmem [shape: f32[1,224], index: 11, kind: input, shape index: {}]
  %s12 = inlined_call_operand.vmem [shape: bf16[3,224,224], index: 12, kind: input, shape index: {}]
  %s13 = inlined_call_operand.vmem [shape: f32[1,224], index: 13, kind: input, shape index: {}]
  %s14 = inlined_call_operand.vmem [shape: bf16[3,224,28], index: 14, kind: input, shape index: {}]
  %s15 = inlined_call_operand.<no memory space> [shape: f32[1,1], index: 15, kind: input, shape index: {}]
  %s16 = inlined_call_operand.vmem [shape: f32[2,1,128], index: 16, kind: output, shape index: {0}]
  %s17 = inlined_call_operand.vmem [shape: f32[2,7,112], index: 17, kind: output, shape index: {1}]
  %18 = xla_tuple %s16, %s17
  %s19 = sld [smem:[#allocation0]]
  $region155: #{vae_forward.1} parent=0
    _
  %s21 = ssub.s32 1, %s19
  %s22 = scalar_select 0, %s21, %s19
  %v23 = vstv %s15
  %24 = vst [vmem:[#allocation2] sm:$0x1] %v23
  $region1: #{vae_forward.1} parent=0
    #allocation3 [shape = 'u8[32768]{0}', space=vmem, size = 0x8000, scoped, tag = 'input window, operand 0']
    #allocation4 [shape = 'u8[49152]{0}', space=vmem, size = 0xc000, scoped, tag = 'input window, operand 2, single buffered']
    #allocation5 [shape = 's32[2]{0}', space=sflag, size = 0x8, scoped, tag = 'scoped memory for vae_forward.1']
    #allocation6 [shape = 'u8[16384]{0}', space=vmem, size = 0x4000, scoped, tag = 'input window, operand 8, single buffered']
    #allocation7 [shape = 's32[1]{0}', space=sflag, size = 0x4, scoped, tag = 'scoped memory for vae_forward.1']
    #allocation8 [shape = 'u8[229376]{0}', space=vmem, size = 0x38000, scoped, tag = 'input window, operand 10, single buffered']
    %25 = vsyncpa [#allocation5], 0
    %26 = vsyncpa [#allocation7], 0
    loop: start=0, step=1, limit=4
    $region2: #{vae_forward.1} parent=1 // loop_pre_header
      _
    $region3: #{vae_forward.1} parent=1 // loop_header
      %s28 = sphi 0, %s32
      %p29 = scmp.ge.s32.totalorder %s28, 4
      %s38 = sphi 0, %s40
      %s41 = sphi 0, %s38
      %s42 = sphi 0, %s41
      %s58 = sphi 0, %s42
      %s64 = sphi 0, %s66
      %s67 = sphi 0, %s64
      %s68 = sphi 0, %s67
      %s84 = sphi 0, %s68
      %s88 = sphi 0, %s88
      %s90 = sphi 0, %s88
      %s91 = sphi 0, %s90
      %s105 = sphi 0, %s91
      %s109 = sphi 0, %s109
      %s111 = sphi 0, %s109
      %s112 = sphi 0, %s111
      %s126 = sphi 0, %s112
      %s130 = sphi 0, %s130
      %s132 = sphi 0, %s130
      %s133 = sphi 0, %s132
      %s147 = sphi 0, %s133
      %s151 = sphi 0, %s151
      %s153 = sphi 0, %s151
      %s154 = sphi 0, %s153
      %s168 = sphi 0, %s154
      %s172 = sphi 0, %s172
      %s174 = sphi 0, %s172
      %s175 = sphi 0, %s174
      %s189 = sphi 0, %s175
      %s193 = sphi 0, %s193
      %s195 = sphi 0, %s193
      %s196 = sphi 0, %s195
      %s210 = sphi 0, %s196
      %s214 = sphi 0, %s214
      %s216 = sphi 0, %s214
      %s217 = sphi 0, %s216
      %s231 = sphi 0, %s217
      %s235 = sphi 0, %s235
      %s237 = sphi 0, %s235
      %s238 = sphi 0, %s237
      %s252 = sphi 0, %s238
      %s256 = sphi 0, %s256
      %s258 = sphi 0, %s256
      %s259 = sphi 0, %s258
      %s273 = sphi 0, %s259
      %s277 = sphi 0, %s277
      %s279 = sphi 0, %s277
      %s280 = sphi 0, %s279
      %s294 = sphi 0, %s280
      %s298 = sphi 0, %s298
      %s300 = sphi 0, %s298
      %s301 = sphi 0, %s300
      %s315 = sphi 0, %s301
      %s319 = sphi 0, %s319
      %s321 = sphi 0, %s319
      %s322 = sphi 0, %s321
      %s336 = sphi 0, %s322
      %s340 = sphi 0, %s340
      %s342 = sphi 0, %s340
      %s343 = sphi 0, %s342
      %s357 = sphi 0, %s343
      %s361 = sphi 0, %s361
      %s363 = sphi 0, %s361
      %s364 = sphi 0, %s363
      %s378 = sphi 0, %s364
      %s384 = sphi 0, %s386
      %s387 = sphi 0, %s384
      %s388 = sphi 0, %s387
      %s404 = sphi 0, %s388
      %s410 = sphi 0, %s412
      %s413 = sphi 0, %s410
      %s414 = sphi 0, %s413
      %s430 = sphi 0, %s414
    $region4: #{vae_forward.1} parent=1 // loop_header_branch
      %31 = sbr.rel (%p29) target = $region8
    $region5: #{vae_forward.1} parent=1 // loop_body
      %s33 = ssub.s32 %s28, 1
      %s34 = ssub.s32 %s28, 2
      %s35 = sadd.s32 %s28, 1
      %s36 = ssub.s32 %s28, %s35
      %p37 = scmp.eq.s32.totalorder %s36, 0
      %s39 = sadd.s32 %s38, 1
      %s40 = scalar_select %p37, %s38, %s39
      %p43 = pneg %p37
      %p44 = scmp.eq.s32.totalorder %s28, 1
      %p45 = por %p43, %p44
      %p46 = scmp.ne.s32.totalorder %s38, %s41
      %p47 = scmp.eq.s32.totalorder %s28, 0
      %p48 = por %p46, %p47
      %p49 = scmp.ne.s32.totalorder %s38, %s41
      %p50 = scmp.eq.s32.totalorder %s33, 1
      %p51 = por %p49, %p50
      %p52 = scmp.ne.s32.totalorder %s41, %s42
      %p53 = scmp.eq.s32.totalorder %s33, 0
      %p54 = por %p52, %p53
      %p55 = scmp.ne.s32.totalorder %s41, %s42
      %p56 = scmp.eq.s32.totalorder %s34, 1
      %p57 = por %p55, %p56
      %p59 = scmp.ne.s32.totalorder %s42, %s58
      %p60 = scmp.eq.s32.totalorder %s34, 0
      %p61 = por %p59, %p60
      %s62 = ssub.s32 %s28, %s35
      %p63 = scmp.eq.s32.totalorder %s62, 0
      %s65 = sadd.s32 %s64, 1
      %s66 = scalar_select %p63, %s64, %s65
      %p69 = pneg %p63
      %p70 = scmp.eq.s32.totalorder %s28, 1
      %p71 = por %p69, %p70
      %p72 = scmp.ne.s32.totalorder %s64, %s67
      %p73 = scmp.eq.s32.totalorder %s28, 0
      %p74 = por %p72, %p73
      %p75 = scmp.ne.s32.totalorder %s64, %s67
      %p76 = scmp.eq.s32.totalorder %s33, 1
      %p77 = por %p75, %p76
      %p78 = scmp.ne.s32.totalorder %s67, %s68
      %p79 = scmp.eq.s32.totalorder %s33, 0
      %p80 = por %p78, %p79
      %p81 = scmp.ne.s32.totalorder %s67, %s68
      %p82 = scmp.eq.s32.totalorder %s34, 1
      %p83 = por %p81, %p82
      %p85 = scmp.ne.s32.totalorder %s68, %s84
      %p86 = scmp.eq.s32.totalorder %s34, 0
      %p87 = por %p85, %p86
      %s89 = sadd.s32 %s88, 1
      %p92 = scmp.eq.s32.totalorder %s28, 1
      %p93 = scmp.ne.s32.totalorder %s88, %s90
      %p94 = scmp.eq.s32.totalorder %s28, 0
      %p95 = por %p93, %p94
      %p96 = scmp.ne.s32.totalorder %s88, %s90
      %p97 = scmp.eq.s32.totalorder %s33, 1
      %p98 = por %p96, %p97
      %p99 = scmp.ne.s32.totalorder %s90, %s91
      %p100 = scmp.eq.s32.totalorder %s33, 0
      %p101 = por %p99, %p100
      %p102 = scmp.ne.s32.totalorder %s90, %s91
      %p103 = scmp.eq.s32.totalorder %s34, 1
      %p104 = por %p102, %p103
      %p106 = scmp.ne.s32.totalorder %s91, %s105
      %p107 = scmp.eq.s32.totalorder %s34, 0
      %p108 = por %p106, %p107
      %s110 = sadd.s32 %s109, 1
      %p113 = scmp.eq.s32.totalorder %s28, 1
      %p114 = scmp.ne.s32.totalorder %s109, %s111
      %p115 = scmp.eq.s32.totalorder %s28, 0
      %p116 = por %p114, %p115
      %p117 = scmp.ne.s32.totalorder %s109, %s111
      %p118 = scmp.eq.s32.totalorder %s33, 1
      %p119 = por %p117, %p118
      %p120 = scmp.ne.s32.totalorder %s111, %s112
      %p121 = scmp.eq.s32.totalorder %s33, 0
      %p122 = por %p120, %p121
      %p123 = scmp.ne.s32.totalorder %s111, %s112
      %p124 = scmp.eq.s32.totalorder %s34, 1
      %p125 = por %p123, %p124
      %p127 = scmp.ne.s32.totalorder %s112, %s126
      %p128 = scmp.eq.s32.totalorder %s34, 0
      %p129 = por %p127, %p128
      %s131 = sadd.s32 %s130, 1
      %p134 = scmp.eq.s32.totalorder %s28, 1
      %p135 = scmp.ne.s32.totalorder %s130, %s132
      %p136 = scmp.eq.s32.totalorder %s28, 0
      %p137 = por %p135, %p136
      %p138 = scmp.ne.s32.totalorder %s130, %s132
      %p139 = scmp.eq.s32.totalorder %s33, 1
      %p140 = por %p138, %p139
      %p141 = scmp.ne.s32.totalorder %s132, %s133
      %p142 = scmp.eq.s32.totalorder %s33, 0
      %p143 = por %p141, %p142
      %p144 = scmp.ne.s32.totalorder %s132, %s133
      %p145 = scmp.eq.s32.totalorder %s34, 1
      %p146 = por %p144, %p145
      %p148 = scmp.ne.s32.totalorder %s133, %s147
      %p149 = scmp.eq.s32.totalorder %s34, 0
      %p150 = por %p148, %p149
      %s152 = sadd.s32 %s151, 1
      %p155 = scmp.eq.s32.totalorder %s28, 1
      %p156 = scmp.ne.s32.totalorder %s151, %s153
      %p157 = scmp.eq.s32.totalorder %s28, 0
      %p158 = por %p156, %p157
      %p159 = scmp.ne.s32.totalorder %s151, %s153
      %p160 = scmp.eq.s32.totalorder %s33, 1
      %p161 = por %p159, %p160
      %p162 = scmp.ne.s32.totalorder %s153, %s154
      %p163 = scmp.eq.s32.totalorder %s33, 0
      %p164 = por %p162, %p163
      %p165 = scmp.ne.s32.totalorder %s153, %s154
      %p166 = scmp.eq.s32.totalorder %s34, 1
      %p167 = por %p165, %p166
      %p169 = scmp.ne.s32.totalorder %s154, %s168
      %p170 = scmp.eq.s32.totalorder %s34, 0
      %p171 = por %p169, %p170
      %s173 = sadd.s32 %s172, 1
      %p176 = scmp.eq.s32.totalorder %s28, 1
      %p177 = scmp.ne.s32.totalorder %s172, %s174
      %p178 = scmp.eq.s32.totalorder %s28, 0
      %p179 = por %p177, %p178
      %p180 = scmp.ne.s32.totalorder %s172, %s174
      %p181 = scmp.eq.s32.totalorder %s33, 1
      %p182 = por %p180, %p181
      %p183 = scmp.ne.s32.totalorder %s174, %s175
      %p184 = scmp.eq.s32.totalorder %s33, 0
      %p185 = por %p183, %p184
      %p186 = scmp.ne.s32.totalorder %s174, %s175
      %p187 = scmp.eq.s32.totalorder %s34, 1
      %p188 = por %p186, %p187
      %p190 = scmp.ne.s32.totalorder %s175, %s189
      %p191 = scmp.eq.s32.totalorder %s34, 0
      %p192 = por %p190, %p191
      %s194 = sadd.s32 %s193, 1
      %p197 = scmp.eq.s32.totalorder %s28, 1
      %p198 = scmp.ne.s32.totalorder %s193, %s195
      %p199 = scmp.eq.s32.totalorder %s28, 0
      %p200 = por %p198, %p199
      %p201 = scmp.ne.s32.totalorder %s193, %s195
      %p202 = scmp.eq.s32.totalorder %s33, 1
      %p203 = por %p201, %p202
      %p204 = scmp.ne.s32.totalorder %s195, %s196
      %p205 = scmp.eq.s32.totalorder %s33, 0
      %p206 = por %p204, %p205
      %p207 = scmp.ne.s32.totalorder %s195, %s196
      %p208 = scmp.eq.s32.totalorder %s34, 1
      %p209 = por %p207, %p208
      %p211 = scmp.ne.s32.totalorder %s196, %s210
      %p212 = scmp.eq.s32.totalorder %s34, 0
      %p213 = por %p211, %p212
      %s215 = sadd.s32 %s214, 1
      %p218 = scmp.eq.s32.totalorder %s28, 1
      %p219 = scmp.ne.s32.totalorder %s214, %s216
      %p220 = scmp.eq.s32.totalorder %s28, 0
      %p221 = por %p219, %p220
      %p222 = scmp.ne.s32.totalorder %s214, %s216
      %p223 = scmp.eq.s32.totalorder %s33, 1
      %p224 = por %p222, %p223
      %p225 = scmp.ne.s32.totalorder %s216, %s217
      %p226 = scmp.eq.s32.totalorder %s33, 0
      %p227 = por %p225, %p226
      %p228 = scmp.ne.s32.totalorder %s216, %s217
      %p229 = scmp.eq.s32.totalorder %s34, 1
      %p230 = por %p228, %p229
      %p232 = scmp.ne.s32.totalorder %s217, %s231
      %p233 = scmp.eq.s32.totalorder %s34, 0
      %p234 = por %p232, %p233
      %s236 = sadd.s32 %s235, 1
      %p239 = scmp.eq.s32.totalorder %s28, 1
      %p240 = scmp.ne.s32.totalorder %s235, %s237
      %p241 = scmp.eq.s32.totalorder %s28, 0
      %p242 = por %p240, %p241
      %p243 = scmp.ne.s32.totalorder %s235, %s237
      %p244 = scmp.eq.s32.totalorder %s33, 1
      %p245 = por %p243, %p244
      %p246 = scmp.ne.s32.totalorder %s237, %s238
      %p247 = scmp.eq.s32.totalorder %s33, 0
      %p248 = por %p246, %p247
      %p249 = scmp.ne.s32.totalorder %s237, %s238
      %p250 = scmp.eq.s32.totalorder %s34, 1
      %p251 = por %p249, %p250
      %p253 = scmp.ne.s32.totalorder %s238, %s252
      %p254 = scmp.eq.s32.totalorder %s34, 0
      %p255 = por %p253, %p254
      %s257 = sadd.s32 %s256, 1
      %p260 = scmp.eq.s32.totalorder %s28, 1
      %p261 = scmp.ne.s32.totalorder %s256, %s258
      %p262 = scmp.eq.s32.totalorder %s28, 0
      %p263 = por %p261, %p262
      %p264 = scmp.ne.s32.totalorder %s256, %s258
      %p265 = scmp.eq.s32.totalorder %s33, 1
      %p266 = por %p264, %p265
      %p267 = scmp.ne.s32.totalorder %s258, %s259
      %p268 = scmp.eq.s32.totalorder %s33, 0
      %p269 = por %p267, %p268
      %p270 = scmp.ne.s32.totalorder %s258, %s259
      %p271 = scmp.eq.s32.totalorder %s34, 1
      %p272 = por %p270, %p271
      %p274 = scmp.ne.s32.totalorder %s259, %s273
      %p275 = scmp.eq.s32.totalorder %s34, 0
      %p276 = por %p274, %p275
      %s278 = sadd.s32 %s277, 1
      %p281 = scmp.eq.s32.totalorder %s28, 1
      %p282 = scmp.ne.s32.totalorder %s277, %s279
      %p283 = scmp.eq.s32.totalorder %s28, 0
      %p284 = por %p282, %p283
      %p285 = scmp.ne.s32.totalorder %s277, %s279
      %p286 = scmp.eq.s32.totalorder %s33, 1
      %p287 = por %p285, %p286
      %p288 = scmp.ne.s32.totalorder %s279, %s280
      %p289 = scmp.eq.s32.totalorder %s33, 0
      %p290 = por %p288, %p289
      %p291 = scmp.ne.s32.totalorder %s279, %s280
      %p292 = scmp.eq.s32.totalorder %s34, 1
      %p293 = por %p291, %p292
      %p295 = scmp.ne.s32.totalorder %s280, %s294
      %p296 = scmp.eq.s32.totalorder %s34, 0
      %p297 = por %p295, %p296
      %s299 = sadd.s32 %s298, 1
      %p302 = scmp.eq.s32.totalorder %s28, 1
      %p303 = scmp.ne.s32.totalorder %s298, %s300
      %p304 = scmp.eq.s32.totalorder %s28, 0
      %p305 = por %p303, %p304
      %p306 = scmp.ne.s32.totalorder %s298, %s300
      %p307 = scmp.eq.s32.totalorder %s33, 1
      %p308 = por %p306, %p307
      %p309 = scmp.ne.s32.totalorder %s300, %s301
      %p310 = scmp.eq.s32.totalorder %s33, 0
      %p311 = por %p309, %p310
      %p312 = scmp.ne.s32.totalorder %s300, %s301
      %p313 = scmp.eq.s32.totalorder %s34, 1
      %p314 = por %p312, %p313
      %p316 = scmp.ne.s32.totalorder %s301, %s315
      %p317 = scmp.eq.s32.totalorder %s34, 0
      %p318 = por %p316, %p317
      %s320 = sadd.s32 %s319, 1
      %p323 = scmp.eq.s32.totalorder %s28, 1
      %p324 = scmp.ne.s32.totalorder %s319, %s321
      %p325 = scmp.eq.s32.totalorder %s28, 0
      %p326 = por %p324, %p325
      %p327 = scmp.ne.s32.totalorder %s319, %s321
      %p328 = scmp.eq.s32.totalorder %s33, 1
      %p329 = por %p327, %p328
      %p330 = scmp.ne.s32.totalorder %s321, %s322
      %p331 = scmp.eq.s32.totalorder %s33, 0
      %p332 = por %p330, %p331
      %p333 = scmp.ne.s32.totalorder %s321, %s322
      %p334 = scmp.eq.s32.totalorder %s34, 1
      %p335 = por %p333, %p334
      %p337 = scmp.ne.s32.totalorder %s322, %s336
      %p338 = scmp.eq.s32.totalorder %s34, 0
      %p339 = por %p337, %p338
      %s341 = sadd.s32 %s340, 1
      %p344 = scmp.eq.s32.totalorder %s28, 1
      %p345 = scmp.ne.s32.totalorder %s340, %s342
      %p346 = scmp.eq.s32.totalorder %s28, 0
      %p347 = por %p345, %p346
      %p348 = scmp.ne.s32.totalorder %s340, %s342
      %p349 = scmp.eq.s32.totalorder %s33, 1
      %p350 = por %p348, %p349
      %p351 = scmp.ne.s32.totalorder %s342, %s343
      %p352 = scmp.eq.s32.totalorder %s33, 0
      %p353 = por %p351, %p352
      %p354 = scmp.ne.s32.totalorder %s342, %s343
      %p355 = scmp.eq.s32.totalorder %s34, 1
      %p356 = por %p354, %p355
      %p358 = scmp.ne.s32.totalorder %s343, %s357
      %p359 = scmp.eq.s32.totalorder %s34, 0
      %p360 = por %p358, %p359
      %s362 = sadd.s32 %s361, 1
      %p365 = scmp.eq.s32.totalorder %s28, 1
      %p366 = scmp.ne.s32.totalorder %s361, %s363
      %p367 = scmp.eq.s32.totalorder %s28, 0
      %p368 = por %p366, %p367
      %p369 = scmp.ne.s32.totalorder %s361, %s363
      %p370 = scmp.eq.s32.totalorder %s33, 1
      %p371 = por %p369, %p370
      %p372 = scmp.ne.s32.totalorder %s363, %s364
      %p373 = scmp.eq.s32.totalorder %s33, 0
      %p374 = por %p372, %p373
      %p375 = scmp.ne.s32.totalorder %s363, %s364
      %p376 = scmp.eq.s32.totalorder %s34, 1
      %p377 = por %p375, %p376
      %p379 = scmp.ne.s32.totalorder %s364, %s378
      %p380 = scmp.eq.s32.totalorder %s34, 0
      %p381 = por %p379, %p380
      %s382 = ssub.s32 %s28, %s35
      %p383 = scmp.eq.s32.totalorder %s382, 0
      %s385 = sadd.s32 %s384, 1
      %s386 = scalar_select %p383, %s384, %s385
      %p389 = pneg %p383
      %p390 = scmp.eq.s32.totalorder %s28, 1
      %p391 = por %p389, %p390
      %p392 = scmp.ne.s32.totalorder %s384, %s387
      %p393 = scmp.eq.s32.totalorder %s28, 0
      %p394 = por %p392, %p393
      %p395 = scmp.ne.s32.totalorder %s384, %s387
      %p396 = scmp.eq.s32.totalorder %s33, 1
      %p397 = por %p395, %p396
      %p398 = scmp.ne.s32.totalorder %s387, %s388
      %p399 = scmp.eq.s32.totalorder %s33, 0
      %p400 = por %p398, %p399
      %p401 = scmp.ne.s32.totalorder %s387, %s388
      %p402 = scmp.eq.s32.totalorder %s34, 1
      %p403 = por %p401, %p402
      %p405 = scmp.ne.s32.totalorder %s388, %s404
      %p406 = scmp.eq.s32.totalorder %s34, 0
      %p407 = por %p405, %p406
      %s408 = ssub.s32 %s28, %s35
      %p409 = scmp.eq.s32.totalorder %s408, 0
      %s411 = sadd.s32 %s410, 1
      %s412 = scalar_select %p409, %s410, %s411
      %p415 = pneg %p409
      %p416 = scmp.eq.s32.totalorder %s28, 1
      %p417 = por %p415, %p416
      %p418 = scmp.ne.s32.totalorder %s410, %s413
      %p419 = scmp.eq.s32.totalorder %s28, 0
      %p420 = por %p418, %p419
      %p421 = scmp.ne.s32.totalorder %s410, %s413
      %p422 = scmp.eq.s32.totalorder %s33, 1
      %p423 = por %p421, %p422
      %p424 = scmp.ne.s32.totalorder %s413, %s414
      %p425 = scmp.eq.s32.totalorder %s33, 0
      %p426 = por %p424, %p425
      %p427 = scmp.ne.s32.totalorder %s413, %s414
      %p428 = scmp.eq.s32.totalorder %s34, 1
      %p429 = por %p427, %p428
      %p431 = scmp.ne.s32.totalorder %s414, %s430
      %p432 = scmp.eq.s32.totalorder %s34, 0
      %p433 = por %p431, %p432
      %p434 = scmp.le.s32.totalorder 1, %s28
      %p435 = scmp.lt.s32.totalorder %s28, 3
      %p436 = pnand %p434, %p435
      %p437 = pneg %p436
      // Predicated region
      $region9: #{vae_forward.1} parent=5 // pred_check
        _
      $region10: #{vae_forward.1} parent=5 // pred_check_branch
        %439 = sbr.rel (%p436) target = $region12
      $region11: #{vae_forward.1} parent=5 // pred_region
        %s440 = ssub.s32 %s28, 1
        // Predicated region
        $region13: #{vae_forward.1} parent=11 // pred_check
          %p441 = pneg %p101
        $region14: #{vae_forward.1} parent=11 // pred_check_branch
          %443 = sbr.rel (%p441) target = $region16
        $region15: #{vae_forward.1} parent=11 // pred_region
          %s445 = ssub.s32 1536, 1536
          %446 = vsyncadd [#allocation5], %s445
          %s447 = sshll.u32 [#allocation4], 4
          %s448 = int_to_ptr.vmem [resolvable:$true] %s447
          %453 = dma.hbm_to_vmem [thread:$0]  %s2, 1536, %s448, [#allocation5], 128, 128, 8
        $region16: #{vae_forward.1} parent=11 // pred_fallthru
          _
        // Predicated region
        $region17: #{vae_forward.1} parent=11 // pred_check
          %p454 = pneg %p122
        $region18: #{vae_forward.1} parent=11 // pred_check_branch
          %456 = sbr.rel (%p454) target = $region20
        $region19: #{vae_forward.1} parent=11 // pred_region
          _
        $region20: #{vae_forward.1} parent=11 // pred_fallthru
          _
        // Predicated region
        $region21: #{vae_forward.1} parent=11 // pred_check
          %p457 = pneg %p143
        $region22: #{vae_forward.1} parent=11 // pred_check_branch
          %459 = sbr.rel (%p457) target = $region24
        $region23: #{vae_forward.1} parent=11 // pred_region
          _
        $region24: #{vae_forward.1} parent=11 // pred_fallthru
          _
        // Predicated region
        $region25: #{vae_forward.1} parent=11 // pred_check
          %p460 = pneg %p164
        $region26: #{vae_forward.1} parent=11 // pred_check_branch
          %462 = sbr.rel (%p460) target = $region28
        $region27: #{vae_forward.1} parent=11 // pred_region
          _
        $region28: #{vae_forward.1} parent=11 // pred_fallthru
          _
        // Predicated region
        $region29: #{vae_forward.1} parent=11 // pred_check
          %p463 = pneg %p185
        $region30: #{vae_forward.1} parent=11 // pred_check_branch
          %465 = sbr.rel (%p463) target = $region32
        $region31: #{vae_forward.1} parent=11 // pred_region
          _
        $region32: #{vae_forward.1} parent=11 // pred_fallthru
          _
        // Predicated region
        $region33: #{vae_forward.1} parent=11 // pred_check
          %p466 = pneg %p206
        $region34: #{vae_forward.1} parent=11 // pred_check_branch
          %468 = sbr.rel (%p466) target = $region36
        $region35: #{vae_forward.1} parent=11 // pred_region
          _
        $region36: #{vae_forward.1} parent=11 // pred_fallthru
          _
        // Predicated region
        $region37: #{vae_forward.1} parent=11 // pred_check
          %p469 = pneg %p227
        $region38: #{vae_forward.1} parent=11 // pred_check_branch
          %471 = sbr.rel (%p469) target = $region40
        $region39: #{vae_forward.1} parent=11 // pred_region
          %s473 = ssub.s32 512, 512
          %474 = vsyncadd [#allocation7], %s473
          %s475 = sshll.u32 [#allocation6], 4
          %s476 = int_to_ptr.vmem [resolvable:$true] %s475
          %481 = dma.hbm_to_vmem [thread:$0]  %s8, 512, %s476, [#allocation7], 64, 64, 4
        $region40: #{vae_forward.1} parent=11 // pred_fallthru
          _
        // Predicated region
        $region41: #{vae_forward.1} parent=11 // pred_check
          %p482 = pneg %p248
        $region42: #{vae_forward.1} parent=11 // pred_check_branch
          %484 = sbr.rel (%p482) target = $region44
        $region43: #{vae_forward.1} parent=11 // pred_region
          _
        $region44: #{vae_forward.1} parent=11 // pred_fallthru
          _
        // Predicated region
        $region45: #{vae_forward.1} parent=11 // pred_check
          %p485 = pneg %p269
        $region46: #{vae_forward.1} parent=11 // pred_check_branch
          %487 = sbr.rel (%p485) target = $region48
        $region47: #{vae_forward.1} parent=11 // pred_region
          %s489 = ssub.s32 7168, 7168
          %490 = vsyncadd [#allocation7], %s489
          %s491 = sshll.u32 [#allocation8], 4
          %s492 = int_to_ptr.vmem [resolvable:$true] %s491
          %497 = dma.hbm_to_vmem [thread:$0]  %s10, 7168, %s492, [#allocation7], 128, 128, 8
        $region48: #{vae_forward.1} parent=11 // pred_fallthru
          _
        // Predicated region
        $region49: #{vae_forward.1} parent=11 // pred_check
          %p498 = pneg %p290
        $region50: #{vae_forward.1} parent=11 // pred_check_branch
          %500 = sbr.rel (%p498) target = $region52
        $region51: #{vae_forward.1} parent=11 // pred_region
          _
        $region52: #{vae_forward.1} parent=11 // pred_fallthru
          _
        // Predicated region
        $region53: #{vae_forward.1} parent=11 // pred_check
          %p501 = pneg %p311
        $region54: #{vae_forward.1} parent=11 // pred_check_branch
          %503 = sbr.rel (%p501) target = $region56
        $region55: #{vae_forward.1} parent=11 // pred_region
          _
        $region56: #{vae_forward.1} parent=11 // pred_fallthru
          _
        // Predicated region
        $region57: #{vae_forward.1} parent=11 // pred_check
          %p504 = pneg %p332
        $region58: #{vae_forward.1} parent=11 // pred_check_branch
          %506 = sbr.rel (%p504) target = $region60
        $region59: #{vae_forward.1} parent=11 // pred_region
          _
        $region60: #{vae_forward.1} parent=11 // pred_fallthru
          _
        // Predicated region
        $region61: #{vae_forward.1} parent=11 // pred_check
          %p507 = pneg %p353
        $region62: #{vae_forward.1} parent=11 // pred_check_branch
          %509 = sbr.rel (%p507) target = $region64
        $region63: #{vae_forward.1} parent=11 // pred_region
          _
        $region64: #{vae_forward.1} parent=11 // pred_fallthru
          _
        // Predicated region
        $region65: #{vae_forward.1} parent=11 // pred_check
          %p510 = pneg %p374
        $region66: #{vae_forward.1} parent=11 // pred_check_branch
          %512 = sbr.rel (%p510) target = $region68
        $region67: #{vae_forward.1} parent=11 // pred_region
          _
        $region68: #{vae_forward.1} parent=11 // pred_fallthru
          _
      $region12: #{vae_forward.1} parent=5 // pred_fallthru
        _
      %p513 = scmp.lt.s32.totalorder %s28, 2
      // Predicated region
      $region69: #{vae_forward.1} parent=5 // pred_check
        %p514 = pneg %p513
      $region70: #{vae_forward.1} parent=5 // pred_check_branch
        %516 = sbr.rel (%p514) target = $region72
      $region71: #{vae_forward.1} parent=5 // pred_region
        // Predicated region
        $region73: #{vae_forward.1} parent=71 // pred_check
          %p517 = pneg %p48
        $region74: #{vae_forward.1} parent=71 // pred_check_branch
          %519 = sbr.rel (%p517) target = $region76
        $region75: #{vae_forward.1} parent=71 // pred_region
          %s520 = sand.u32 %s38, 1
          %s521 = sand.u32 %s38, 1
          %s522 = smul.addr %s521, 32
          %s523 = scalar_lea.vmem [#allocation3], %s522
          %s524 = smul.addr %s28, 8
          %s525 = scalar_lea.vmem %s0, %s524
          // Predicated region
          $region77: #{vae_forward.1} parent=75 // pred_check
            _
          $region78: #{vae_forward.1} parent=75 // pred_check_branch
            %527 = sbr.rel (0) target = $region80
          $region79: #{vae_forward.1} parent=75 // pred_region
            // Predicated region
            $region81: #{vae_forward.1} parent=79 // pred_check
              _
            $region82: #{vae_forward.1} parent=79 // pred_check_branch
              %529 = sbr.rel (0) target = $region84
            $region83: #{vae_forward.1} parent=79 // pred_region
              // Predicated region
              $region96: #{vae_forward.1} parent=83 // pred_check
                _
              $region97: #{vae_forward.1} parent=83 // pred_check_branch
                %551 = sbr.rel (0) target = $region99
              $region98: #{vae_forward.1} parent=83 // pred_region
                loop: start=0, step=1, limit=1
                $region100: #{vae_forward.1} parent=98 // loop_pre_header
                  _
                $region101: #{vae_forward.1} parent=98 // loop_header
                  %s553 = sphi 0, %s557
                  %p554 = scmp.ge.s32.totalorder %s553, 1
                  %s558 = sphi %s525, %s525
                  %s559 = sphi %s523, %s523
                $region102: #{vae_forward.1} parent=98 // loop_header_branch
                  %556 = sbr.rel (%p554) target = $region106
                $region103: #{vae_forward.1} parent=98 // loop_body
                  %v560 = vld [vmem:[%s558] sm:$0xff]
                  %561 = vst [vmem:[%s559] sm:$0xff] %v560
                  %v562 = vld [vmem:[%s558 + $0x10] sm:$0xff]
                  %563 = vst [vmem:[%s559 + $0x8] sm:$0xff] %v562
                  %v564 = vld [vmem:[%s558 + $0x20] sm:$0xff]
                  %565 = vst [vmem:[%s559 + $0x10] sm:$0xff] %v564
                  %v566 = vld [vmem:[%s558 + $0x30] sm:$0xff]
                  %567 = vst [vmem:[%s559 + $0x18] sm:$0xff] %v566
                $region104: #{vae_forward.1} parent=98 // loop_footer
                  %s557 = sadd.s32 1, %s553
                $region105: #{vae_forward.1} parent=98 // loop_footer_branch
                  %552 = sbr.rel target = $region101
                $region106: #{vae_forward.1} parent=98 // loop_exit
                  _
              $region99: #{vae_forward.1} parent=83 // pred_fallthru
                _
              // Predicated region
              $region107: #{vae_forward.1} parent=83 // pred_check
                _
              $region108: #{vae_forward.1} parent=83 // pred_check_branch
                %569 = sbr.rel target = $region110
              $region109: #{vae_forward.1} parent=83 // pred_region
                _
              $region110: #{vae_forward.1} parent=83 // pred_fallthru
                _
            $region84: #{vae_forward.1} parent=79 // pred_fallthru
              _
            // Predicated region
            $region85: #{vae_forward.1} parent=79 // pred_check
              _
            $region86: #{vae_forward.1} parent=79 // pred_check_branch
              %531 = sbr.rel target = $region88
            $region87: #{vae_forward.1} parent=79 // pred_region
              %s533 = ssub.s32 256, 1
              loop: start=0, step=1, limit=1
              $region89: #{vae_forward.1} parent=87 // loop_pre_header
                _
              $region90: #{vae_forward.1} parent=87 // loop_header
                %s535 = sphi 0, %s539
                %p536 = scmp.ge.s32.totalorder %s535, 1
                %s540 = sphi %s525, %s525
                %s541 = sphi %s523, %s523
              $region91: #{vae_forward.1} parent=87 // loop_header_branch
                %538 = sbr.rel (%p536) target = $region95
              $region92: #{vae_forward.1} parent=87 // loop_body
                %v542 = vld [vmem:[%s540] sm:%s533]
                %543 = vst [vmem:[%s541] sm:%s533] %v542
                %v544 = vld [vmem:[%s540 + $0x10] sm:%s533]
                %545 = vst [vmem:[%s541 + $0x8] sm:%s533] %v544
                %v546 = vld [vmem:[%s540 + $0x20] sm:%s533]
                %547 = vst [vmem:[%s541 + $0x10] sm:%s533] %v546
                %v548 = vld [vmem:[%s540 + $0x30] sm:%s533]
                %549 = vst [vmem:[%s541 + $0x18] sm:%s533] %v548
              $region93: #{vae_forward.1} parent=87 // loop_footer
                %s539 = sadd.s32 1, %s535
              $region94: #{vae_forward.1} parent=87 // loop_footer_branch
                %534 = sbr.rel target = $region90
              $region95: #{vae_forward.1} parent=87 // loop_exit
                _
            $region88: #{vae_forward.1} parent=79 // pred_fallthru
              _
          $region80: #{vae_forward.1} parent=75 // pred_fallthru
            _
          %570 = vnop
        $region76: #{vae_forward.1} parent=71 // pred_fallthru
          _
        // Predicated region
        $region111: #{vae_forward.1} parent=71 // pred_check
          %p571 = pneg %p74
        $region112: #{vae_forward.1} parent=71 // pred_check_branch
          %573 = sbr.rel (%p571) target = $region114
        $region113: #{vae_forward.1} parent=71 // pred_region
          %p574 = scmp.lt.s32.totalorder %s28, 1
          %s575 = scalar_select %p574, %s28, 1
          %s576 = scalar_lea.vmem %s1, %s575
        $region114: #{vae_forward.1} parent=71 // pred_fallthru
          _
      $region72: #{vae_forward.1} parent=5 // pred_fallthru
        _
      %p577 = scmp.le.s32.totalorder 1, %s28
      %p578 = scmp.lt.s32.totalorder %s28, 3
      %p579 = pnand %p577, %p578
      %p580 = pneg %p579
      // Predicated region
      $region115: #{vae_forward.1} parent=5 // pred_check
        _
      $region116: #{vae_forward.1} parent=5 // pred_check_branch
        %582 = sbr.rel (%p579) target = $region118
      $region117: #{vae_forward.1} parent=5 // pred_region
        %s583 = ssub.s32 %s28, 1
        %s584 = sand.u32 %s41, 1
        %s585 = sand.u32 %s41, 1
        %s586 = smul.addr %s585, 32
        %s587 = scalar_lea.vmem [#allocation3], %s586
        // Predicated region
        $region119: #{vae_forward.1} parent=117 // pred_check
          %p588 = pneg %p54
        $region120: #{vae_forward.1} parent=117 // pred_check_branch
          %590 = sbr.rel (%p588) target = $region122
        $region121: #{vae_forward.1} parent=117 // pred_region
          _
        $region122: #{vae_forward.1} parent=117 // pred_fallthru
          _
        // Predicated region
        $region123: #{vae_forward.1} parent=117 // pred_check
          %p591 = pneg %p101
        $region124: #{vae_forward.1} parent=117 // pred_check_branch
          %593 = sbr.rel (%p591) target = $region126
        $region125: #{vae_forward.1} parent=117 // pred_region
          %594 = dma.done [#allocation5], 1536
        $region126: #{vae_forward.1} parent=117 // pred_fallthru
          _
        // Predicated region
        $region127: #{vae_forward.1} parent=117 // pred_check
          %p595 = pneg %p227
        $region128: #{vae_forward.1} parent=117 // pred_check_branch
          %597 = sbr.rel (%p595) target = $region130
        $region129: #{vae_forward.1} parent=117 // pred_region
          %598 = dma.done [#allocation7], 512
        $region130: #{vae_forward.1} parent=117 // pred_fallthru
          _
        // Predicated region
        $region131: #{vae_forward.1} parent=117 // pred_check
          %p599 = pneg %p269
        $region132: #{vae_forward.1} parent=117 // pred_check_branch
          %601 = sbr.rel (%p599) target = $region134
        $region133: #{vae_forward.1} parent=117 // pred_region
          %602 = dma.done [#allocation7], 7168
        $region134: #{vae_forward.1} parent=117 // pred_fallthru
          _
        %s603 = sand.u32 %s41, 1
        %s604 = sand.u32 %s41, 1
        %s605 = smul.addr %s604, 32
        %s606 = scalar_lea.vmem [#allocation3], %s605
        %p607 = pneg %p54
        %p608 = pneg %p51
        %p609 = scmp.lt.s32.totalorder %s33, 1
        %s610 = scalar_select %p609, %s33, 1
        %s611 = scalar_lea.vmem %s1, %s610
        %p612 = pneg %p80
        %p613 = pneg %p77
        %p614 = pneg %p101
        %p615 = pneg %p98
        %p616 = pneg %p122
        %p617 = pneg %p119
        %p618 = pneg %p143
        %p619 = pneg %p140
        %p620 = pneg %p164
        %p621 = pneg %p161
        %p622 = pneg %p185
        %p623 = pneg %p182
        %p624 = pneg %p206
        %p625 = pneg %p203
        %p626 = pneg %p227
        %p627 = pneg %p224
        %p628 = pneg %p248
        %p629 = pneg %p245
        %p630 = pneg %p269
        %p631 = pneg %p266
        %p632 = pneg %p290
        %p633 = pneg %p287
        %p634 = pneg %p311
        %p635 = pneg %p308
        %p636 = pneg %p332
        %p637 = pneg %p329
        %p638 = pneg %p353
        %p639 = pneg %p350
        %p640 = pneg %p374
        %p641 = pneg %p371
        %p642 = pneg %p400
        %p643 = pneg %p397
        %p644 = scmp.lt.s32.totalorder %s33, 1
        %s645 = scalar_select %p644, %s33, 1
        %s646 = scalar_lea.vmem %s16, %s645
        %p647 = pneg %p426
        %p648 = pneg %p423
        %p649 = scmp.lt.s32.totalorder %s33, 1
        %s650 = scalar_select %p649, %s33, 1
        %s651 = smul.addr %s650, 8
        %s652 = scalar_lea.vmem %s17, %s651
        %p653 = scmp.lt.s32.totalorder %s33, 1
        %s654 = scalar_select %p653, %s33, 1
        %s655 = scalar_lea.vmem %s1, %s654
        %p656 = scmp.lt.s32.totalorder %s33, 1
        %s657 = scalar_select %p656, %s33, 1
        %s658 = scalar_lea.vmem %s16, %s657
        %p659 = scmp.lt.s32.totalorder %s33, 1
        %s660 = scalar_select %p659, %s33, 1
        %s661 = smul.addr %s660, 8
        %s662 = scalar_lea.vmem %s17, %s661
        %v664 = vld [vmem:[%s587] sm:$0x7f]
        %s665 = scalar_lea.vmem %s587, 8 [#allocation3]
        %v666 = vld [vmem:[%s665] sm:$0x7f]
        %s667 = scalar_lea.vmem %s587, 16 [#allocation3]
        %v668 = vld [vmem:[%s667] sm:$0x7f]
        %s669 = scalar_lea.vmem %s587, 24 [#allocation3]
        %v670 = vld [vmem:[%s669] sm:$0x7f]
        %v672 = vrot.slane %v670, 7
        %vm674 = vcmask 1040384
        %v675 = vsel %vm674, 0.0, %v672
        %v676 = vld [vmem:[#allocation4] sm:$0xff]
        %v677 = vld [vmem:[#allocation4 + $0x8] sm:$0xff]
        %v678 = vld [vmem:[#allocation4 + $0x10] sm:$0xff]
        %v679 = vld [vmem:[#allocation4 + $0x18] sm:$0x33]
        %s680 = scalar_lea.vmem [#allocation4], 32
        %v681 = vld [vmem:[%s680] sm:$0xff]
        %v682 = vld [vmem:[%s680 + $0x8] sm:$0xff]
        %v683 = vld [vmem:[%s680 + $0x10] sm:$0xff]
        %v684 = vld [vmem:[%s680 + $0x18] sm:$0x33]
        %s685 = scalar_lea.vmem [#allocation4], 64
        %v686 = vld [vmem:[%s685] sm:$0xff]
        %v687 = vld [vmem:[%s685 + $0x8] sm:$0xff]
        %v688 = vld [vmem:[%s685 + $0x10] sm:$0xff]
        %v689 = vld [vmem:[%s685 + $0x18] sm:$0x33]
        %v690 = vld [vmem:[%s3] sm:$0x3]
        %v691 = vpack.c.bf16 %v675, %v675
        %v692 = vpack.c.bf16 %v664, %v664
        %v697 = vunpack.c.l.b16 %v681
        %v698 = vunpack.c.h.b16 %v681
        %v699 = vunpack.c.l.b16 %v682
        %v700 = vunpack.c.h.b16 %v682
        %v701 = vunpack.c.l.b16 %v683
        %v702 = vunpack.c.h.b16 %v683
        %v703 = vunpack.c.l.b16 %v684
        %v704 = vunpack.c.h.b16 %v684
        %v705 = vpack.c.b16 %v699, %v697
        %v706 = vpack.c.b16 %v700, %v698
        %v707 = vpack.c.b16 %v703, %v701
        %v708 = vpack.c.b16 %v704, %v702
        %vm711 = vcmask 228352
        %v713 = vsel %vm711, %v692, 0
        %vm715 = vcmask 1045504
        %v717 = vsel %vm715, %v707, 0
        %v720 = vsel %vm715, %v708, 0
        %722 = vmatprep.subr.bf16.mxu0 0
        %723 = vmatpush1.bf16.msra.mxu0 0
        %724 = vmatprep.subr.bf16.mxu0 0
        %725 = vmatpush1.bf16.msra.mxu0 0
        %726 = vmatprep.subr.bf16.mxu0 0
        %727 = vmatpush1.bf16.msra.mxu0 0
        %728 = vmatprep.subr.bf16.mxu0 0
        %729 = vmatpush1.bf16.msra.mxu0 0
        %730 = vmatprep.subr.bf16.mxu0 0
        %731 = vmatpush1.bf16.msra.mxu0 0
        %732 = vmatprep.subr.bf16.mxu0 0
        %733 = vmatpush1.bf16.msra.mxu0 0
        %734 = vmatprep.subr.bf16.mxu0 %v720
        %735 = vmatpush1.bf16.msra.mxu0 %v717
        %736 = vmatprep.subr.bf16.mxu0 %v706
        %737 = vmatpush1.bf16.msra.mxu0 %v705
        %738 = vmatprep.subr.bf16.mxu0 0
        %739 = vmatpush2.bf16.msra.mxu0 0
        %740 = vmatprep.subr.bf16.mxu0 0
        %741 = vmatpush2.bf16.msra.mxu0 0
        %742 = vmatprep.subr.bf16.mxu0 0
        %743 = vmatpush2.bf16.msra.mxu0 0
        %744 = vmatprep.subr.bf16.mxu0 0
        %745 = vmatpush2.bf16.msra.mxu0 0
        %746 = vmatprep.subr.bf16.mxu0 0
        %747 = vmatpush2.bf16.msra.mxu0 0
        %748 = vmatprep.subr.bf16.mxu0 0
        %749 = vmatpush2.bf16.msra.mxu0 0
        %750 = vmatprep.subr.bf16.mxu0 0
        %751 = vmatpush2.bf16.msra.mxu0 0
        %752 = vmatprep.subr.bf16.mxu0 0
        %753 = vmatpush2.bf16.msra.mxu0 0
        %754 = vmatprep.mubr.bf16.mxu0 0
        %755 = vmatmul.mubr.bf16.gmra.mxu0 %v713
        %v756 = vpop.f32.mrf.mxu0
        %v757 = vadd.f32 0.0, %v756
        %v758 = vpop.f32.mrf.mxu0
        %v759 = vadd.f32 0.0, %v758
        %v760 = vpop.f32.mrf.mxu0
        %v761 = vpop.f32.mrf.mxu0
        %762 = vdwg.mxu0
        %v767 = vunpack.c.l.b16 %v676
        %v768 = vunpack.c.h.b16 %v676
        %v769 = vunpack.c.l.b16 %v677
        %v770 = vunpack.c.h.b16 %v677
        %v771 = vunpack.c.l.b16 %v678
        %v772 = vunpack.c.h.b16 %v678
        %v773 = vunpack.c.l.b16 %v679
        %v774 = vunpack.c.h.b16 %v679
        %v775 = vpack.c.b16 %v769, %v767
        %v776 = vpack.c.b16 %v770, %v768
        %v777 = vpack.c.b16 %v773, %v771
        %v778 = vpack.c.b16 %v774, %v772
        %v782 = vsel %vm711, %v691, 0
        %v785 = vsel %vm715, %v777, 0
        %v788 = vsel %vm715, %v778, 0
        %790 = vmatprep.subr.bf16.mxu0 0
        %791 = vmatpush1.bf16.msra.mxu0 0
        %792 = vmatprep.subr.bf16.mxu0 0
        %793 = vmatpush1.bf16.msra.mxu0 0
        %794 = vmatprep.subr.bf16.mxu0 0
        %795 = vmatpush1.bf16.msra.mxu0 0
        %796 = vmatprep.subr.bf16.mxu0 0
        %797 = vmatpush1.bf16.msra.mxu0 0
        %798 = vmatprep.subr.bf16.mxu0 0
        %799 = vmatpush1.bf16.msra.mxu0 0
        %800 = vmatprep.subr.bf16.mxu0 0
        %801 = vmatpush1.bf16.msra.mxu0 0
        %802 = vmatprep.subr.bf16.mxu0 %v788
        %803 = vmatpush1.bf16.msra.mxu0 %v785
        %804 = vmatprep.subr.bf16.mxu0 %v776
        %805 = vmatpush1.bf16.msra.mxu0 %v775
        %806 = vmatprep.subr.bf16.mxu0 0
        %807 = vmatpush2.bf16.msra.mxu0 0
        %808 = vmatprep.subr.bf16.mxu0 0
        %809 = vmatpush2.bf16.msra.mxu0 0
        %810 = vmatprep.subr.bf16.mxu0 0
        %811 = vmatpush2.bf16.msra.mxu0 0
        %812 = vmatprep.subr.bf16.mxu0 0
        %813 = vmatpush2.bf16.msra.mxu0 0
        %814 = vmatprep.subr.bf16.mxu0 0
        %815 = vmatpush2.bf16.msra.mxu0 0
        %816 = vmatprep.subr.bf16.mxu0 0
        %817 = vmatpush2.bf16.msra.mxu0 0
        %818 = vmatprep.subr.bf16.mxu0 0
        %819 = vmatpush2.bf16.msra.mxu0 0
        %820 = vmatprep.subr.bf16.mxu0 0
        %821 = vmatpush2.bf16.msra.mxu0 0
        %822 = vmatprep.mubr.bf16.mxu0 0
        %823 = vmatmul.mubr.bf16.gmra.mxu0 %v782
        %v824 = vpop.f32.mrf.mxu0
        %v825 = vadd.f32 %v757, %v824
        %v826 = vpop.f32.mrf.mxu0
        %v827 = vadd.f32 %v759, %v826
        %v828 = vpop.f32.mrf.mxu0
        %v829 = vpop.f32.mrf.mxu0
        %830 = vdwg.mxu0
        %v831 = vpack.c.bf16 %v666, %v666
        %v836 = vunpack.c.l.b16 %v686
        %v837 = vunpack.c.h.b16 %v686
        %v838 = vunpack.c.l.b16 %v687
        %v839 = vunpack.c.h.b16 %v687
        %v840 = vunpack.c.l.b16 %v688
        %v841 = vunpack.c.h.b16 %v688
        %v842 = vunpack.c.l.b16 %v689
        %v843 = vunpack.c.h.b16 %v689
        %v844 = vpack.c.b16 %v838, %v836
        %v845 = vpack.c.b16 %v839, %v837
        %v846 = vpack.c.b16 %v842, %v840
        %v847 = vpack.c.b16 %v843, %v841
        %v851 = vsel %vm711, %v831, 0
        %v854 = vsel %vm715, %v846, 0
        %v857 = vsel %vm715, %v847, 0
        %859 = vmatprep.subr.bf16.mxu0 0
        %860 = vmatpush1.bf16.msra.mxu0 0
        %861 = vmatprep.subr.bf16.mxu0 0
        %862 = vmatpush1.bf16.msra.mxu0 0
        %863 = vmatprep.subr.bf16.mxu0 0
        %864 = vmatpush1.bf16.msra.mxu0 0
        %865 = vmatprep.subr.bf16.mxu0 0
        %866 = vmatpush1.bf16.msra.mxu0 0
        %867 = vmatprep.subr.bf16.mxu0 0
        %868 = vmatpush1.bf16.msra.mxu0 0
        %869 = vmatprep.subr.bf16.mxu0 0
        %870 = vmatpush1.bf16.msra.mxu0 0
        %871 = vmatprep.subr.bf16.mxu0 %v857
        %872 = vmatpush1.bf16.msra.mxu0 %v854
        %873 = vmatprep.subr.bf16.mxu0 %v845
        %874 = vmatpush1.bf16.msra.mxu0 %v844
        %875 = vmatprep.subr.bf16.mxu0 0
        %876 = vmatpush2.bf16.msra.mxu0 0
        %877 = vmatprep.subr.bf16.mxu0 0
        %878 = vmatpush2.bf16.msra.mxu0 0
        %879 = vmatprep.subr.bf16.mxu0 0
        %880 = vmatpush2.bf16.msra.mxu0 0
        %881 = vmatprep.subr.bf16.mxu0 0
        %882 = vmatpush2.bf16.msra.mxu0 0
        %883 = vmatprep.subr.bf16.mxu0 0
        %884 = vmatpush2.bf16.msra.mxu0 0
        %885 = vmatprep.subr.bf16.mxu0 0
        %886 = vmatpush2.bf16.msra.mxu0 0
        %887 = vmatprep.subr.bf16.mxu0 0
        %888 = vmatpush2.bf16.msra.mxu0 0
        %889 = vmatprep.subr.bf16.mxu0 0
        %890 = vmatpush2.bf16.msra.mxu0 0
        %891 = vmatprep.mubr.bf16.mxu0 0
        %892 = vmatmul.mubr.bf16.gmra.mxu0 %v851
        %v893 = vpop.f32.mrf.mxu0
        %v894 = vadd.f32 0.0, %v893
        %v895 = vpop.f32.mrf.mxu0
        %v896 = vadd.f32 0.0, %v895
        %v897 = vpop.f32.mrf.mxu0
        %v898 = vpop.f32.mrf.mxu0
        %899 = vdwg.mxu0
        %v900 = vadd.f32 %v825, %v894
        %v901 = vadd.f32 %v827, %v896
        %v903 = vlaneseq
        %v904 = vshrl.u32 %v903, 7
        %v905 = vsub.s32 0, %v904
        %v906 = vrot.slane %v690, %v905
        %v907 = vlaneseq
        %v908 = vshrl.u32 %v907, 7
        %v909 = vsub.s32 1, %v908
        %v910 = vrot.slane %v690, %v909
        %v913 = vadd.f32 %v900, %v906
        %v914 = vadd.f32 %v901, %v910
        %v915 = vmax.f32 %v913, 0.0
        %v916 = vmax.f32 %v914, 0.0
        %v917 = vpack.c.bf16 %v668, %v668
        %v919 = vsel %vm711, %v917, 0
        %921 = vmatprep.subr.bf16.mxu0 0
        %922 = vmatpush1.bf16.msra.mxu0 0
        %923 = vmatprep.subr.bf16.mxu0 0
        %924 = vmatpush1.bf16.msra.mxu0 0
        %925 = vmatprep.subr.bf16.mxu0 0
        %926 = vmatpush1.bf16.msra.mxu0 0
        %927 = vmatprep.subr.bf16.mxu0 0
        %928 = vmatpush1.bf16.msra.mxu0 0
        %929 = vmatprep.subr.bf16.mxu0 0
        %930 = vmatpush1.bf16.msra.mxu0 0
        %931 = vmatprep.subr.bf16.mxu0 0
        %932 = vmatpush1.bf16.msra.mxu0 0
        %933 = vmatprep.subr.bf16.mxu0 %v720
        %934 = vmatpush1.bf16.msra.mxu0 %v717
        %935 = vmatprep.subr.bf16.mxu0 %v706
        %936 = vmatpush1.bf16.msra.mxu0 %v705
        %937 = vmatprep.subr.bf16.mxu0 0
        %938 = vmatpush2.bf16.msra.mxu0 0
        %939 = vmatprep.subr.bf16.mxu0 0
        %940 = vmatpush2.bf16.msra.mxu0 0
        %941 = vmatprep.subr.bf16.mxu0 0
        %942 = vmatpush2.bf16.msra.mxu0 0
        %943 = vmatprep.subr.bf16.mxu0 0
        %944 = vmatpush2.bf16.msra.mxu0 0
        %945 = vmatprep.subr.bf16.mxu0 0
        %946 = vmatpush2.bf16.msra.mxu0 0
        %947 = vmatprep.subr.bf16.mxu0 0
        %948 = vmatpush2.bf16.msra.mxu0 0
        %949 = vmatprep.subr.bf16.mxu0 0
        %950 = vmatpush2.bf16.msra.mxu0 0
        %951 = vmatprep.subr.bf16.mxu0 0
        %952 = vmatpush2.bf16.msra.mxu0 0
        %953 = vmatprep.mubr.bf16.mxu0 0
        %954 = vmatmul.mubr.bf16.gmra.mxu0 %v919
        %v955 = vpop.f32.mrf.mxu0
        %v956 = vadd.f32 0.0, %v955
        %v957 = vpop.f32.mrf.mxu0
        %v958 = vadd.f32 0.0, %v957
        %v959 = vpop.f32.mrf.mxu0
        %v960 = vpop.f32.mrf.mxu0
        %961 = vdwg.mxu0
        %962 = vmatprep.subr.bf16.mxu0 0
        %963 = vmatpush1.bf16.msra.mxu0 0
        %964 = vmatprep.subr.bf16.mxu0 0
        %965 = vmatpush1.bf16.msra.mxu0 0
        %966 = vmatprep.subr.bf16.mxu0 0
        %967 = vmatpush1.bf16.msra.mxu0 0
        %968 = vmatprep.subr.bf16.mxu0 0
        %969 = vmatpush1.bf16.msra.mxu0 0
        %970 = vmatprep.subr.bf16.mxu0 0
        %971 = vmatpush1.bf16.msra.mxu0 0
        %972 = vmatprep.subr.bf16.mxu0 0
        %973 = vmatpush1.bf16.msra.mxu0 0
        %974 = vmatprep.subr.bf16.mxu0 %v788
        %975 = vmatpush1.bf16.msra.mxu0 %v785
        %976 = vmatprep.subr.bf16.mxu0 %v776
        %977 = vmatpush1.bf16.msra.mxu0 %v775
        %978 = vmatprep.subr.bf16.mxu0 0
        %979 = vmatpush2.bf16.msra.mxu0 0
        %980 = vmatprep.subr.bf16.mxu0 0
        %981 = vmatpush2.bf16.msra.mxu0 0
        %982 = vmatprep.subr.bf16.mxu0 0
        %983 = vmatpush2.bf16.msra.mxu0 0
        %984 = vmatprep.subr.bf16.mxu0 0
        %985 = vmatpush2.bf16.msra.mxu0 0
        %986 = vmatprep.subr.bf16.mxu0 0
        %987 = vmatpush2.bf16.msra.mxu0 0
        %988 = vmatprep.subr.bf16.mxu0 0
        %989 = vmatpush2.bf16.msra.mxu0 0
        %990 = vmatprep.subr.bf16.mxu0 0
        %991 = vmatpush2.bf16.msra.mxu0 0
        %992 = vmatprep.subr.bf16.mxu0 0
        %993 = vmatpush2.bf16.msra.mxu0 0
        %994 = vmatprep.mubr.bf16.mxu0 0
        %995 = vmatmul.mubr.bf16.gmra.mxu0 %v851
        %v996 = vpop.f32.mrf.mxu0
        %v997 = vadd.f32 %v956, %v996
        %v998 = vpop.f32.mrf.mxu0
        %v999 = vadd.f32 %v958, %v998
        %v1000 = vpop.f32.mrf.mxu0
        %v1001 = vpop.f32.mrf.mxu0
        %1002 = vdwg.mxu0
        %v1003 = vpack.c.bf16 %v670, %v670
        %v1005 = vsel %vm711, %v1003, 0
        %1007 = vmatprep.subr.bf16.mxu0 0
        %1008 = vmatpush1.bf16.msra.mxu0 0
        %1009 = vmatprep.subr.bf16.mxu0 0
        %1010 = vmatpush1.bf16.msra.mxu0 0
        %1011 = vmatprep.subr.bf16.mxu0 0
        %1012 = vmatpush1.bf16.msra.mxu0 0
        %1013 = vmatprep.subr.bf16.mxu0 0
        %1014 = vmatpush1.bf16.msra.mxu0 0
        %1015 = vmatprep.subr.bf16.mxu0 0
        %1016 = vmatpush1.bf16.msra.mxu0 0
        %1017 = vmatprep.subr.bf16.mxu0 0
        %1018 = vmatpush1.bf16.msra.mxu0 0
        %1019 = vmatprep.subr.bf16.mxu0 %v857
        %1020 = vmatpush1.bf16.msra.mxu0 %v854
        %1021 = vmatprep.subr.bf16.mxu0 %v845
        %1022 = vmatpush1.bf16.msra.mxu0 %v844
        %1023 = vmatprep.subr.bf16.mxu0 0
        %1024 = vmatpush2.bf16.msra.mxu0 0
        %1025 = vmatprep.subr.bf16.mxu0 0
        %1026 = vmatpush2.bf16.msra.mxu0 0
        %1027 = vmatprep.subr.bf16.mxu0 0
        %1028 = vmatpush2.bf16.msra.mxu0 0
        %1029 = vmatprep.subr.bf16.mxu0 0
        %1030 = vmatpush2.bf16.msra.mxu0 0
        %1031 = vmatprep.subr.bf16.mxu0 0
        %1032 = vmatpush2.bf16.msra.mxu0 0
        %1033 = vmatprep.subr.bf16.mxu0 0
        %1034 = vmatpush2.bf16.msra.mxu0 0
        %1035 = vmatprep.subr.bf16.mxu0 0
        %1036 = vmatpush2.bf16.msra.mxu0 0
        %1037 = vmatprep.subr.bf16.mxu0 0
        %1038 = vmatpush2.bf16.msra.mxu0 0
        %1039 = vmatprep.mubr.bf16.mxu0 0
        %1040 = vmatmul.mubr.bf16.gmra.mxu0 %v1005
        %v1041 = vpop.f32.mrf.mxu0
        %v1042 = vadd.f32 0.0, %v1041
        %v1043 = vpop.f32.mrf.mxu0
        %v1044 = vadd.f32 0.0, %v1043
        %v1045 = vpop.f32.mrf.mxu0
        %v1046 = vpop.f32.mrf.mxu0
        %1047 = vdwg.mxu0
        %v1048 = vadd.f32 %v997, %v1042
        %v1049 = vadd.f32 %v999, %v1044
        %v1050 = vadd.f32 %v1048, %v906
        %v1051 = vadd.f32 %v1049, %v910
        %v1052 = vmax.f32 %v1050, 0.0
        %v1053 = vmax.f32 %v1051, 0.0
        %v1056 = vrot.slane %v1052, 7
        %v1057 = vrot.slane %v1053, 7
        %v1060 = vsel %vm674, 0.0, %v1056
        %v1061 = vsel %vm674, 0.0, %v1057
        %v1062 = vld [vmem:[%s4] sm:$0xff]
        %v1063 = vld [vmem:[%s4 + $0x8] sm:$0xff]
        %v1064 = vld [vmem:[%s4 + $0x10] sm:$0xff]
        %v1065 = vld [vmem:[%s4 + $0x18] sm:$0xff]
        %v1066 = vld [vmem:[%s4 + $0x20] sm:$0xff]
        %v1067 = vld [vmem:[%s4 + $0x28] sm:$0xff]
        %v1068 = vld [vmem:[%s4 + $0x30] sm:$0xff]
        %v1069 = vld [vmem:[%s4 + $0x38] sm:$0xff]
        %v1070 = vld [vmem:[%s4 + $0x40] sm:$0xff]
        %v1071 = vld [vmem:[%s4 + $0x48] sm:$0xff]
        %v1072 = vld [vmem:[%s4 + $0x50] sm:$0xff]
        %v1073 = vld [vmem:[%s4 + $0x58] sm:$0xff]
        %v1074 = vld [vmem:[%s4 + $0x60] sm:$0xff]
        %v1075 = vld [vmem:[%s4 + $0x68] sm:$0xff]
        %v1076 = vld [vmem:[%s4 + $0x70] sm:$0xff]
        %v1077 = vld [vmem:[%s4 + $0x78] sm:$0xff]
        %v1078 = vld [vmem:[%s4 + $0x80] sm:$0xff]
        %v1079 = vld [vmem:[%s4 + $0x88] sm:$0xff]
        %v1080 = vld [vmem:[%s4 + $0x90] sm:$0xff]
        %v1081 = vld [vmem:[%s4 + $0x98] sm:$0xff]
        %v1082 = vld [vmem:[%s4 + $0xa0] sm:$0xff]
        %v1083 = vld [vmem:[%s4 + $0xa8] sm:$0xff]
        %v1084 = vld [vmem:[%s4 + $0xb0] sm:$0xff]
        %v1085 = vld [vmem:[%s4 + $0xb8] sm:$0xff]
        %v1086 = vld [vmem:[%s4 + $0xc0] sm:$0xff]
        %v1087 = vld [vmem:[%s4 + $0xc8] sm:$0xff]
        %v1088 = vld [vmem:[%s4 + $0xd0] sm:$0xff]
        %v1089 = vld [vmem:[%s4 + $0xd8] sm:$0xff]
        %s1090 = scalar_lea.vmem %s4, 224
        %v1091 = vld [vmem:[%s1090] sm:$0xff]
        %v1092 = vld [vmem:[%s1090 + $0x8] sm:$0xff]
        %v1093 = vld [vmem:[%s1090 + $0x10] sm:$0xff]
        %v1094 = vld [vmem:[%s1090 + $0x18] sm:$0xff]
        %v1095 = vld [vmem:[%s1090 + $0x20] sm:$0xff]
        %v1096 = vld [vmem:[%s1090 + $0x28] sm:$0xff]
        %v1097 = vld [vmem:[%s1090 + $0x30] sm:$0xff]
        %v1098 = vld [vmem:[%s1090 + $0x38] sm:$0xff]
        %v1099 = vld [vmem:[%s1090 + $0x40] sm:$0xff]
        %v1100 = vld [vmem:[%s1090 + $0x48] sm:$0xff]
        %v1101 = vld [vmem:[%s1090 + $0x50] sm:$0xff]
        %v1102 = vld [vmem:[%s1090 + $0x58] sm:$0xff]
        %v1103 = vld [vmem:[%s1090 + $0x60] sm:$0xff]
        %v1104 = vld [vmem:[%s1090 + $0x68] sm:$0xff]
        %v1105 = vld [vmem:[%s1090 + $0x70] sm:$0xff]
        %v1106 = vld [vmem:[%s1090 + $0x78] sm:$0xff]
        %v1107 = vld [vmem:[%s1090 + $0x80] sm:$0xff]
        %v1108 = vld [vmem:[%s1090 + $0x88] sm:$0xff]
        %v1109 = vld [vmem:[%s1090 + $0x90] sm:$0xff]
        %v1110 = vld [vmem:[%s1090 + $0x98] sm:$0xff]
        %v1111 = vld [vmem:[%s1090 + $0xa0] sm:$0xff]
        %v1112 = vld [vmem:[%s1090 + $0xa8] sm:$0xff]
        %v1113 = vld [vmem:[%s1090 + $0xb0] sm:$0xff]
        %v1114 = vld [vmem:[%s1090 + $0xb8] sm:$0xff]
        %v1115 = vld [vmem:[%s1090 + $0xc0] sm:$0xff]
        %v1116 = vld [vmem:[%s1090 + $0xc8] sm:$0xff]
        %v1117 = vld [vmem:[%s1090 + $0xd0] sm:$0xff]
        %v1118 = vld [vmem:[%s1090 + $0xd8] sm:$0xff]
        %s1119 = scalar_lea.vmem %s4, 448
        %v1120 = vld [vmem:[%s1119] sm:$0xff]
        %v1121 = vld [vmem:[%s1119 + $0x8] sm:$0xff]
        %v1122 = vld [vmem:[%s1119 + $0x10] sm:$0xff]
        %v1123 = vld [vmem:[%s1119 + $0x18] sm:$0xff]
        %v1124 = vld [vmem:[%s1119 + $0x20] sm:$0xff]
        %v1125 = vld [vmem:[%s1119 + $0x28] sm:$0xff]
        %v1126 = vld [vmem:[%s1119 + $0x30] sm:$0xff]
        %v1127 = vld [vmem:[%s1119 + $0x38] sm:$0xff]
        %v1128 = vld [vmem:[%s1119 + $0x40] sm:$0xff]
        %v1129 = vld [vmem:[%s1119 + $0x48] sm:$0xff]
        %v1130 = vld [vmem:[%s1119 + $0x50] sm:$0xff]
        %v1131 = vld [vmem:[%s1119 + $0x58] sm:$0xff]
        %v1132 = vld [vmem:[%s1119 + $0x60] sm:$0xff]
        %v1133 = vld [vmem:[%s1119 + $0x68] sm:$0xff]
        %v1134 = vld [vmem:[%s1119 + $0x70] sm:$0xff]
        %v1135 = vld [vmem:[%s1119 + $0x78] sm:$0xff]
        %v1136 = vld [vmem:[%s1119 + $0x80] sm:$0xff]
        %v1137 = vld [vmem:[%s1119 + $0x88] sm:$0xff]
        %v1138 = vld [vmem:[%s1119 + $0x90] sm:$0xff]
        %v1139 = vld [vmem:[%s1119 + $0x98] sm:$0xff]
        %v1140 = vld [vmem:[%s1119 + $0xa0] sm:$0xff]
        %v1141 = vld [vmem:[%s1119 + $0xa8] sm:$0xff]
        %v1142 = vld [vmem:[%s1119 + $0xb0] sm:$0xff]
        %v1143 = vld [vmem:[%s1119 + $0xb8] sm:$0xff]
        %v1144 = vld [vmem:[%s1119 + $0xc0] sm:$0xff]
        %v1145 = vld [vmem:[%s1119 + $0xc8] sm:$0xff]
        %v1146 = vld [vmem:[%s1119 + $0xd0] sm:$0xff]
        %v1147 = vld [vmem:[%s1119 + $0xd8] sm:$0xff]
        %v1148 = vpack.c.bf16 %v1060, %v1060
        %v1149 = vpack.c.bf16 %v1061, %v1061
        %v1150 = vpack.c.bf16 %v915, %v915
        %v1151 = vpack.c.bf16 %v916, %v916
        %v1180 = vunpack.c.l.b16 %v1091
        %v1181 = vunpack.c.h.b16 %v1091
        %v1182 = vunpack.c.l.b16 %v1092
        %v1183 = vunpack.c.h.b16 %v1092
        %v1184 = vunpack.c.l.b16 %v1093
        %v1185 = vunpack.c.h.b16 %v1093
        %v1186 = vunpack.c.l.b16 %v1094
        %v1187 = vunpack.c.h.b16 %v1094
        %v1188 = vunpack.c.l.b16 %v1095
        %v1189 = vunpack.c.h.b16 %v1095
        %v1190 = vunpack.c.l.b16 %v1096
        %v1191 = vunpack.c.h.b16 %v1096
        %v1192 = vunpack.c.l.b16 %v1097
        %v1193 = vunpack.c.h.b16 %v1097
        %v1194 = vunpack.c.l.b16 %v1098
        %v1195 = vunpack.c.h.b16 %v1098
        %v1196 = vunpack.c.l.b16 %v1099
        %v1197 = vunpack.c.h.b16 %v1099
        %v1198 = vunpack.c.l.b16 %v1100
        %v1199 = vunpack.c.h.b16 %v1100
        %v1200 = vunpack.c.l.b16 %v1101
        %v1201 = vunpack.c.h.b16 %v1101
        %v1202 = vunpack.c.l.b16 %v1102
        %v1203 = vunpack.c.h.b16 %v1102
        %v1204 = vunpack.c.l.b16 %v1103
        %v1205 = vunpack.c.h.b16 %v1103
        %v1206 = vunpack.c.l.b16 %v1104
        %v1207 = vunpack.c.h.b16 %v1104
        %v1208 = vunpack.c.l.b16 %v1105
        %v1209 = vunpack.c.h.b16 %v1105
        %v1210 = vunpack.c.l.b16 %v1106
        %v1211 = vunpack.c.h.b16 %v1106
        %v1212 = vunpack.c.l.b16 %v1107
        %v1213 = vunpack.c.h.b16 %v1107
        %v1214 = vunpack.c.l.b16 %v1108
        %v1215 = vunpack.c.h.b16 %v1108
        %v1216 = vunpack.c.l.b16 %v1109
        %v1217 = vunpack.c.h.b16 %v1109
        %v1218 = vunpack.c.l.b16 %v1110
        %v1219 = vunpack.c.h.b16 %v1110
        %v1220 = vunpack.c.l.b16 %v1111
        %v1221 = vunpack.c.h.b16 %v1111
        %v1222 = vunpack.c.l.b16 %v1112
        %v1223 = vunpack.c.h.b16 %v1112
        %v1224 = vunpack.c.l.b16 %v1113
        %v1225 = vunpack.c.h.b16 %v1113
        %v1226 = vunpack.c.l.b16 %v1114
        %v1227 = vunpack.c.h.b16 %v1114
        %v1228 = vunpack.c.l.b16 %v1115
        %v1229 = vunpack.c.h.b16 %v1115
        %v1230 = vunpack.c.l.b16 %v1116
        %v1231 = vunpack.c.h.b16 %v1116
        %v1232 = vunpack.c.l.b16 %v1117
        %v1233 = vunpack.c.h.b16 %v1117
        %v1234 = vunpack.c.l.b16 %v1118
        %v1235 = vunpack.c.h.b16 %v1118
        %v1236 = vpack.c.b16 %v1182, %v1180
        %v1237 = vpack.c.b16 %v1183, %v1181
        %v1238 = vpack.c.b16 %v1186, %v1184
        %v1239 = vpack.c.b16 %v1187, %v1185
        %v1240 = vpack.c.b16 %v1190, %v1188
        %v1241 = vpack.c.b16 %v1191, %v1189
        %v1242 = vpack.c.b16 %v1194, %v1192
        %v1243 = vpack.c.b16 %v1195, %v1193
        %v1244 = vpack.c.b16 %v1198, %v1196
        %v1245 = vpack.c.b16 %v1199, %v1197
        %v1246 = vpack.c.b16 %v1202, %v1200
        %v1247 = vpack.c.b16 %v1203, %v1201
        %v1248 = vpack.c.b16 %v1206, %v1204
        %v1249 = vpack.c.b16 %v1207, %v1205
        %v1250 = vpack.c.b16 %v1210, %v1208
        %v1251 = vpack.c.b16 %v1211, %v1209
        %v1252 = vpack.c.b16 %v1214, %v1212
        %v1253 = vpack.c.b16 %v1215, %v1213
        %v1254 = vpack.c.b16 %v1218, %v1216
        %v1255 = vpack.c.b16 %v1219, %v1217
        %v1256 = vpack.c.b16 %v1222, %v1220
        %v1257 = vpack.c.b16 %v1223, %v1221
        %v1258 = vpack.c.b16 %v1226, %v1224
        %v1259 = vpack.c.b16 %v1227, %v1225
        %v1260 = vpack.c.b16 %v1230, %v1228
        %v1261 = vpack.c.b16 %v1231, %v1229
        %v1262 = vpack.c.b16 %v1234, %v1232
        %v1263 = vpack.c.b16 %v1235, %v1233
        %vm1292 = vcmask 785408
        %v1294 = vsel %vm1292, %v1151, 0
        %1296 = vmatprep.subr.bf16.mxu0 %v1251
        %1297 = vmatpush1.bf16.msra.mxu0 %v1250
        %1298 = vmatprep.subr.bf16.mxu0 %v1249
        %1299 = vmatpush1.bf16.msra.mxu0 %v1248
        %1300 = vmatprep.subr.bf16.mxu0 %v1247
        %1301 = vmatpush1.bf16.msra.mxu0 %v1246
        %1302 = vmatprep.subr.bf16.mxu0 %v1245
        %1303 = vmatpush1.bf16.msra.mxu0 %v1244
        %1304 = vmatprep.subr.bf16.mxu0 %v1243
        %1305 = vmatpush1.bf16.msra.mxu0 %v1242
        %1306 = vmatprep.subr.bf16.mxu0 %v1241
        %1307 = vmatpush1.bf16.msra.mxu0 %v1240
        %1308 = vmatprep.subr.bf16.mxu0 %v1239
        %1309 = vmatpush1.bf16.msra.mxu0 %v1238
        %1310 = vmatprep.subr.bf16.mxu0 %v1237
        %1311 = vmatpush1.bf16.msra.mxu0 %v1236
        %1312 = vmatprep.subr.bf16.mxu0 0
        %1313 = vmatpush2.bf16.msra.mxu0 0
        %1314 = vmatprep.subr.bf16.mxu0 0
        %1315 = vmatpush2.bf16.msra.mxu0 0
        %1316 = vmatprep.subr.bf16.mxu0 %v1263
        %1317 = vmatpush2.bf16.msra.mxu0 %v1262
        %1318 = vmatprep.subr.bf16.mxu0 %v1261
        %1319 = vmatpush2.bf16.msra.mxu0 %v1260
        %1320 = vmatprep.subr.bf16.mxu0 %v1259
        %1321 = vmatpush2.bf16.msra.mxu0 %v1258
        %1322 = vmatprep.subr.bf16.mxu0 %v1257
        %1323 = vmatpush2.bf16.msra.mxu0 %v1256
        %1324 = vmatprep.subr.bf16.mxu0 %v1255
        %1325 = vmatpush2.bf16.msra.mxu0 %v1254
        %1326 = vmatprep.subr.bf16.mxu0 %v1253
        %1327 = vmatpush2.bf16.msra.mxu0 %v1252
        %1328 = vmatprep.mubr.bf16.mxu0 %v1294
        %1329 = vmatmul.mubr.bf16.gmra.mxu0 %v1150
        %v1330 = vpop.f32.mrf.mxu0
        %v1331 = vadd.f32 0.0, %v1330
        %v1332 = vpop.f32.mrf.mxu0
        %v1333 = vadd.f32 0.0, %v1332
        %v1334 = vpop.f32.mrf.mxu0
        %v1335 = vpop.f32.mrf.mxu0
        %1336 = vdwg.mxu0
        %v1365 = vunpack.c.l.b16 %v1062
        %v1366 = vunpack.c.h.b16 %v1062
        %v1367 = vunpack.c.l.b16 %v1063
        %v1368 = vunpack.c.h.b16 %v1063
        %v1369 = vunpack.c.l.b16 %v1064
        %v1370 = vunpack.c.h.b16 %v1064
        %v1371 = vunpack.c.l.b16 %v1065
        %v1372 = vunpack.c.h.b16 %v1065
        %v1373 = vunpack.c.l.b16 %v1066
        %v1374 = vunpack.c.h.b16 %v1066
        %v1375 = vunpack.c.l.b16 %v1067
        %v1376 = vunpack.c.h.b16 %v1067
        %v1377 = vunpack.c.l.b16 %v1068
        %v1378 = vunpack.c.h.b16 %v1068
        %v1379 = vunpack.c.l.b16 %v1069
        %v1380 = vunpack.c.h.b16 %v1069
        %v1381 = vunpack.c.l.b16 %v1070
        %v1382 = vunpack.c.h.b16 %v1070
        %v1383 = vunpack.c.l.b16 %v1071
        %v1384 = vunpack.c.h.b16 %v1071
        %v1385 = vunpack.c.l.b16 %v1072
        %v1386 = vunpack.c.h.b16 %v1072
        %v1387 = vunpack.c.l.b16 %v1073
        %v1388 = vunpack.c.h.b16 %v1073
        %v1389 = vunpack.c.l.b16 %v1074
        %v1390 = vunpack.c.h.b16 %v1074
        %v1391 = vunpack.c.l.b16 %v1075
        %v1392 = vunpack.c.h.b16 %v1075
        %v1393 = vunpack.c.l.b16 %v1076
        %v1394 = vunpack.c.h.b16 %v1076
        %v1395 = vunpack.c.l.b16 %v1077
        %v1396 = vunpack.c.h.b16 %v1077
        %v1397 = vunpack.c.l.b16 %v1078
        %v1398 = vunpack.c.h.b16 %v1078
        %v1399 = vunpack.c.l.b16 %v1079
        %v1400 = vunpack.c.h.b16 %v1079
        %v1401 = vunpack.c.l.b16 %v1080
        %v1402 = vunpack.c.h.b16 %v1080
        %v1403 = vunpack.c.l.b16 %v1081
        %v1404 = vunpack.c.h.b16 %v1081
        %v1405 = vunpack.c.l.b16 %v1082
        %v1406 = vunpack.c.h.b16 %v1082
        %v1407 = vunpack.c.l.b16 %v1083
        %v1408 = vunpack.c.h.b16 %v1083
        %v1409 = vunpack.c.l.b16 %v1084
        %v1410 = vunpack.c.h.b16 %v1084
        %v1411 = vunpack.c.l.b16 %v1085
        %v1412 = vunpack.c.h.b16 %v1085
        %v1413 = vunpack.c.l.b16 %v1086
        %v1414 = vunpack.c.h.b16 %v1086
        %v1415 = vunpack.c.l.b16 %v1087
        %v1416 = vunpack.c.h.b16 %v1087
        %v1417 = vunpack.c.l.b16 %v1088
        %v1418 = vunpack.c.h.b16 %v1088
        %v1419 = vunpack.c.l.b16 %v1089
        %v1420 = vunpack.c.h.b16 %v1089
        %v1421 = vpack.c.b16 %v1367, %v1365
        %v1422 = vpack.c.b16 %v1368, %v1366
        %v1423 = vpack.c.b16 %v1371, %v1369
        %v1424 = vpack.c.b16 %v1372, %v1370
        %v1425 = vpack.c.b16 %v1375, %v1373
        %v1426 = vpack.c.b16 %v1376, %v1374
        %v1427 = vpack.c.b16 %v1379, %v1377
        %v1428 = vpack.c.b16 %v1380, %v1378
        %v1429 = vpack.c.b16 %v1383, %v1381
        %v1430 = vpack.c.b16 %v1384, %v1382
        %v1431 = vpack.c.b16 %v1387, %v1385
        %v1432 = vpack.c.b16 %v1388, %v1386
        %v1433 = vpack.c.b16 %v1391, %v1389
        %v1434 = vpack.c.b16 %v1392, %v1390
        %v1435 = vpack.c.b16 %v1395, %v1393
        %v1436 = vpack.c.b16 %v1396, %v1394
        %v1437 = vpack.c.b16 %v1399, %v1397
        %v1438 = vpack.c.b16 %v1400, %v1398
        %v1439 = vpack.c.b16 %v1403, %v1401
        %v1440 = vpack.c.b16 %v1404, %v1402
        %v1441 = vpack.c.b16 %v1407, %v1405
        %v1442 = vpack.c.b16 %v1408, %v1406
        %v1443 = vpack.c.b16 %v1411, %v1409
        %v1444 = vpack.c.b16 %v1412, %v1410
        %v1445 = vpack.c.b16 %v1415, %v1413
        %v1446 = vpack.c.b16 %v1416, %v1414
        %v1447 = vpack.c.b16 %v1419, %v1417
        %v1448 = vpack.c.b16 %v1420, %v1418
        %v1478 = vsel %vm1292, %v1149, 0
        %1480 = vmatprep.subr.bf16.mxu0 %v1436
        %1481 = vmatpush1.bf16.msra.mxu0 %v1435
        %1482 = vmatprep.subr.bf16.mxu0 %v1434
        %1483 = vmatpush1.bf16.msra.mxu0 %v1433
        %1484 = vmatprep.subr.bf16.mxu0 %v1432
        %1485 = vmatpush1.bf16.msra.mxu0 %v1431
        %1486 = vmatprep.subr.bf16.mxu0 %v1430
        %1487 = vmatpush1.bf16.msra.mxu0 %v1429
        %1488 = vmatprep.subr.bf16.mxu0 %v1428
        %1489 = vmatpush1.bf16.msra.mxu0 %v1427
        %1490 = vmatprep.subr.bf16.mxu0 %v1426
        %1491 = vmatpush1.bf16.msra.mxu0 %v1425
        %1492 = vmatprep.subr.bf16.mxu0 %v1424
        %1493 = vmatpush1.bf16.msra.mxu0 %v1423
        %1494 = vmatprep.subr.bf16.mxu0 %v1422
        %1495 = vmatpush1.bf16.msra.mxu0 %v1421
        %1496 = vmatprep.subr.bf16.mxu0 0
        %1497 = vmatpush2.bf16.msra.mxu0 0
        %1498 = vmatprep.subr.bf16.mxu0 0
        %1499 = vmatpush2.bf16.msra.mxu0 0
        %1500 = vmatprep.subr.bf16.mxu0 %v1448
        %1501 = vmatpush2.bf16.msra.mxu0 %v1447
        %1502 = vmatprep.subr.bf16.mxu0 %v1446
        %1503 = vmatpush2.bf16.msra.mxu0 %v1445
        %1504 = vmatprep.subr.bf16.mxu0 %v1444
        %1505 = vmatpush2.bf16.msra.mxu0 %v1443
        %1506 = vmatprep.subr.bf16.mxu0 %v1442
        %1507 = vmatpush2.bf16.msra.mxu0 %v1441
        %1508 = vmatprep.subr.bf16.mxu0 %v1440
        %1509 = vmatpush2.bf16.msra.mxu0 %v1439
        %1510 = vmatprep.subr.bf16.mxu0 %v1438
        %1511 = vmatpush2.bf16.msra.mxu0 %v1437
        %1512 = vmatprep.mubr.bf16.mxu0 %v1478
        %1513 = vmatmul.mubr.bf16.gmra.mxu0 %v1148
        %v1514 = vpop.f32.mrf.mxu0
        %v1515 = vadd.f32 %v1331, %v1514
        %v1516 = vpop.f32.mrf.mxu0
        %v1517 = vadd.f32 %v1333, %v1516
        %v1518 = vpop.f32.mrf.mxu0
        %v1519 = vpop.f32.mrf.mxu0
        %1520 = vdwg.mxu0
        %v1521 = vpack.c.bf16 %v1052, %v1052
        %v1522 = vpack.c.bf16 %v1053, %v1053
        %v1551 = vunpack.c.l.b16 %v1120
        %v1552 = vunpack.c.h.b16 %v1120
        %v1553 = vunpack.c.l.b16 %v1121
        %v1554 = vunpack.c.h.b16 %v1121
        %v1555 = vunpack.c.l.b16 %v1122
        %v1556 = vunpack.c.h.b16 %v1122
        %v1557 = vunpack.c.l.b16 %v1123
        %v1558 = vunpack.c.h.b16 %v1123
        %v1559 = vunpack.c.l.b16 %v1124
        %v1560 = vunpack.c.h.b16 %v1124
        %v1561 = vunpack.c.l.b16 %v1125
        %v1562 = vunpack.c.h.b16 %v1125
        %v1563 = vunpack.c.l.b16 %v1126
        %v1564 = vunpack.c.h.b16 %v1126
        %v1565 = vunpack.c.l.b16 %v1127
        %v1566 = vunpack.c.h.b16 %v1127
        %v1567 = vunpack.c.l.b16 %v1128
        %v1568 = vunpack.c.h.b16 %v1128
        %v1569 = vunpack.c.l.b16 %v1129
        %v1570 = vunpack.c.h.b16 %v1129
        %v1571 = vunpack.c.l.b16 %v1130
        %v1572 = vunpack.c.h.b16 %v1130
        %v1573 = vunpack.c.l.b16 %v1131
        %v1574 = vunpack.c.h.b16 %v1131
        %v1575 = vunpack.c.l.b16 %v1132
        %v1576 = vunpack.c.h.b16 %v1132
        %v1577 = vunpack.c.l.b16 %v1133
        %v1578 = vunpack.c.h.b16 %v1133
        %v1579 = vunpack.c.l.b16 %v1134
        %v1580 = vunpack.c.h.b16 %v1134
        %v1581 = vunpack.c.l.b16 %v1135
        %v1582 = vunpack.c.h.b16 %v1135
        %v1583 = vunpack.c.l.b16 %v1136
        %v1584 = vunpack.c.h.b16 %v1136
        %v1585 = vunpack.c.l.b16 %v1137
        %v1586 = vunpack.c.h.b16 %v1137
        %v1587 = vunpack.c.l.b16 %v1138
        %v1588 = vunpack.c.h.b16 %v1138
        %v1589 = vunpack.c.l.b16 %v1139
        %v1590 = vunpack.c.h.b16 %v1139
        %v1591 = vunpack.c.l.b16 %v1140
        %v1592 = vunpack.c.h.b16 %v1140
        %v1593 = vunpack.c.l.b16 %v1141
        %v1594 = vunpack.c.h.b16 %v1141
        %v1595 = vunpack.c.l.b16 %v1142
        %v1596 = vunpack.c.h.b16 %v1142
        %v1597 = vunpack.c.l.b16 %v1143
        %v1598 = vunpack.c.h.b16 %v1143
        %v1599 = vunpack.c.l.b16 %v1144
        %v1600 = vunpack.c.h.b16 %v1144
        %v1601 = vunpack.c.l.b16 %v1145
        %v1602 = vunpack.c.h.b16 %v1145
        %v1603 = vunpack.c.l.b16 %v1146
        %v1604 = vunpack.c.h.b16 %v1146
        %v1605 = vunpack.c.l.b16 %v1147
        %v1606 = vunpack.c.h.b16 %v1147
        %v1607 = vpack.c.b16 %v1553, %v1551
        %v1608 = vpack.c.b16 %v1554, %v1552
        %v1609 = vpack.c.b16 %v1557, %v1555
        %v1610 = vpack.c.b16 %v1558, %v1556
        %v1611 = vpack.c.b16 %v1561, %v1559
        %v1612 = vpack.c.b16 %v1562, %v1560
        %v1613 = vpack.c.b16 %v1565, %v1563
        %v1614 = vpack.c.b16 %v1566, %v1564
        %v1615 = vpack.c.b16 %v1569, %v1567
        %v1616 = vpack.c.b16 %v1570, %v1568
        %v1617 = vpack.c.b16 %v1573, %v1571
        %v1618 = vpack.c.b16 %v1574, %v1572
        %v1619 = vpack.c.b16 %v1577, %v1575
        %v1620 = vpack.c.b16 %v1578, %v1576
        %v1621 = vpack.c.b16 %v1581, %v1579
        %v1622 = vpack.c.b16 %v1582, %v1580
        %v1623 = vpack.c.b16 %v1585, %v1583
        %v1624 = vpack.c.b16 %v1586, %v1584
        %v1625 = vpack.c.b16 %v1589, %v1587
        %v1626 = vpack.c.b16 %v1590, %v1588
        %v1627 = vpack.c.b16 %v1593, %v1591
        %v1628 = vpack.c.b16 %v1594, %v1592
        %v1629 = vpack.c.b16 %v1597, %v1595
        %v1630 = vpack.c.b16 %v1598, %v1596
        %v1631 = vpack.c.b16 %v1601, %v1599
        %v1632 = vpack.c.b16 %v1602, %v1600
        %v1633 = vpack.c.b16 %v1605, %v1603
        %v1634 = vpack.c.b16 %v1606, %v1604
        %v1664 = vsel %vm1292, %v1522, 0
        %1666 = vmatprep.subr.bf16.mxu0 %v1622
        %1667 = vmatpush1.bf16.msra.mxu0 %v1621
        %1668 = vmatprep.subr.bf16.mxu0 %v1620
        %1669 = vmatpush1.bf16.msra.mxu0 %v1619
        %1670 = vmatprep.subr.bf16.mxu0 %v1618
        %1671 = vmatpush1.bf16.msra.mxu0 %v1617
        %1672 = vmatprep.subr.bf16.mxu0 %v1616
        %1673 = vmatpush1.bf16.msra.mxu0 %v1615
        %1674 = vmatprep.subr.bf16.mxu0 %v1614
        %1675 = vmatpush1.bf16.msra.mxu0 %v1613
        %1676 = vmatprep.subr.bf16.mxu0 %v1612
        %1677 = vmatpush1.bf16.msra.mxu0 %v1611
        %1678 = vmatprep.subr.bf16.mxu0 %v1610
        %1679 = vmatpush1.bf16.msra.mxu0 %v1609
        %1680 = vmatprep.subr.bf16.mxu0 %v1608
        %1681 = vmatpush1.bf16.msra.mxu0 %v1607
        %1682 = vmatprep.subr.bf16.mxu0 0
        %1683 = vmatpush2.bf16.msra.mxu0 0
        %1684 = vmatprep.subr.bf16.mxu0 0
        %1685 = vmatpush2.bf16.msra.mxu0 0
        %1686 = vmatprep.subr.bf16.mxu0 %v1634
        %1687 = vmatpush2.bf16.msra.mxu0 %v1633
        %1688 = vmatprep.subr.bf16.mxu0 %v1632
        %1689 = vmatpush2.bf16.msra.mxu0 %v1631
        %1690 = vmatprep.subr.bf16.mxu0 %v1630
        %1691 = vmatpush2.bf16.msra.mxu0 %v1629
        %1692 = vmatprep.subr.bf16.mxu0 %v1628
        %1693 = vmatpush2.bf16.msra.mxu0 %v1627
        %1694 = vmatprep.subr.bf16.mxu0 %v1626
        %1695 = vmatpush2.bf16.msra.mxu0 %v1625
        %1696 = vmatprep.subr.bf16.mxu0 %v1624
        %1697 = vmatpush2.bf16.msra.mxu0 %v1623
        %1698 = vmatprep.mubr.bf16.mxu0 %v1664
        %1699 = vmatmul.mubr.bf16.gmra.mxu0 %v1521
        %v1700 = vpop.f32.mrf.mxu0
        %v1701 = vadd.f32 0.0, %v1700
        %v1702 = vpop.f32.mrf.mxu0
        %v1703 = vadd.f32 0.0, %v1702
        %v1704 = vpop.f32.mrf.mxu0
        %v1705 = vpop.f32.mrf.mxu0
        %1706 = vdwg.mxu0
        %v1707 = vadd.f32 %v1515, %v1701
        %v1708 = vadd.f32 %v1517, %v1703
        %v1709 = vld [vmem:[%s5] sm:$0x3]
        %v1711 = vlaneseq
        %v1712 = vshrl.u32 %v1711, 7
        %v1713 = vsub.s32 0, %v1712
        %v1714 = vrot.slane %v1709, %v1713
        %v1715 = vlaneseq
        %v1716 = vshrl.u32 %v1715, 7
        %v1717 = vsub.s32 1, %v1716
        %v1718 = vrot.slane %v1709, %v1717
        %v1721 = vadd.f32 %v1707, %v1714
        %v1722 = vadd.f32 %v1708, %v1718
        %v1723 = vmax.f32 %v1721, 0.0
        %v1724 = vmax.f32 %v1722, 0.0
        %v1727 = vrot.slane %v1723, 1
        %v1728 = vrot.slane %v1724, 1
        %1729 = vrot.lane.b32.xlu0 %v1727, 96
        %v1730 = vpop.permute.xlu0 %1729
        %1731 = vrot.lane.b32.xlu0 %v1728, 96
        %v1732 = vpop.permute.xlu0 %1731
        %v1733 = vsel %vm1292, %v1730, %v1732
        %v1737 = vrot.slane %v1723, 2
        %v1738 = vrot.slane %v1724, 2
        %1739 = vrot.lane.b32.xlu0 %v1737, 64
        %v1740 = vpop.permute.xlu0 %1739
        %1741 = vrot.lane.b32.xlu0 %v1738, 64
        %v1742 = vpop.permute.xlu0 %1741
        %vm1743 = vcmask 523264
        %v1744 = vsel %vm1743, %v1740, %v1742
        %v1748 = vrot.slane %v1723, 3
        %v1749 = vrot.slane %v1724, 3
        %1750 = vrot.lane.b32.xlu0 %v1748, 32
        %v1751 = vpop.permute.xlu0 %1750
        %1752 = vrot.lane.b32.xlu0 %v1749, 32
        %v1753 = vpop.permute.xlu0 %1752
        %vm1754 = vcmask 261120
        %v1755 = vsel %vm1754, %v1751, %v1753
        %v1758 = vrot.slane %v1723, 4
        %v1759 = vrot.slane %v1724, 4
        %v1762 = vrot.slane %v1723, 5
        %v1763 = vrot.slane %v1724, 5
        %1764 = vrot.lane.b32.xlu0 %v1762, 96
        %v1765 = vpop.permute.xlu0 %1764
        %1766 = vrot.lane.b32.xlu0 %v1763, 96
        %v1767 = vpop.permute.xlu0 %1766
        %v1768 = vsel %vm1292, %v1765, %v1767
        %v1772 = vrot.slane %v1723, 6
        %v1773 = vrot.slane %v1724, 6
        %1774 = vrot.lane.b32.xlu0 %v1772, 64
        %v1775 = vpop.permute.xlu0 %1774
        %1776 = vrot.lane.b32.xlu0 %v1773, 64
        %v1777 = vpop.permute.xlu0 %1776
        %v1778 = vsel %vm1743, %v1775, %v1777
        %v1782 = vsel %vm1292, %v1724, %v1730
        %v1783 = vsel %vm1743, %v1732, %v1740
        %v1784 = vsel %vm1754, %v1742, %v1751
        %v1785 = vsel %vm1292, %v1759, %v1765
        %v1786 = vsel %vm1743, %v1767, %v1775
        %v1787 = vld [vmem:[%s6] sm:$0xf]
        %v1788 = vld [vmem:[%s6 + $0x4] sm:$0xf]
        %v1789 = vld [vmem:[%s6 + $0x8] sm:$0xf]
        %v1790 = vld [vmem:[%s6 + $0xc] sm:$0xf]
        %v1791 = vld [vmem:[%s6 + $0x10] sm:$0xf]
        %v1792 = vld [vmem:[%s6 + $0x14] sm:$0xf]
        %v1793 = vld [vmem:[%s6 + $0x18] sm:$0xf]
        %v1794 = vld [vmem:[%s6 + $0x1c] sm:$0xf]
        %v1795 = vld [vmem:[%s6 + $0x20] sm:$0xf]
        %v1796 = vld [vmem:[%s6 + $0x24] sm:$0xf]
        %v1797 = vld [vmem:[%s6 + $0x28] sm:$0xf]
        %v1798 = vld [vmem:[%s6 + $0x2c] sm:$0xf]
        %v1799 = vld [vmem:[%s6 + $0x30] sm:$0xf]
        %v1800 = vld [vmem:[%s6 + $0x34] sm:$0xf]
        %v1801 = vld [vmem:[%s6 + $0x38] sm:$0xf]
        %v1802 = vld [vmem:[%s6 + $0x3c] sm:$0xf]
        %v1803 = vld [vmem:[%s6 + $0x40] sm:$0xf]
        %v1804 = vld [vmem:[%s6 + $0x44] sm:$0xf]
        %v1805 = vld [vmem:[%s6 + $0x48] sm:$0xf]
        %v1806 = vld [vmem:[%s6 + $0x4c] sm:$0xf]
        %v1807 = vld [vmem:[%s6 + $0x50] sm:$0xf]
        %v1808 = vld [vmem:[%s6 + $0x54] sm:$0xf]
        %v1809 = vld [vmem:[%s6 + $0x58] sm:$0xf]
        %v1810 = vld [vmem:[%s6 + $0x5c] sm:$0xf]
        %v1811 = vld [vmem:[%s6 + $0x60] sm:$0xf]
        %v1812 = vld [vmem:[%s6 + $0x64] sm:$0xf]
        %v1813 = vld [vmem:[%s6 + $0x68] sm:$0xf]
        %v1814 = vld [vmem:[%s6 + $0x6c] sm:$0xf]
        %v1815 = vld [vmem:[%s6 + $0x70] sm:$0xf]
        %v1816 = vld [vmem:[%s6 + $0x74] sm:$0xf]
        %v1817 = vld [vmem:[%s6 + $0x78] sm:$0xf]
        %v1818 = vld [vmem:[%s6 + $0x7c] sm:$0xf]
        %v1819 = vld [vmem:[%s6 + $0x80] sm:$0xf]
        %v1820 = vld [vmem:[%s6 + $0x84] sm:$0xf]
        %v1821 = vld [vmem:[%s6 + $0x88] sm:$0xf]
        %v1822 = vld [vmem:[%s6 + $0x8c] sm:$0xf]
        %v1823 = vld [vmem:[%s6 + $0x90] sm:$0xf]
        %v1824 = vld [vmem:[%s6 + $0x94] sm:$0xf]
        %v1825 = vld [vmem:[%s6 + $0x98] sm:$0xf]
        %v1826 = vld [vmem:[%s6 + $0x9c] sm:$0xf]
        %v1827 = vld [vmem:[%s6 + $0xa0] sm:$0xf]
        %v1828 = vld [vmem:[%s6 + $0xa4] sm:$0xf]
        %v1829 = vld [vmem:[%s6 + $0xa8] sm:$0xf]
        %v1830 = vld [vmem:[%s6 + $0xac] sm:$0xf]
        %v1831 = vld [vmem:[%s6 + $0xb0] sm:$0xf]
        %v1832 = vld [vmem:[%s6 + $0xb4] sm:$0xf]
        %v1833 = vld [vmem:[%s6 + $0xb8] sm:$0xf]
        %v1834 = vld [vmem:[%s6 + $0xbc] sm:$0xf]
        %v1835 = vld [vmem:[%s6 + $0xc0] sm:$0xf]
        %v1836 = vld [vmem:[%s6 + $0xc4] sm:$0xf]
        %v1837 = vld [vmem:[%s6 + $0xc8] sm:$0xf]
        %v1838 = vld [vmem:[%s6 + $0xcc] sm:$0xf]
        %v1839 = vld [vmem:[%s6 + $0xd0] sm:$0xf]
        %v1840 = vld [vmem:[%s6 + $0xd4] sm:$0xf]
        %v1841 = vld [vmem:[%s6 + $0xd8] sm:$0xf]
        %v1842 = vld [vmem:[%s6 + $0xdc] sm:$0xf]
        %v1843 = vld [vmem:[%s6 + $0xe0] sm:$0xf]
        %v1844 = vld [vmem:[%s6 + $0xe4] sm:$0xf]
        %v1845 = vld [vmem:[%s6 + $0xe8] sm:$0xf]
        %v1846 = vld [vmem:[%s6 + $0xec] sm:$0xf]
        %v1847 = vld [vmem:[%s6 + $0xf0] sm:$0xf]
        %v1848 = vld [vmem:[%s6 + $0xf4] sm:$0xf]
        %v1849 = vld [vmem:[%s6 + $0xf8] sm:$0xf]
        %v1850 = vld [vmem:[%s6 + $0xfc] sm:$0xf]
        %v1851 = vld [vmem:[%s6 + $0x100] sm:$0xf]
        %v1852 = vld [vmem:[%s6 + $0x104] sm:$0xf]
        %v1853 = vld [vmem:[%s6 + $0x108] sm:$0xf]
        %v1854 = vld [vmem:[%s6 + $0x10c] sm:$0xf]
        %v1855 = vld [vmem:[%s6 + $0x110] sm:$0xf]
        %v1856 = vld [vmem:[%s6 + $0x114] sm:$0xf]
        %v1857 = vld [vmem:[%s6 + $0x118] sm:$0xf]
        %v1858 = vld [vmem:[%s6 + $0x11c] sm:$0xf]
        %v1859 = vld [vmem:[%s6 + $0x120] sm:$0xf]
        %v1860 = vld [vmem:[%s6 + $0x124] sm:$0xf]
        %v1861 = vld [vmem:[%s6 + $0x128] sm:$0xf]
        %v1862 = vld [vmem:[%s6 + $0x12c] sm:$0xf]
        %v1863 = vld [vmem:[%s6 + $0x130] sm:$0xf]
        %v1864 = vld [vmem:[%s6 + $0x134] sm:$0xf]
        %v1865 = vld [vmem:[%s6 + $0x138] sm:$0xf]
        %v1866 = vld [vmem:[%s6 + $0x13c] sm:$0xf]
        %v1867 = vld [vmem:[%s6 + $0x140] sm:$0xf]
        %v1868 = vld [vmem:[%s6 + $0x144] sm:$0xf]
        %v1869 = vld [vmem:[%s6 + $0x148] sm:$0xf]
        %v1870 = vld [vmem:[%s6 + $0x14c] sm:$0xf]
        %v1871 = vld [vmem:[%s6 + $0x150] sm:$0xf]
        %v1872 = vld [vmem:[%s6 + $0x154] sm:$0xf]
        %v1873 = vld [vmem:[%s6 + $0x158] sm:$0xf]
        %v1874 = vld [vmem:[%s6 + $0x15c] sm:$0xf]
        %v1875 = vld [vmem:[%s6 + $0x160] sm:$0xf]
        %v1876 = vld [vmem:[%s6 + $0x164] sm:$0xf]
        %v1877 = vld [vmem:[%s6 + $0x168] sm:$0xf]
        %v1878 = vld [vmem:[%s6 + $0x16c] sm:$0xf]
        %v1879 = vld [vmem:[%s6 + $0x170] sm:$0xf]
        %v1880 = vld [vmem:[%s6 + $0x174] sm:$0xf]
        %v1881 = vld [vmem:[%s6 + $0x178] sm:$0xf]
        %v1882 = vld [vmem:[%s6 + $0x17c] sm:$0xf]
        %v1883 = vld [vmem:[%s6 + $0x180] sm:$0xf]
        %v1884 = vld [vmem:[%s6 + $0x184] sm:$0xf]
        %v1885 = vld [vmem:[%s6 + $0x188] sm:$0xf]
        %v1886 = vld [vmem:[%s6 + $0x18c] sm:$0xf]
        %v1887 = vld [vmem:[%s6 + $0x190] sm:$0xf]
        %v1888 = vld [vmem:[%s6 + $0x194] sm:$0xf]
        %v1889 = vld [vmem:[%s6 + $0x198] sm:$0xf]
        %v1890 = vld [vmem:[%s6 + $0x19c] sm:$0xf]
        %v1891 = vld [vmem:[%s6 + $0x1a0] sm:$0xf]
        %v1892 = vld [vmem:[%s6 + $0x1a4] sm:$0xf]
        %v1893 = vld [vmem:[%s6 + $0x1a8] sm:$0xf]
        %v1894 = vld [vmem:[%s6 + $0x1ac] sm:$0xf]
        %v1895 = vld [vmem:[%s6 + $0x1b0] sm:$0xf]
        %v1896 = vld [vmem:[%s6 + $0x1b4] sm:$0xf]
        %v1897 = vld [vmem:[%s6 + $0x1b8] sm:$0xf]
        %v1898 = vld [vmem:[%s6 + $0x1bc] sm:$0xf]
        %v1899 = vld [vmem:[%s6 + $0x1c0] sm:$0xf]
        %v1900 = vld [vmem:[%s6 + $0x1c4] sm:$0xf]
        %v1901 = vld [vmem:[%s6 + $0x1c8] sm:$0xf]
        %v1902 = vld [vmem:[%s6 + $0x1cc] sm:$0xf]
        %v1903 = vld [vmem:[%s6 + $0x1d0] sm:$0xf]
        %v1904 = vld [vmem:[%s6 + $0x1d4] sm:$0xf]
        %v1905 = vld [vmem:[%s6 + $0x1d8] sm:$0xf]
        %v1906 = vld [vmem:[%s6 + $0x1dc] sm:$0xf]
        %v1907 = vld [vmem:[%s6 + $0x1e0] sm:$0xf]
        %v1908 = vld [vmem:[%s6 + $0x1e4] sm:$0xf]
        %v1909 = vld [vmem:[%s6 + $0x1e8] sm:$0xf]
        %v1910 = vld [vmem:[%s6 + $0x1ec] sm:$0xf]
        %v1911 = vld [vmem:[%s6 + $0x1f0] sm:$0xf]
        %v1912 = vld [vmem:[%s6 + $0x1f4] sm:$0xf]
        %v1913 = vld [vmem:[%s6 + $0x1f8] sm:$0xf]
        %v1914 = vld [vmem:[%s6 + $0x1fc] sm:$0xf]
        %v1915 = vld [vmem:[%s6 + $0x200] sm:$0xf]
        %v1916 = vld [vmem:[%s6 + $0x204] sm:$0xf]
        %v1917 = vld [vmem:[%s6 + $0x208] sm:$0xf]
        %v1918 = vld [vmem:[%s6 + $0x20c] sm:$0xf]
        %v1919 = vld [vmem:[%s6 + $0x210] sm:$0xf]
        %v1920 = vld [vmem:[%s6 + $0x214] sm:$0xf]
        %v1921 = vld [vmem:[%s6 + $0x218] sm:$0xf]
        %v1922 = vld [vmem:[%s6 + $0x21c] sm:$0xf]
        %v1923 = vld [vmem:[%s6 + $0x220] sm:$0xf]
        %v1924 = vld [vmem:[%s6 + $0x224] sm:$0xf]
        %v1925 = vld [vmem:[%s6 + $0x228] sm:$0xf]
        %v1926 = vld [vmem:[%s6 + $0x22c] sm:$0xf]
        %v1927 = vld [vmem:[%s6 + $0x230] sm:$0xf]
        %v1928 = vld [vmem:[%s6 + $0x234] sm:$0xf]
        %v1929 = vld [vmem:[%s6 + $0x238] sm:$0xf]
        %v1930 = vld [vmem:[%s6 + $0x23c] sm:$0xf]
        %v1931 = vld [vmem:[%s6 + $0x240] sm:$0xf]
        %v1932 = vld [vmem:[%s6 + $0x244] sm:$0xf]
        %v1933 = vld [vmem:[%s6 + $0x248] sm:$0xf]
        %v1934 = vld [vmem:[%s6 + $0x24c] sm:$0xf]
        %v1935 = vld [vmem:[%s6 + $0x250] sm:$0xf]
        %v1936 = vld [vmem:[%s6 + $0x254] sm:$0xf]
        %v1937 = vld [vmem:[%s6 + $0x258] sm:$0xf]
        %v1938 = vld [vmem:[%s6 + $0x25c] sm:$0xf]
        %v1939 = vld [vmem:[%s6 + $0x260] sm:$0xf]
        %v1940 = vld [vmem:[%s6 + $0x264] sm:$0xf]
        %v1941 = vld [vmem:[%s6 + $0x268] sm:$0xf]
        %v1942 = vld [vmem:[%s6 + $0x26c] sm:$0xf]
        %v1943 = vld [vmem:[%s6 + $0x270] sm:$0xf]
        %v1944 = vld [vmem:[%s6 + $0x274] sm:$0xf]
        %v1945 = vld [vmem:[%s6 + $0x278] sm:$0xf]
        %v1946 = vld [vmem:[%s6 + $0x27c] sm:$0xf]
        %v1947 = vld [vmem:[%s6 + $0x280] sm:$0xf]
        %v1948 = vld [vmem:[%s6 + $0x284] sm:$0xf]
        %v1949 = vld [vmem:[%s6 + $0x288] sm:$0xf]
        %v1950 = vld [vmem:[%s6 + $0x28c] sm:$0xf]
        %v1951 = vld [vmem:[%s6 + $0x290] sm:$0xf]
        %v1952 = vld [vmem:[%s6 + $0x294] sm:$0xf]
        %v1953 = vld [vmem:[%s6 + $0x298] sm:$0xf]
        %v1954 = vld [vmem:[%s6 + $0x29c] sm:$0xf]
        %v1955 = vld [vmem:[%s6 + $0x2a0] sm:$0xf]
        %v1956 = vld [vmem:[%s6 + $0x2a4] sm:$0xf]
        %v1957 = vld [vmem:[%s6 + $0x2a8] sm:$0xf]
        %v1958 = vld [vmem:[%s6 + $0x2ac] sm:$0xf]
        %v1959 = vld [vmem:[%s6 + $0x2b0] sm:$0xf]
        %v1960 = vld [vmem:[%s6 + $0x2b4] sm:$0xf]
        %v1961 = vld [vmem:[%s6 + $0x2b8] sm:$0xf]
        %v1962 = vld [vmem:[%s6 + $0x2bc] sm:$0xf]
        %v1963 = vld [vmem:[%s6 + $0x2c0] sm:$0xf]
        %v1964 = vld [vmem:[%s6 + $0x2c4] sm:$0xf]
        %v1965 = vld [vmem:[%s6 + $0x2c8] sm:$0xf]
        %v1966 = vld [vmem:[%s6 + $0x2cc] sm:$0xf]
        %v1967 = vld [vmem:[%s6 + $0x2d0] sm:$0xf]
        %v1968 = vld [vmem:[%s6 + $0x2d4] sm:$0xf]
        %v1969 = vld [vmem:[%s6 + $0x2d8] sm:$0xf]
        %v1970 = vld [vmem:[%s6 + $0x2dc] sm:$0xf]
        %v1971 = vld [vmem:[%s6 + $0x2e0] sm:$0xf]
        %v1972 = vld [vmem:[%s6 + $0x2e4] sm:$0xf]
        %v1973 = vld [vmem:[%s6 + $0x2e8] sm:$0xf]
        %v1974 = vld [vmem:[%s6 + $0x2ec] sm:$0xf]
        %v1975 = vld [vmem:[%s6 + $0x2f0] sm:$0xf]
        %v1976 = vld [vmem:[%s6 + $0x2f4] sm:$0xf]
        %v1977 = vld [vmem:[%s6 + $0x2f8] sm:$0xf]
        %v1978 = vld [vmem:[%s6 + $0x2fc] sm:$0xf]
        %v1979 = vld [vmem:[%s6 + $0x300] sm:$0xf]
        %v1980 = vld [vmem:[%s6 + $0x304] sm:$0xf]
        %v1981 = vld [vmem:[%s6 + $0x308] sm:$0xf]
        %v1982 = vld [vmem:[%s6 + $0x30c] sm:$0xf]
        %v1983 = vpack.c.bf16 %v1723, %v1723
        %v1984 = vpack.c.bf16 %v1782, %v1782
        %v1985 = vpack.c.bf16 %v1733, %v1733
        %v1986 = vpack.c.bf16 %v1783, %v1783
        %v1987 = vpack.c.bf16 %v1744, %v1744
        %v1988 = vpack.c.bf16 %v1784, %v1784
        %v1989 = vpack.c.bf16 %v1755, %v1755
        %v1990 = vpack.c.bf16 %v1758, %v1758
        %v1991 = vpack.c.bf16 %v1785, %v1785
        %v1992 = vpack.c.bf16 %v1768, %v1768
        %v1993 = vpack.c.bf16 %v1786, %v1786
        %v1994 = vpack.c.bf16 %v1778, %v1778
        %v1995 = vpack.c.bf16 %v1777, %v1777
        %v1996 = vld [vmem:[%s7] sm:$0x1]
        %v2193 = vunpack.c.l.b16 %v1787
        %v2194 = vunpack.c.l.b16 %v1788
        %v2195 = vunpack.c.l.b16 %v1789
        %v2196 = vunpack.c.l.b16 %v1790
        %v2197 = vunpack.c.l.b16 %v1791
        %v2198 = vunpack.c.l.b16 %v1792
        %v2199 = vunpack.c.l.b16 %v1793
        %v2200 = vunpack.c.l.b16 %v1794
        %v2201 = vunpack.c.l.b16 %v1795
        %v2202 = vunpack.c.l.b16 %v1796
        %v2203 = vunpack.c.l.b16 %v1797
        %v2204 = vunpack.c.l.b16 %v1798
        %v2205 = vunpack.c.l.b16 %v1799
        %v2206 = vunpack.c.l.b16 %v1800
        %v2207 = vunpack.c.l.b16 %v1801
        %v2208 = vunpack.c.l.b16 %v1802
        %v2209 = vunpack.c.l.b16 %v1803
        %v2210 = vunpack.c.l.b16 %v1804
        %v2211 = vunpack.c.l.b16 %v1805
        %v2212 = vunpack.c.l.b16 %v1806
        %v2213 = vunpack.c.l.b16 %v1807
        %v2214 = vunpack.c.l.b16 %v1808
        %v2215 = vunpack.c.l.b16 %v1809
        %v2216 = vunpack.c.l.b16 %v1810
        %v2217 = vunpack.c.l.b16 %v1811
        %v2218 = vunpack.c.l.b16 %v1812
        %v2219 = vunpack.c.l.b16 %v1813
        %v2220 = vunpack.c.l.b16 %v1814
        %v2221 = vunpack.c.l.b16 %v1815
        %v2222 = vunpack.c.l.b16 %v1816
        %v2223 = vunpack.c.l.b16 %v1817
        %v2224 = vunpack.c.l.b16 %v1818
        %v2225 = vunpack.c.l.b16 %v1819
        %v2226 = vunpack.c.l.b16 %v1820
        %v2227 = vunpack.c.l.b16 %v1821
        %v2228 = vunpack.c.l.b16 %v1822
        %v2229 = vunpack.c.l.b16 %v1823
        %v2230 = vunpack.c.l.b16 %v1824
        %v2231 = vunpack.c.l.b16 %v1825
        %v2232 = vunpack.c.l.b16 %v1826
        %v2233 = vunpack.c.l.b16 %v1827
        %v2234 = vunpack.c.l.b16 %v1828
        %v2235 = vunpack.c.l.b16 %v1829
        %v2236 = vunpack.c.l.b16 %v1830
        %v2237 = vunpack.c.l.b16 %v1831
        %v2238 = vunpack.c.l.b16 %v1832
        %v2239 = vunpack.c.l.b16 %v1833
        %v2240 = vunpack.c.l.b16 %v1834
        %v2241 = vunpack.c.l.b16 %v1835
        %v2242 = vunpack.c.l.b16 %v1836
        %v2243 = vunpack.c.l.b16 %v1837
        %v2244 = vunpack.c.l.b16 %v1838
        %v2245 = vunpack.c.l.b16 %v1839
        %v2246 = vunpack.c.l.b16 %v1840
        %v2247 = vunpack.c.l.b16 %v1841
        %v2248 = vunpack.c.l.b16 %v1842
        %v2249 = vunpack.c.l.b16 %v1843
        %v2250 = vunpack.c.l.b16 %v1844
        %v2251 = vunpack.c.l.b16 %v1845
        %v2252 = vunpack.c.l.b16 %v1846
        %v2253 = vunpack.c.l.b16 %v1847
        %v2254 = vunpack.c.l.b16 %v1848
        %v2255 = vunpack.c.l.b16 %v1849
        %v2256 = vunpack.c.l.b16 %v1850
        %v2257 = vunpack.c.l.b16 %v1851
        %v2258 = vunpack.c.l.b16 %v1852
        %v2259 = vunpack.c.l.b16 %v1853
        %v2260 = vunpack.c.l.b16 %v1854
        %v2261 = vunpack.c.l.b16 %v1855
        %v2262 = vunpack.c.l.b16 %v1856
        %v2263 = vunpack.c.l.b16 %v1857
        %v2264 = vunpack.c.l.b16 %v1858
        %v2265 = vunpack.c.l.b16 %v1859
        %v2266 = vunpack.c.l.b16 %v1860
        %v2267 = vunpack.c.l.b16 %v1861
        %v2268 = vunpack.c.l.b16 %v1862
        %v2269 = vunpack.c.l.b16 %v1863
        %v2270 = vunpack.c.l.b16 %v1864
        %v2271 = vunpack.c.l.b16 %v1865
        %v2272 = vunpack.c.l.b16 %v1866
        %v2273 = vunpack.c.l.b16 %v1867
        %v2274 = vunpack.c.l.b16 %v1868
        %v2275 = vunpack.c.l.b16 %v1869
        %v2276 = vunpack.c.l.b16 %v1870
        %v2277 = vunpack.c.l.b16 %v1871
        %v2278 = vunpack.c.l.b16 %v1872
        %v2279 = vunpack.c.l.b16 %v1873
        %v2280 = vunpack.c.l.b16 %v1874
        %v2281 = vunpack.c.l.b16 %v1875
        %v2282 = vunpack.c.l.b16 %v1876
        %v2283 = vunpack.c.l.b16 %v1877
        %v2284 = vunpack.c.l.b16 %v1878
        %v2285 = vunpack.c.l.b16 %v1879
        %v2286 = vunpack.c.l.b16 %v1880
        %v2287 = vunpack.c.l.b16 %v1881
        %v2288 = vunpack.c.l.b16 %v1882
        %v2289 = vunpack.c.l.b16 %v1883
        %v2290 = vunpack.c.l.b16 %v1884
        %v2291 = vunpack.c.l.b16 %v1885
        %v2292 = vunpack.c.l.b16 %v1886
        %v2293 = vunpack.c.l.b16 %v1887
        %v2294 = vunpack.c.l.b16 %v1888
        %v2295 = vunpack.c.l.b16 %v1889
        %v2296 = vunpack.c.l.b16 %v1890
        %v2297 = vunpack.c.l.b16 %v1891
        %v2298 = vunpack.c.l.b16 %v1892
        %v2299 = vunpack.c.l.b16 %v1893
        %v2300 = vunpack.c.l.b16 %v1894
        %v2301 = vunpack.c.l.b16 %v1895
        %v2302 = vunpack.c.l.b16 %v1896
        %v2303 = vunpack.c.l.b16 %v1897
        %v2304 = vunpack.c.l.b16 %v1898
        %v2305 = vunpack.c.l.b16 %v1899
        %v2306 = vunpack.c.l.b16 %v1900
        %v2307 = vunpack.c.l.b16 %v1901
        %v2308 = vunpack.c.l.b16 %v1902
        %v2309 = vunpack.c.l.b16 %v1903
        %v2310 = vunpack.c.l.b16 %v1904
        %v2311 = vunpack.c.l.b16 %v1905
        %v2312 = vunpack.c.l.b16 %v1906
        %v2313 = vunpack.c.l.b16 %v1907
        %v2314 = vunpack.c.l.b16 %v1908
        %v2315 = vunpack.c.l.b16 %v1909
        %v2316 = vunpack.c.l.b16 %v1910
        %v2317 = vunpack.c.l.b16 %v1911
        %v2318 = vunpack.c.l.b16 %v1912
        %v2319 = vunpack.c.l.b16 %v1913
        %v2320 = vunpack.c.l.b16 %v1914
        %v2321 = vunpack.c.l.b16 %v1915
        %v2322 = vunpack.c.l.b16 %v1916
        %v2323 = vunpack.c.l.b16 %v1917
        %v2324 = vunpack.c.l.b16 %v1918
        %v2325 = vunpack.c.l.b16 %v1919
        %v2326 = vunpack.c.l.b16 %v1920
        %v2327 = vunpack.c.l.b16 %v1921
        %v2328 = vunpack.c.l.b16 %v1922
        %v2329 = vunpack.c.l.b16 %v1923
        %v2330 = vunpack.c.l.b16 %v1924
        %v2331 = vunpack.c.l.b16 %v1925
        %v2332 = vunpack.c.l.b16 %v1926
        %v2333 = vunpack.c.l.b16 %v1927
        %v2334 = vunpack.c.l.b16 %v1928
        %v2335 = vunpack.c.l.b16 %v1929
        %v2336 = vunpack.c.l.b16 %v1930
        %v2337 = vunpack.c.l.b16 %v1931
        %v2338 = vunpack.c.l.b16 %v1932
        %v2339 = vunpack.c.l.b16 %v1933
        %v2340 = vunpack.c.l.b16 %v1934
        %v2341 = vunpack.c.l.b16 %v1935
        %v2342 = vunpack.c.l.b16 %v1936
        %v2343 = vunpack.c.l.b16 %v1937
        %v2344 = vunpack.c.l.b16 %v1938
        %v2345 = vunpack.c.l.b16 %v1939
        %v2346 = vunpack.c.l.b16 %v1940
        %v2347 = vunpack.c.l.b16 %v1941
        %v2348 = vunpack.c.l.b16 %v1942
        %v2349 = vunpack.c.l.b16 %v1943
        %v2350 = vunpack.c.l.b16 %v1944
        %v2351 = vunpack.c.l.b16 %v1945
        %v2352 = vunpack.c.l.b16 %v1946
        %v2353 = vunpack.c.l.b16 %v1947
        %v2354 = vunpack.c.l.b16 %v1948
        %v2355 = vunpack.c.l.b16 %v1949
        %v2356 = vunpack.c.l.b16 %v1950
        %v2357 = vunpack.c.l.b16 %v1951
        %v2358 = vunpack.c.l.b16 %v1952
        %v2359 = vunpack.c.l.b16 %v1953
        %v2360 = vunpack.c.l.b16 %v1954
        %v2361 = vunpack.c.l.b16 %v1955
        %v2362 = vunpack.c.l.b16 %v1956
        %v2363 = vunpack.c.l.b16 %v1957
        %v2364 = vunpack.c.l.b16 %v1958
        %v2365 = vunpack.c.l.b16 %v1959
        %v2366 = vunpack.c.l.b16 %v1960
        %v2367 = vunpack.c.l.b16 %v1961
        %v2368 = vunpack.c.l.b16 %v1962
        %v2369 = vunpack.c.l.b16 %v1963
        %v2370 = vunpack.c.l.b16 %v1964
        %v2371 = vunpack.c.l.b16 %v1965
        %v2372 = vunpack.c.l.b16 %v1966
        %v2373 = vunpack.c.l.b16 %v1967
        %v2374 = vunpack.c.l.b16 %v1968
        %v2375 = vunpack.c.l.b16 %v1969
        %v2376 = vunpack.c.l.b16 %v1970
        %v2377 = vunpack.c.l.b16 %v1971
        %v2378 = vunpack.c.l.b16 %v1972
        %v2379 = vunpack.c.l.b16 %v1973
        %v2380 = vunpack.c.l.b16 %v1974
        %v2381 = vunpack.c.l.b16 %v1975
        %v2382 = vunpack.c.l.b16 %v1976
        %v2383 = vunpack.c.l.b16 %v1977
        %v2384 = vunpack.c.l.b16 %v1978
        %v2385 = vunpack.c.l.b16 %v1979
        %v2386 = vunpack.c.l.b16 %v1980
        %v2387 = vunpack.c.l.b16 %v1981
        %v2388 = vunpack.c.l.b16 %v1982
        %v2389 = vpack.c.b16 %v2194, %v2193
        %v2390 = vpack.c.b16 %v2196, %v2195
        %v2391 = vpack.c.b16 %v2198, %v2197
        %v2392 = vpack.c.b16 %v2200, %v2199
        %v2393 = vpack.c.b16 %v2202, %v2201
        %v2394 = vpack.c.b16 %v2204, %v2203
        %v2395 = vpack.c.b16 %v2206, %v2205
        %v2396 = vpack.c.b16 %v2208, %v2207
        %v2397 = vpack.c.b16 %v2210, %v2209
        %v2398 = vpack.c.b16 %v2212, %v2211
        %v2399 = vpack.c.b16 %v2214, %v2213
        %v2400 = vpack.c.b16 %v2216, %v2215
        %v2401 = vpack.c.b16 %v2218, %v2217
        %v2402 = vpack.c.b16 %v2220, %v2219
        %v2403 = vpack.c.b16 %v2222, %v2221
        %v2404 = vpack.c.b16 %v2224, %v2223
        %v2405 = vpack.c.b16 %v2226, %v2225
        %v2406 = vpack.c.b16 %v2228, %v2227
        %v2407 = vpack.c.b16 %v2230, %v2229
        %v2408 = vpack.c.b16 %v2232, %v2231
        %v2409 = vpack.c.b16 %v2234, %v2233
        %v2410 = vpack.c.b16 %v2236, %v2235
        %v2411 = vpack.c.b16 %v2238, %v2237
        %v2412 = vpack.c.b16 %v2240, %v2239
        %v2413 = vpack.c.b16 %v2242, %v2241
        %v2414 = vpack.c.b16 %v2244, %v2243
        %v2415 = vpack.c.b16 %v2246, %v2245
        %v2416 = vpack.c.b16 %v2248, %v2247
        %v2417 = vpack.c.b16 %v2250, %v2249
        %v2418 = vpack.c.b16 %v2252, %v2251
        %v2419 = vpack.c.b16 %v2254, %v2253
        %v2420 = vpack.c.b16 %v2256, %v2255
        %v2421 = vpack.c.b16 %v2258, %v2257
        %v2422 = vpack.c.b16 %v2260, %v2259
        %v2423 = vpack.c.b16 %v2262, %v2261
        %v2424 = vpack.c.b16 %v2264, %v2263
        %v2425 = vpack.c.b16 %v2266, %v2265
        %v2426 = vpack.c.b16 %v2268, %v2267
        %v2427 = vpack.c.b16 %v2270, %v2269
        %v2428 = vpack.c.b16 %v2272, %v2271
        %v2429 = vpack.c.b16 %v2274, %v2273
        %v2430 = vpack.c.b16 %v2276, %v2275
        %v2431 = vpack.c.b16 %v2278, %v2277
        %v2432 = vpack.c.b16 %v2280, %v2279
        %v2433 = vpack.c.b16 %v2282, %v2281
        %v2434 = vpack.c.b16 %v2284, %v2283
        %v2435 = vpack.c.b16 %v2286, %v2285
        %v2436 = vpack.c.b16 %v2288, %v2287
        %v2437 = vpack.c.b16 %v2290, %v2289
        %v2438 = vpack.c.b16 %v2292, %v2291
        %v2439 = vpack.c.b16 %v2294, %v2293
        %v2440 = vpack.c.b16 %v2296, %v2295
        %v2441 = vpack.c.b16 %v2298, %v2297
        %v2442 = vpack.c.b16 %v2300, %v2299
        %v2443 = vpack.c.b16 %v2302, %v2301
        %v2444 = vpack.c.b16 %v2304, %v2303
        %v2445 = vpack.c.b16 %v2306, %v2305
        %v2446 = vpack.c.b16 %v2308, %v2307
        %v2447 = vpack.c.b16 %v2310, %v2309
        %v2448 = vpack.c.b16 %v2312, %v2311
        %v2449 = vpack.c.b16 %v2314, %v2313
        %v2450 = vpack.c.b16 %v2316, %v2315
        %v2451 = vpack.c.b16 %v2318, %v2317
        %v2452 = vpack.c.b16 %v2320, %v2319
        %v2453 = vpack.c.b16 %v2322, %v2321
        %v2454 = vpack.c.b16 %v2324, %v2323
        %v2455 = vpack.c.b16 %v2326, %v2325
        %v2456 = vpack.c.b16 %v2328, %v2327
        %v2457 = vpack.c.b16 %v2330, %v2329
        %v2458 = vpack.c.b16 %v2332, %v2331
        %v2459 = vpack.c.b16 %v2334, %v2333
        %v2460 = vpack.c.b16 %v2336, %v2335
        %v2461 = vpack.c.b16 %v2338, %v2337
        %v2462 = vpack.c.b16 %v2340, %v2339
        %v2463 = vpack.c.b16 %v2342, %v2341
        %v2464 = vpack.c.b16 %v2344, %v2343
        %v2465 = vpack.c.b16 %v2346, %v2345
        %v2466 = vpack.c.b16 %v2348, %v2347
        %v2467 = vpack.c.b16 %v2350, %v2349
        %v2468 = vpack.c.b16 %v2352, %v2351
        %v2469 = vpack.c.b16 %v2354, %v2353
        %v2470 = vpack.c.b16 %v2356, %v2355
        %v2471 = vpack.c.b16 %v2358, %v2357
        %v2472 = vpack.c.b16 %v2360, %v2359
        %v2473 = vpack.c.b16 %v2362, %v2361
        %v2474 = vpack.c.b16 %v2364, %v2363
        %v2475 = vpack.c.b16 %v2366, %v2365
        %v2476 = vpack.c.b16 %v2368, %v2367
        %v2477 = vpack.c.b16 %v2370, %v2369
        %v2478 = vpack.c.b16 %v2372, %v2371
        %v2479 = vpack.c.b16 %v2374, %v2373
        %v2480 = vpack.c.b16 %v2376, %v2375
        %v2481 = vpack.c.b16 %v2378, %v2377
        %v2482 = vpack.c.b16 %v2380, %v2379
        %v2483 = vpack.c.b16 %v2382, %v2381
        %v2484 = vpack.c.b16 %v2384, %v2383
        %v2485 = vpack.c.b16 %v2386, %v2385
        %v2486 = vpack.c.b16 %v2388, %v2387
        %v2586 = vsel %vm1754, %v1995, 0
        %2588 = vmatprep.subr.bf16.mxu0 0
        %2589 = vmatpush1.bf16.msra.mxu0 %v2396
        %2590 = vmatprep.subr.bf16.mxu0 0
        %2591 = vmatpush1.bf16.msra.mxu0 %v2395
        %2592 = vmatprep.subr.bf16.mxu0 0
        %2593 = vmatpush1.bf16.msra.mxu0 %v2394
        %2594 = vmatprep.subr.bf16.mxu0 0
        %2595 = vmatpush1.bf16.msra.mxu0 %v2393
        %2596 = vmatprep.subr.bf16.mxu0 0
        %2597 = vmatpush1.bf16.msra.mxu0 %v2392
        %2598 = vmatprep.subr.bf16.mxu0 0
        %2599 = vmatpush1.bf16.msra.mxu0 %v2391
        %2600 = vmatprep.subr.bf16.mxu0 0
        %2601 = vmatpush1.bf16.msra.mxu0 %v2390
        %2602 = vmatprep.subr.bf16.mxu0 0
        %2603 = vmatpush1.bf16.msra.mxu0 %v2389
        %2604 = vmatprep.subr.bf16.mxu0 0
        %2605 = vmatpush2.bf16.msra.mxu0 %v2404
        %2606 = vmatprep.subr.bf16.mxu0 0
        %2607 = vmatpush2.bf16.msra.mxu0 %v2403
        %2608 = vmatprep.subr.bf16.mxu0 0
        %2609 = vmatpush2.bf16.msra.mxu0 %v2402
        %2610 = vmatprep.subr.bf16.mxu0 0
        %2611 = vmatpush2.bf16.msra.mxu0 %v2401
        %2612 = vmatprep.subr.bf16.mxu0 0
        %2613 = vmatpush2.bf16.msra.mxu0 %v2400
        %2614 = vmatprep.subr.bf16.mxu0 0
        %2615 = vmatpush2.bf16.msra.mxu0 %v2399
        %2616 = vmatprep.subr.bf16.mxu0 0
        %2617 = vmatpush2.bf16.msra.mxu0 %v2398
        %2618 = vmatprep.subr.bf16.mxu0 0
        %2619 = vmatpush2.bf16.msra.mxu0 %v2397
        %2620 = vmatprep.mubr.bf16.mxu0 %v1984
        %2621 = vmatmul.mubr.bf16.gmra.mxu0 %v1983
        %v2622 = vpop.f32.mrf.mxu0
        %v2623 = vadd.f32 %v1996, %v2622
        %v2624 = vpop.f32.mrf.mxu0
        %v2625 = vpop.f32.mrf.mxu0
        %v2626 = vpop.f32.mrf.mxu0
        %2627 = vdwg.mxu0
        %2628 = vmatprep.subr.bf16.mxu0 0
        %2629 = vmatpush1.bf16.msra.mxu0 %v2412
        %2630 = vmatprep.subr.bf16.mxu0 0
        %2631 = vmatpush1.bf16.msra.mxu0 %v2411
        %2632 = vmatprep.subr.bf16.mxu0 0
        %2633 = vmatpush1.bf16.msra.mxu0 %v2410
        %2634 = vmatprep.subr.bf16.mxu0 0
        %2635 = vmatpush1.bf16.msra.mxu0 %v2409
        %2636 = vmatprep.subr.bf16.mxu0 0
        %2637 = vmatpush1.bf16.msra.mxu0 %v2408
        %2638 = vmatprep.subr.bf16.mxu0 0
        %2639 = vmatpush1.bf16.msra.mxu0 %v2407
        %2640 = vmatprep.subr.bf16.mxu0 0
        %2641 = vmatpush1.bf16.msra.mxu0 %v2406
        %2642 = vmatprep.subr.bf16.mxu0 0
        %2643 = vmatpush1.bf16.msra.mxu0 %v2405
        %2644 = vmatprep.subr.bf16.mxu0 0
        %2645 = vmatpush2.bf16.msra.mxu0 %v2420
        %2646 = vmatprep.subr.bf16.mxu0 0
        %2647 = vmatpush2.bf16.msra.mxu0 %v2419
        %2648 = vmatprep.subr.bf16.mxu0 0
        %2649 = vmatpush2.bf16.msra.mxu0 %v2418
        %2650 = vmatprep.subr.bf16.mxu0 0
        %2651 = vmatpush2.bf16.msra.mxu0 %v2417
        %2652 = vmatprep.subr.bf16.mxu0 0
        %2653 = vmatpush2.bf16.msra.mxu0 %v2416
        %2654 = vmatprep.subr.bf16.mxu0 0
        %2655 = vmatpush2.bf16.msra.mxu0 %v2415
        %2656 = vmatprep.subr.bf16.mxu0 0
        %2657 = vmatpush2.bf16.msra.mxu0 %v2414
        %2658 = vmatprep.subr.bf16.mxu0 0
        %2659 = vmatpush2.bf16.msra.mxu0 %v2413
        %2660 = vmatprep.mubr.bf16.mxu0 %v1986
        %2661 = vmatmul.mubr.bf16.gmra.mxu0 %v1985
        %v2662 = vpop.f32.mrf.mxu0
        %v2663 = vadd.f32 %v2623, %v2662
        %v2664 = vpop.f32.mrf.mxu0
        %v2665 = vpop.f32.mrf.mxu0
        %v2666 = vpop.f32.mrf.mxu0
        %2667 = vdwg.mxu0
        %2668 = vmatprep.subr.bf16.mxu0 0
        %2669 = vmatpush1.bf16.msra.mxu0 %v2428
        %2670 = vmatprep.subr.bf16.mxu0 0
        %2671 = vmatpush1.bf16.msra.mxu0 %v2427
        %2672 = vmatprep.subr.bf16.mxu0 0
        %2673 = vmatpush1.bf16.msra.mxu0 %v2426
        %2674 = vmatprep.subr.bf16.mxu0 0
        %2675 = vmatpush1.bf16.msra.mxu0 %v2425
        %2676 = vmatprep.subr.bf16.mxu0 0
        %2677 = vmatpush1.bf16.msra.mxu0 %v2424
        %2678 = vmatprep.subr.bf16.mxu0 0
        %2679 = vmatpush1.bf16.msra.mxu0 %v2423
        %2680 = vmatprep.subr.bf16.mxu0 0
        %2681 = vmatpush1.bf16.msra.mxu0 %v2422
        %2682 = vmatprep.subr.bf16.mxu0 0
        %2683 = vmatpush1.bf16.msra.mxu0 %v2421
        %2684 = vmatprep.subr.bf16.mxu0 0
        %2685 = vmatpush2.bf16.msra.mxu0 %v2436
        %2686 = vmatprep.subr.bf16.mxu0 0
        %2687 = vmatpush2.bf16.msra.mxu0 %v2435
        %2688 = vmatprep.subr.bf16.mxu0 0
        %2689 = vmatpush2.bf16.msra.mxu0 %v2434
        %2690 = vmatprep.subr.bf16.mxu0 0
        %2691 = vmatpush2.bf16.msra.mxu0 %v2433
        %2692 = vmatprep.subr.bf16.mxu0 0
        %2693 = vmatpush2.bf16.msra.mxu0 %v2432
        %2694 = vmatprep.subr.bf16.mxu0 0
        %2695 = vmatpush2.bf16.msra.mxu0 %v2431
        %2696 = vmatprep.subr.bf16.mxu0 0
        %2697 = vmatpush2.bf16.msra.mxu0 %v2430
        %2698 = vmatprep.subr.bf16.mxu0 0
        %2699 = vmatpush2.bf16.msra.mxu0 %v2429
        %2700 = vmatprep.mubr.bf16.mxu0 %v1988
        %2701 = vmatmul.mubr.bf16.gmra.mxu0 %v1987
        %v2702 = vpop.f32.mrf.mxu0
        %v2703 = vadd.f32 %v2663, %v2702
        %v2704 = vpop.f32.mrf.mxu0
        %v2705 = vpop.f32.mrf.mxu0
        %v2706 = vpop.f32.mrf.mxu0
        %2707 = vdwg.mxu0
        %2708 = vmatprep.subr.bf16.mxu0 0
        %2709 = vmatpush1.bf16.msra.mxu0 %v2444
        %2710 = vmatprep.subr.bf16.mxu0 0
        %2711 = vmatpush1.bf16.msra.mxu0 %v2443
        %2712 = vmatprep.subr.bf16.mxu0 0
        %2713 = vmatpush1.bf16.msra.mxu0 %v2442
        %2714 = vmatprep.subr.bf16.mxu0 0
        %2715 = vmatpush1.bf16.msra.mxu0 %v2441
        %2716 = vmatprep.subr.bf16.mxu0 0
        %2717 = vmatpush1.bf16.msra.mxu0 %v2440
        %2718 = vmatprep.subr.bf16.mxu0 0
        %2719 = vmatpush1.bf16.msra.mxu0 %v2439
        %2720 = vmatprep.subr.bf16.mxu0 0
        %2721 = vmatpush1.bf16.msra.mxu0 %v2438
        %2722 = vmatprep.subr.bf16.mxu0 0
        %2723 = vmatpush1.bf16.msra.mxu0 %v2437
        %2724 = vmatprep.subr.bf16.mxu0 0
        %2725 = vmatpush2.bf16.msra.mxu0 %v2452
        %2726 = vmatprep.subr.bf16.mxu0 0
        %2727 = vmatpush2.bf16.msra.mxu0 %v2451
        %2728 = vmatprep.subr.bf16.mxu0 0
        %2729 = vmatpush2.bf16.msra.mxu0 %v2450
        %2730 = vmatprep.subr.bf16.mxu0 0
        %2731 = vmatpush2.bf16.msra.mxu0 %v2449
        %2732 = vmatprep.subr.bf16.mxu0 0
        %2733 = vmatpush2.bf16.msra.mxu0 %v2448
        %2734 = vmatprep.subr.bf16.mxu0 0
        %2735 = vmatpush2.bf16.msra.mxu0 %v2447
        %2736 = vmatprep.subr.bf16.mxu0 0
        %2737 = vmatpush2.bf16.msra.mxu0 %v2446
        %2738 = vmatprep.subr.bf16.mxu0 0
        %2739 = vmatpush2.bf16.msra.mxu0 %v2445
        %2740 = vmatprep.mubr.bf16.mxu0 %v1990
        %2741 = vmatmul.mubr.bf16.gmra.mxu0 %v1989
        %v2742 = vpop.f32.mrf.mxu0
        %v2743 = vadd.f32 %v2703, %v2742
        %v2744 = vpop.f32.mrf.mxu0
        %v2745 = vpop.f32.mrf.mxu0
        %v2746 = vpop.f32.mrf.mxu0
        %2747 = vdwg.mxu0
        %2748 = vmatprep.subr.bf16.mxu0 0
        %2749 = vmatpush1.bf16.msra.mxu0 %v2460
        %2750 = vmatprep.subr.bf16.mxu0 0
        %2751 = vmatpush1.bf16.msra.mxu0 %v2459
        %2752 = vmatprep.subr.bf16.mxu0 0
        %2753 = vmatpush1.bf16.msra.mxu0 %v2458
        %2754 = vmatprep.subr.bf16.mxu0 0
        %2755 = vmatpush1.bf16.msra.mxu0 %v2457
        %2756 = vmatprep.subr.bf16.mxu0 0
        %2757 = vmatpush1.bf16.msra.mxu0 %v2456
        %2758 = vmatprep.subr.bf16.mxu0 0
        %2759 = vmatpush1.bf16.msra.mxu0 %v2455
        %2760 = vmatprep.subr.bf16.mxu0 0
        %2761 = vmatpush1.bf16.msra.mxu0 %v2454
        %2762 = vmatprep.subr.bf16.mxu0 0
        %2763 = vmatpush1.bf16.msra.mxu0 %v2453
        %2764 = vmatprep.subr.bf16.mxu0 0
        %2765 = vmatpush2.bf16.msra.mxu0 %v2468
        %2766 = vmatprep.subr.bf16.mxu0 0
        %2767 = vmatpush2.bf16.msra.mxu0 %v2467
        %2768 = vmatprep.subr.bf16.mxu0 0
        %2769 = vmatpush2.bf16.msra.mxu0 %v2466
        %2770 = vmatprep.subr.bf16.mxu0 0
        %2771 = vmatpush2.bf16.msra.mxu0 %v2465
        %2772 = vmatprep.subr.bf16.mxu0 0
        %2773 = vmatpush2.bf16.msra.mxu0 %v2464
        %2774 = vmatprep.subr.bf16.mxu0 0
        %2775 = vmatpush2.bf16.msra.mxu0 %v2463
        %2776 = vmatprep.subr.bf16.mxu0 0
        %2777 = vmatpush2.bf16.msra.mxu0 %v2462
        %2778 = vmatprep.subr.bf16.mxu0 0
        %2779 = vmatpush2.bf16.msra.mxu0 %v2461
        %2780 = vmatprep.mubr.bf16.mxu0 %v1992
        %2781 = vmatmul.mubr.bf16.gmra.mxu0 %v1991
        %v2782 = vpop.f32.mrf.mxu0
        %v2783 = vadd.f32 %v2743, %v2782
        %v2784 = vpop.f32.mrf.mxu0
        %v2785 = vpop.f32.mrf.mxu0
        %v2786 = vpop.f32.mrf.mxu0
        %2787 = vdwg.mxu0
        %2788 = vmatprep.subr.bf16.mxu0 0
        %2789 = vmatpush1.bf16.msra.mxu0 %v2476
        %2790 = vmatprep.subr.bf16.mxu0 0
        %2791 = vmatpush1.bf16.msra.mxu0 %v2475
        %2792 = vmatprep.subr.bf16.mxu0 0
        %2793 = vmatpush1.bf16.msra.mxu0 %v2474
        %2794 = vmatprep.subr.bf16.mxu0 0
        %2795 = vmatpush1.bf16.msra.mxu0 %v2473
        %2796 = vmatprep.subr.bf16.mxu0 0
        %2797 = vmatpush1.bf16.msra.mxu0 %v2472
        %2798 = vmatprep.subr.bf16.mxu0 0
        %2799 = vmatpush1.bf16.msra.mxu0 %v2471
        %2800 = vmatprep.subr.bf16.mxu0 0
        %2801 = vmatpush1.bf16.msra.mxu0 %v2470
        %2802 = vmatprep.subr.bf16.mxu0 0
        %2803 = vmatpush1.bf16.msra.mxu0 %v2469
        %2804 = vmatprep.subr.bf16.mxu0 0
        %2805 = vmatpush2.bf16.msra.mxu0 %v2484
        %2806 = vmatprep.subr.bf16.mxu0 0
        %2807 = vmatpush2.bf16.msra.mxu0 %v2483
        %2808 = vmatprep.subr.bf16.mxu0 0
        %2809 = vmatpush2.bf16.msra.mxu0 %v2482
        %2810 = vmatprep.subr.bf16.mxu0 0
        %2811 = vmatpush2.bf16.msra.mxu0 %v2481
        %2812 = vmatprep.subr.bf16.mxu0 0
        %2813 = vmatpush2.bf16.msra.mxu0 %v2480
        %2814 = vmatprep.subr.bf16.mxu0 0
        %2815 = vmatpush2.bf16.msra.mxu0 %v2479
        %2816 = vmatprep.subr.bf16.mxu0 0
        %2817 = vmatpush2.bf16.msra.mxu0 %v2478
        %2818 = vmatprep.subr.bf16.mxu0 0
        %2819 = vmatpush2.bf16.msra.mxu0 %v2477
        %2820 = vmatprep.mubr.bf16.mxu0 %v1994
        %2821 = vmatmul.mubr.bf16.gmra.mxu0 %v1993
        %v2822 = vpop.f32.mrf.mxu0
        %v2823 = vadd.f32 %v2783, %v2822
        %v2824 = vpop.f32.mrf.mxu0
        %v2825 = vpop.f32.mrf.mxu0
        %v2826 = vpop.f32.mrf.mxu0
        %2827 = vdwg.mxu0
        %2828 = vmatprep.subr.bf16.mxu0 0
        %2829 = vmatpush1.bf16.msra.mxu0 0
        %2830 = vmatprep.subr.bf16.mxu0 0
        %2831 = vmatpush1.bf16.msra.mxu0 0
        %2832 = vmatprep.subr.bf16.mxu0 0
        %2833 = vmatpush1.bf16.msra.mxu0 0
        %2834 = vmatprep.subr.bf16.mxu0 0
        %2835 = vmatpush1.bf16.msra.mxu0 0
        %2836 = vmatprep.subr.bf16.mxu0 0
        %2837 = vmatpush1.bf16.msra.mxu0 0
        %2838 = vmatprep.subr.bf16.mxu0 0
        %2839 = vmatpush1.bf16.msra.mxu0 0
        %2840 = vmatprep.subr.bf16.mxu0 0
        %2841 = vmatpush1.bf16.msra.mxu0 %v2486
        %2842 = vmatprep.subr.bf16.mxu0 0
        %2843 = vmatpush1.bf16.msra.mxu0 %v2485
        %2844 = vmatprep.subr.bf16.mxu0 0
        %2845 = vmatpush2.bf16.msra.mxu0 0
        %2846 = vmatprep.subr.bf16.mxu0 0
        %2847 = vmatpush2.bf16.msra.mxu0 0
        %2848 = vmatprep.subr.bf16.mxu0 0
        %2849 = vmatpush2.bf16.msra.mxu0 0
        %2850 = vmatprep.subr.bf16.mxu0 0
        %2851 = vmatpush2.bf16.msra.mxu0 0
        %2852 = vmatprep.subr.bf16.mxu0 0
        %2853 = vmatpush2.bf16.msra.mxu0 0
        %2854 = vmatprep.subr.bf16.mxu0 0
        %2855 = vmatpush2.bf16.msra.mxu0 0
        %2856 = vmatprep.subr.bf16.mxu0 0
        %2857 = vmatpush2.bf16.msra.mxu0 0
        %2858 = vmatprep.subr.bf16.mxu0 0
        %2859 = vmatpush2.bf16.msra.mxu0 0
        %2860 = vmatprep.mubr.bf16.mxu0 0
        %2861 = vmatmul.mubr.bf16.gmra.mxu0 %v2586
        %v2862 = vpop.f32.mrf.mxu0
        %v2863 = vadd.f32 %v2823, %v2862
        %v2864 = vpop.f32.mrf.mxu0
        %v2865 = vpop.f32.mrf.mxu0
        %v2866 = vpop.f32.mrf.mxu0
        %2867 = vdwg.mxu0
        %v2868 = vmax.f32 %v2863, 0.0
        %v2869 = vld [vmem:[#allocation6] sm:$0xf]
        %v2870 = vld [vmem:[#allocation6 + $0x4] sm:$0xf]
        %v2871 = vld [vmem:[#allocation6 + $0x8] sm:$0xf]
        %v2872 = vld [vmem:[#allocation6 + $0xc] sm:$0xf]
        %v2873 = vld [vmem:[#allocation6 + $0x10] sm:$0xf]
        %v2874 = vld [vmem:[#allocation6 + $0x14] sm:$0xf]
        %v2875 = vld [vmem:[#allocation6 + $0x18] sm:$0xf]
        %v2876 = vld [vmem:[#allocation6 + $0x1c] sm:$0xf]
        %v2877 = vpack.c.bf16 %v2868, %v2868
        %v2878 = vld [vmem:[%s9] sm:$0x1]
        %v2887 = vunpack.c.l.b16 %v2869
        %v2888 = vunpack.c.l.b16 %v2870
        %v2889 = vunpack.c.l.b16 %v2871
        %v2890 = vunpack.c.l.b16 %v2872
        %v2891 = vunpack.c.l.b16 %v2873
        %v2892 = vunpack.c.l.b16 %v2874
        %v2893 = vunpack.c.l.b16 %v2875
        %v2894 = vunpack.c.l.b16 %v2876
        %v2895 = vpack.c.b16 %v2888, %v2887
        %v2896 = vpack.c.b16 %v2890, %v2889
        %v2897 = vpack.c.b16 %v2892, %v2891
        %v2898 = vpack.c.b16 %v2894, %v2893
        %v2904 = vsel %vm1743, %v2877, 0
        %2906 = vmatprep.subr.bf16.mxu0 0
        %2907 = vmatpush1.bf16.msra.mxu0 0
        %2908 = vmatprep.subr.bf16.mxu0 0
        %2909 = vmatpush1.bf16.msra.mxu0 0
        %2910 = vmatprep.subr.bf16.mxu0 0
        %2911 = vmatpush1.bf16.msra.mxu0 0
        %2912 = vmatprep.subr.bf16.mxu0 0
        %2913 = vmatpush1.bf16.msra.mxu0 0
        %2914 = vmatprep.subr.bf16.mxu0 0
        %2915 = vmatpush1.bf16.msra.mxu0 %v2898
        %2916 = vmatprep.subr.bf16.mxu0 0
        %2917 = vmatpush1.bf16.msra.mxu0 %v2897
        %2918 = vmatprep.subr.bf16.mxu0 0
        %2919 = vmatpush1.bf16.msra.mxu0 %v2896
        %2920 = vmatprep.subr.bf16.mxu0 0
        %2921 = vmatpush1.bf16.msra.mxu0 %v2895
        %2922 = vmatprep.subr.bf16.mxu0 0
        %2923 = vmatpush2.bf16.msra.mxu0 0
        %2924 = vmatprep.subr.bf16.mxu0 0
        %2925 = vmatpush2.bf16.msra.mxu0 0
        %2926 = vmatprep.subr.bf16.mxu0 0
        %2927 = vmatpush2.bf16.msra.mxu0 0
        %2928 = vmatprep.subr.bf16.mxu0 0
        %2929 = vmatpush2.bf16.msra.mxu0 0
        %2930 = vmatprep.subr.bf16.mxu0 0
        %2931 = vmatpush2.bf16.msra.mxu0 0
        %2932 = vmatprep.subr.bf16.mxu0 0
        %2933 = vmatpush2.bf16.msra.mxu0 0
        %2934 = vmatprep.subr.bf16.mxu0 0
        %2935 = vmatpush2.bf16.msra.mxu0 0
        %2936 = vmatprep.subr.bf16.mxu0 0
        %2937 = vmatpush2.bf16.msra.mxu0 0
        %2938 = vmatprep.mubr.bf16.mxu0 0
        %2939 = vmatmul.mubr.bf16.gmra.mxu0 %v2904
        %v2940 = vpop.f32.mrf.mxu0
        %v2941 = vadd.f32 %v2878, %v2940
        %v2942 = vpop.f32.mrf.mxu0
        %v2943 = vpop.f32.mrf.mxu0
        %v2944 = vpop.f32.mrf.mxu0
        %2945 = vdwg.mxu0
        %2946 = vst [vmem:[%s658] sm:$0x1] %v2941
        %v2947 = vmul.f32 %v2941, 0.5
        %v2948 = vmul.f32 %v2947, 1.442695
        %v2949 = vpow.pop %v2948
        %v2950 = vld [vmem:[%s655] sm:$0x1]
        %v2952 = vlaneseq
        %v2953 = vshrl.u32 %v2952, 7
        %v2954 = vsub.s32 0, %v2953
        %v2955 = vrot.slane %v2950, %v2954
        %2956 = vrot.lane.b32.xlu0 %v2955, 64
        %v2957 = vpop.permute.xlu0 %2956
        %v2959 = vmul.f32 %v2949, %v2957
        %2961 = vrot.lane.b32.xlu0 %v2959, 64
        %v2962 = vpop.permute.xlu0 %2961
        %v2964 = vadd.f32 %v2941, %v2962
        %v2965 = vld [vmem:[#allocation8] sm:$0xff]
        %v2966 = vld [vmem:[#allocation8 + $0x8] sm:$0xff]
        %v2967 = vld [vmem:[#allocation8 + $0x10] sm:$0xff]
        %v2968 = vld [vmem:[#allocation8 + $0x18] sm:$0xff]
        %v2969 = vld [vmem:[#allocation8 + $0x20] sm:$0xff]
        %v2970 = vld [vmem:[#allocation8 + $0x28] sm:$0xff]
        %v2971 = vld [vmem:[#allocation8 + $0x30] sm:$0xff]
        %v2972 = vld [vmem:[#allocation8 + $0x38] sm:$0xff]
        %v2973 = vpack.c.bf16 %v2964, %v2964
        %v2982 = vunpack.c.l.b16 %v2965
        %v2983 = vunpack.c.h.b16 %v2965
        %v2984 = vunpack.c.l.b16 %v2966
        %v2985 = vunpack.c.h.b16 %v2966
        %v2986 = vunpack.c.l.b16 %v2967
        %v2987 = vunpack.c.h.b16 %v2967
        %v2988 = vunpack.c.l.b16 %v2968
        %v2989 = vunpack.c.h.b16 %v2968
        %v2990 = vunpack.c.l.b16 %v2969
        %v2991 = vunpack.c.h.b16 %v2969
        %v2992 = vunpack.c.l.b16 %v2970
        %v2993 = vunpack.c.h.b16 %v2970
        %v2994 = vunpack.c.l.b16 %v2971
        %v2995 = vunpack.c.h.b16 %v2971
        %v2996 = vunpack.c.l.b16 %v2972
        %v2997 = vunpack.c.h.b16 %v2972
        %v2998 = vpack.c.b16 %v2984, %v2982
        %v2999 = vpack.c.b16 %v2985, %v2983
        %v3000 = vpack.c.b16 %v2988, %v2986
        %v3001 = vpack.c.b16 %v2989, %v2987
        %v3002 = vpack.c.b16 %v2992, %v2990
        %v3003 = vpack.c.b16 %v2993, %v2991
        %v3004 = vpack.c.b16 %v2996, %v2994
        %v3005 = vpack.c.b16 %v2997, %v2995
        %v3015 = vsel %vm1743, %v2973, 0
        %3017 = vmatprep.subr.bf16.mxu0 0
        %3018 = vmatpush1.bf16.msra.mxu0 0
        %3019 = vmatprep.subr.bf16.mxu0 0
        %3020 = vmatpush1.bf16.msra.mxu0 0
        %3021 = vmatprep.subr.bf16.mxu0 0
        %3022 = vmatpush1.bf16.msra.mxu0 0
        %3023 = vmatprep.subr.bf16.mxu0 0
        %3024 = vmatpush1.bf16.msra.mxu0 0
        %3025 = vmatprep.subr.bf16.mxu0 %v3005
        %3026 = vmatpush1.bf16.msra.mxu0 %v3004
        %3027 = vmatprep.subr.bf16.mxu0 %v3003
        %3028 = vmatpush1.bf16.msra.mxu0 %v3002
        %3029 = vmatprep.subr.bf16.mxu0 %v3001
        %3030 = vmatpush1.bf16.msra.mxu0 %v3000
        %3031 = vmatprep.subr.bf16.mxu0 %v2999
        %3032 = vmatpush1.bf16.msra.mxu0 %v2998
        %3033 = vmatprep.subr.bf16.mxu0 0
        %3034 = vmatpush2.bf16.msra.mxu0 0
        %3035 = vmatprep.subr.bf16.mxu0 0
        %3036 = vmatpush2.bf16.msra.mxu0 0
        %3037 = vmatprep.subr.bf16.mxu0 0
        %3038 = vmatpush2.bf16.msra.mxu0 0
        %3039 = vmatprep.subr.bf16.mxu0 0
        %3040 = vmatpush2.bf16.msra.mxu0 0
        %3041 = vmatprep.subr.bf16.mxu0 0
        %3042 = vmatpush2.bf16.msra.mxu0 0
        %3043 = vmatprep.subr.bf16.mxu0 0
        %3044 = vmatpush2.bf16.msra.mxu0 0
        %3045 = vmatprep.subr.bf16.mxu0 0
        %3046 = vmatpush2.bf16.msra.mxu0 0
        %3047 = vmatprep.subr.bf16.mxu0 0
        %3048 = vmatpush2.bf16.msra.mxu0 0
        %3049 = vmatprep.mubr.bf16.mxu0 0
        %3050 = vmatmul.mubr.bf16.gmra.mxu0 %v3015
        %v3051 = vpop.f32.mrf.mxu0
        %v3052 = vadd.f32 0.0, %v3051
        %v3053 = vpop.f32.mrf.mxu0
        %v3054 = vadd.f32 0.0, %v3053
        %v3055 = vpop.f32.mrf.mxu0
        %v3056 = vpop.f32.mrf.mxu0
        %3057 = vdwg.mxu0
        %s3058 = scalar_lea.vmem [#allocation8], 64
        %v3059 = vld [vmem:[%s3058] sm:$0xff]
        %v3060 = vld [vmem:[%s3058 + $0x8] sm:$0xff]
        %v3061 = vld [vmem:[%s3058 + $0x10] sm:$0xff]
        %v3062 = vld [vmem:[%s3058 + $0x18] sm:$0xff]
        %v3063 = vld [vmem:[%s3058 + $0x20] sm:$0xff]
        %v3064 = vld [vmem:[%s3058 + $0x28] sm:$0xff]
        %v3065 = vld [vmem:[%s3058 + $0x30] sm:$0xff]
        %v3066 = vld [vmem:[%s3058 + $0x38] sm:$0xff]
        %v3075 = vunpack.c.l.b16 %v3059
        %v3076 = vunpack.c.h.b16 %v3059
        %v3077 = vunpack.c.l.b16 %v3060
        %v3078 = vunpack.c.h.b16 %v3060
        %v3079 = vunpack.c.l.b16 %v3061
        %v3080 = vunpack.c.h.b16 %v3061
        %v3081 = vunpack.c.l.b16 %v3062
        %v3082 = vunpack.c.h.b16 %v3062
        %v3083 = vunpack.c.l.b16 %v3063
        %v3084 = vunpack.c.h.b16 %v3063
        %v3085 = vunpack.c.l.b16 %v3064
        %v3086 = vunpack.c.h.b16 %v3064
        %v3087 = vunpack.c.l.b16 %v3065
        %v3088 = vunpack.c.h.b16 %v3065
        %v3089 = vunpack.c.l.b16 %v3066
        %v3090 = vunpack.c.h.b16 %v3066
        %v3091 = vpack.c.b16 %v3077, %v3075
        %v3092 = vpack.c.b16 %v3078, %v3076
        %v3093 = vpack.c.b16 %v3081, %v3079
        %v3094 = vpack.c.b16 %v3082, %v3080
        %v3095 = vpack.c.b16 %v3085, %v3083
        %v3096 = vpack.c.b16 %v3086, %v3084
        %v3097 = vpack.c.b16 %v3089, %v3087
        %v3098 = vpack.c.b16 %v3090, %v3088
        %3107 = vmatprep.subr.bf16.mxu0 0
        %3108 = vmatpush1.bf16.msra.mxu0 0
        %3109 = vmatprep.subr.bf16.mxu0 0
        %3110 = vmatpush1.bf16.msra.mxu0 0
        %3111 = vmatprep.subr.bf16.mxu0 0
        %3112 = vmatpush1.bf16.msra.mxu0 0
        %3113 = vmatprep.subr.bf16.mxu0 0
        %3114 = vmatpush1.bf16.msra.mxu0 0
        %3115 = vmatprep.subr.bf16.mxu0 %v3098
        %3116 = vmatpush1.bf16.msra.mxu0 %v3097
        %3117 = vmatprep.subr.bf16.mxu0 %v3096
        %3118 = vmatpush1.bf16.msra.mxu0 %v3095
        %3119 = vmatprep.subr.bf16.mxu0 %v3094
        %3120 = vmatpush1.bf16.msra.mxu0 %v3093
        %3121 = vmatprep.subr.bf16.mxu0 %v3092
        %3122 = vmatpush1.bf16.msra.mxu0 %v3091
        %3123 = vmatprep.subr.bf16.mxu0 0
        %3124 = vmatpush2.bf16.msra.mxu0 0
        %3125 = vmatprep.subr.bf16.mxu0 0
        %3126 = vmatpush2.bf16.msra.mxu0 0
        %3127 = vmatprep.subr.bf16.mxu0 0
        %3128 = vmatpush2.bf16.msra.mxu0 0
        %3129 = vmatprep.subr.bf16.mxu0 0
        %3130 = vmatpush2.bf16.msra.mxu0 0
        %3131 = vmatprep.subr.bf16.mxu0 0
        %3132 = vmatpush2.bf16.msra.mxu0 0
        %3133 = vmatprep.subr.bf16.mxu0 0
        %3134 = vmatpush2.bf16.msra.mxu0 0
        %3135 = vmatprep.subr.bf16.mxu0 0
        %3136 = vmatpush2.bf16.msra.mxu0 0
        %3137 = vmatprep.subr.bf16.mxu0 0
        %3138 = vmatpush2.bf16.msra.mxu0 0
        %3139 = vmatprep.mubr.bf16.mxu0 0
        %3140 = vmatmul.mubr.bf16.gmra.mxu0 %v3015
        %v3141 = vpop.f32.mrf.mxu0
        %v3142 = vadd.f32 0.0, %v3141
        %v3143 = vpop.f32.mrf.mxu0
        %v3144 = vadd.f32 0.0, %v3143
        %v3145 = vpop.f32.mrf.mxu0
        %v3146 = vpop.f32.mrf.mxu0
        %3147 = vdwg.mxu0
        %s3148 = scalar_lea.vmem [#allocation8], 128
        %v3149 = vld [vmem:[%s3148] sm:$0xff]
        %v3150 = vld [vmem:[%s3148 + $0x8] sm:$0xff]
        %v3151 = vld [vmem:[%s3148 + $0x10] sm:$0xff]
        %v3152 = vld [vmem:[%s3148 + $0x18] sm:$0xff]
        %v3153 = vld [vmem:[%s3148 + $0x20] sm:$0xff]
        %v3154 = vld [vmem:[%s3148 + $0x28] sm:$0xff]
        %v3155 = vld [vmem:[%s3148 + $0x30] sm:$0xff]
        %v3156 = vld [vmem:[%s3148 + $0x38] sm:$0xff]
        %v3165 = vunpack.c.l.b16 %v3149
        %v3166 = vunpack.c.h.b16 %v3149
        %v3167 = vunpack.c.l.b16 %v3150
        %v3168 = vunpack.c.h.b16 %v3150
        %v3169 = vunpack.c.l.b16 %v3151
        %v3170 = vunpack.c.h.b16 %v3151
        %v3171 = vunpack.c.l.b16 %v3152
        %v3172 = vunpack.c.h.b16 %v3152
        %v3173 = vunpack.c.l.b16 %v3153
        %v3174 = vunpack.c.h.b16 %v3153
        %v3175 = vunpack.c.l.b16 %v3154
        %v3176 = vunpack.c.h.b16 %v3154
        %v3177 = vunpack.c.l.b16 %v3155
        %v3178 = vunpack.c.h.b16 %v3155
        %v3179 = vunpack.c.l.b16 %v3156
        %v3180 = vunpack.c.h.b16 %v3156
        %v3181 = vpack.c.b16 %v3167, %v3165
        %v3182 = vpack.c.b16 %v3168, %v3166
        %v3183 = vpack.c.b16 %v3171, %v3169
        %v3184 = vpack.c.b16 %v3172, %v3170
        %v3185 = vpack.c.b16 %v3175, %v3173
        %v3186 = vpack.c.b16 %v3176, %v3174
        %v3187 = vpack.c.b16 %v3179, %v3177
        %v3188 = vpack.c.b16 %v3180, %v3178
        %3197 = vmatprep.subr.bf16.mxu0 0
        %3198 = vmatpush1.bf16.msra.mxu0 0
        %3199 = vmatprep.subr.bf16.mxu0 0
        %3200 = vmatpush1.bf16.msra.mxu0 0
        %3201 = vmatprep.subr.bf16.mxu0 0
        %3202 = vmatpush1.bf16.msra.mxu0 0
        %3203 = vmatprep.subr.bf16.mxu0 0
        %3204 = vmatpush1.bf16.msra.mxu0 0
        %3205 = vmatprep.subr.bf16.mxu0 %v3188
        %3206 = vmatpush1.bf16.msra.mxu0 %v3187
        %3207 = vmatprep.subr.bf16.mxu0 %v3186
        %3208 = vmatpush1.bf16.msra.mxu0 %v3185
        %3209 = vmatprep.subr.bf16.mxu0 %v3184
        %3210 = vmatpush1.bf16.msra.mxu0 %v3183
        %3211 = vmatprep.subr.bf16.mxu0 %v3182
        %3212 = vmatpush1.bf16.msra.mxu0 %v3181
        %3213 = vmatprep.subr.bf16.mxu0 0
        %3214 = vmatpush2.bf16.msra.mxu0 0
        %3215 = vmatprep.subr.bf16.mxu0 0
        %3216 = vmatpush2.bf16.msra.mxu0 0
        %3217 = vmatprep.subr.bf16.mxu0 0
        %3218 = vmatpush2.bf16.msra.mxu0 0
        %3219 = vmatprep.subr.bf16.mxu0 0
        %3220 = vmatpush2.bf16.msra.mxu0 0
        %3221 = vmatprep.subr.bf16.mxu0 0
        %3222 = vmatpush2.bf16.msra.mxu0 0
        %3223 = vmatprep.subr.bf16.mxu0 0
        %3224 = vmatpush2.bf16.msra.mxu0 0
        %3225 = vmatprep.subr.bf16.mxu0 0
        %3226 = vmatpush2.bf16.msra.mxu0 0
        %3227 = vmatprep.subr.bf16.mxu0 0
        %3228 = vmatpush2.bf16.msra.mxu0 0
        %3229 = vmatprep.mubr.bf16.mxu0 0
        %3230 = vmatmul.mubr.bf16.gmra.mxu0 %v3015
        %v3231 = vpop.f32.mrf.mxu0
        %v3232 = vadd.f32 0.0, %v3231
        %v3233 = vpop.f32.mrf.mxu0
        %v3234 = vadd.f32 0.0, %v3233
        %v3235 = vpop.f32.mrf.mxu0
        %v3236 = vpop.f32.mrf.mxu0
        %3237 = vdwg.mxu0
        %s3238 = scalar_lea.vmem [#allocation8], 192
        %v3239 = vld [vmem:[%s3238] sm:$0xff]
        %v3240 = vld [vmem:[%s3238 + $0x8] sm:$0xff]
        %v3241 = vld [vmem:[%s3238 + $0x10] sm:$0xff]
        %v3242 = vld [vmem:[%s3238 + $0x18] sm:$0xff]
        %v3243 = vld [vmem:[%s3238 + $0x20] sm:$0xff]
        %v3244 = vld [vmem:[%s3238 + $0x28] sm:$0xff]
        %v3245 = vld [vmem:[%s3238 + $0x30] sm:$0xff]
        %v3246 = vld [vmem:[%s3238 + $0x38] sm:$0xff]
        %v3255 = vunpack.c.l.b16 %v3239
        %v3256 = vunpack.c.h.b16 %v3239
        %v3257 = vunpack.c.l.b16 %v3240
        %v3258 = vunpack.c.h.b16 %v3240
        %v3259 = vunpack.c.l.b16 %v3241
        %v3260 = vunpack.c.h.b16 %v3241
        %v3261 = vunpack.c.l.b16 %v3242
        %v3262 = vunpack.c.h.b16 %v3242
        %v3263 = vunpack.c.l.b16 %v3243
        %v3264 = vunpack.c.h.b16 %v3243
        %v3265 = vunpack.c.l.b16 %v3244
        %v3266 = vunpack.c.h.b16 %v3244
        %v3267 = vunpack.c.l.b16 %v3245
        %v3268 = vunpack.c.h.b16 %v3245
        %v3269 = vunpack.c.l.b16 %v3246
        %v3270 = vunpack.c.h.b16 %v3246
        %v3271 = vpack.c.b16 %v3257, %v3255
        %v3272 = vpack.c.b16 %v3258, %v3256
        %v3273 = vpack.c.b16 %v3261, %v3259
        %v3274 = vpack.c.b16 %v3262, %v3260
        %v3275 = vpack.c.b16 %v3265, %v3263
        %v3276 = vpack.c.b16 %v3266, %v3264
        %v3277 = vpack.c.b16 %v3269, %v3267
        %v3278 = vpack.c.b16 %v3270, %v3268
        %3287 = vmatprep.subr.bf16.mxu0 0
        %3288 = vmatpush1.bf16.msra.mxu0 0
        %3289 = vmatprep.subr.bf16.mxu0 0
        %3290 = vmatpush1.bf16.msra.mxu0 0
        %3291 = vmatprep.subr.bf16.mxu0 0
        %3292 = vmatpush1.bf16.msra.mxu0 0
        %3293 = vmatprep.subr.bf16.mxu0 0
        %3294 = vmatpush1.bf16.msra.mxu0 0
        %3295 = vmatprep.subr.bf16.mxu0 %v3278
        %3296 = vmatpush1.bf16.msra.mxu0 %v3277
        %3297 = vmatprep.subr.bf16.mxu0 %v3276
        %3298 = vmatpush1.bf16.msra.mxu0 %v3275
        %3299 = vmatprep.subr.bf16.mxu0 %v3274
        %3300 = vmatpush1.bf16.msra.mxu0 %v3273
        %3301 = vmatprep.subr.bf16.mxu0 %v3272
        %3302 = vmatpush1.bf16.msra.mxu0 %v3271
        %3303 = vmatprep.subr.bf16.mxu0 0
        %3304 = vmatpush2.bf16.msra.mxu0 0
        %3305 = vmatprep.subr.bf16.mxu0 0
        %3306 = vmatpush2.bf16.msra.mxu0 0
        %3307 = vmatprep.subr.bf16.mxu0 0
        %3308 = vmatpush2.bf16.msra.mxu0 0
        %3309 = vmatprep.subr.bf16.mxu0 0
        %3310 = vmatpush2.bf16.msra.mxu0 0
        %3311 = vmatprep.subr.bf16.mxu0 0
        %3312 = vmatpush2.bf16.msra.mxu0 0
        %3313 = vmatprep.subr.bf16.mxu0 0
        %3314 = vmatpush2.bf16.msra.mxu0 0
        %3315 = vmatprep.subr.bf16.mxu0 0
        %3316 = vmatpush2.bf16.msra.mxu0 0
        %3317 = vmatprep.subr.bf16.mxu0 0
        %3318 = vmatpush2.bf16.msra.mxu0 0
        %3319 = vmatprep.mubr.bf16.mxu0 0
        %3320 = vmatmul.mubr.bf16.gmra.mxu0 %v3015
        %v3321 = vpop.f32.mrf.mxu0
        %v3322 = vadd.f32 0.0, %v3321
        %v3323 = vpop.f32.mrf.mxu0
        %v3324 = vadd.f32 0.0, %v3323
        %v3325 = vpop.f32.mrf.mxu0
        %v3326 = vpop.f32.mrf.mxu0
        %3327 = vdwg.mxu0
        %s3328 = scalar_lea.vmem [#allocation8], 256
        %v3329 = vld [vmem:[%s3328] sm:$0xff]
        %v3330 = vld [vmem:[%s3328 + $0x8] sm:$0xff]
        %v3331 = vld [vmem:[%s3328 + $0x10] sm:$0xff]
        %v3332 = vld [vmem:[%s3328 + $0x18] sm:$0xff]
        %v3333 = vld [vmem:[%s3328 + $0x20] sm:$0xff]
        %v3334 = vld [vmem:[%s3328 + $0x28] sm:$0xff]
        %v3335 = vld [vmem:[%s3328 + $0x30] sm:$0xff]
        %v3336 = vld [vmem:[%s3328 + $0x38] sm:$0xff]
        %v3345 = vunpack.c.l.b16 %v3329
        %v3346 = vunpack.c.h.b16 %v3329
        %v3347 = vunpack.c.l.b16 %v3330
        %v3348 = vunpack.c.h.b16 %v3330
        %v3349 = vunpack.c.l.b16 %v3331
        %v3350 = vunpack.c.h.b16 %v3331
        %v3351 = vunpack.c.l.b16 %v3332
        %v3352 = vunpack.c.h.b16 %v3332
        %v3353 = vunpack.c.l.b16 %v3333
        %v3354 = vunpack.c.h.b16 %v3333
        %v3355 = vunpack.c.l.b16 %v3334
        %v3356 = vunpack.c.h.b16 %v3334
        %v3357 = vunpack.c.l.b16 %v3335
        %v3358 = vunpack.c.h.b16 %v3335
        %v3359 = vunpack.c.l.b16 %v3336
        %v3360 = vunpack.c.h.b16 %v3336
        %v3361 = vpack.c.b16 %v3347, %v3345
        %v3362 = vpack.c.b16 %v3348, %v3346
        %v3363 = vpack.c.b16 %v3351, %v3349
        %v3364 = vpack.c.b16 %v3352, %v3350
        %v3365 = vpack.c.b16 %v3355, %v3353
        %v3366 = vpack.c.b16 %v3356, %v3354
        %v3367 = vpack.c.b16 %v3359, %v3357
        %v3368 = vpack.c.b16 %v3360, %v3358
        %3377 = vmatprep.subr.bf16.mxu0 0
        %3378 = vmatpush1.bf16.msra.mxu0 0
        %3379 = vmatprep.subr.bf16.mxu0 0
        %3380 = vmatpush1.bf16.msra.mxu0 0
        %3381 = vmatprep.subr.bf16.mxu0 0
        %3382 = vmatpush1.bf16.msra.mxu0 0
        %3383 = vmatprep.subr.bf16.mxu0 0
        %3384 = vmatpush1.bf16.msra.mxu0 0
        %3385 = vmatprep.subr.bf16.mxu0 %v3368
        %3386 = vmatpush1.bf16.msra.mxu0 %v3367
        %3387 = vmatprep.subr.bf16.mxu0 %v3366
        %3388 = vmatpush1.bf16.msra.mxu0 %v3365
        %3389 = vmatprep.subr.bf16.mxu0 %v3364
        %3390 = vmatpush1.bf16.msra.mxu0 %v3363
        %3391 = vmatprep.subr.bf16.mxu0 %v3362
        %3392 = vmatpush1.bf16.msra.mxu0 %v3361
        %3393 = vmatprep.subr.bf16.mxu0 0
        %3394 = vmatpush2.bf16.msra.mxu0 0
        %3395 = vmatprep.subr.bf16.mxu0 0
        %3396 = vmatpush2.bf16.msra.mxu0 0
        %3397 = vmatprep.subr.bf16.mxu0 0
        %3398 = vmatpush2.bf16.msra.mxu0 0
        %3399 = vmatprep.subr.bf16.mxu0 0
        %3400 = vmatpush2.bf16.msra.mxu0 0
        %3401 = vmatprep.subr.bf16.mxu0 0
        %3402 = vmatpush2.bf16.msra.mxu0 0
        %3403 = vmatprep.subr.bf16.mxu0 0
        %3404 = vmatpush2.bf16.msra.mxu0 0
        %3405 = vmatprep.subr.bf16.mxu0 0
        %3406 = vmatpush2.bf16.msra.mxu0 0
        %3407 = vmatprep.subr.bf16.mxu0 0
        %3408 = vmatpush2.bf16.msra.mxu0 0
        %3409 = vmatprep.mubr.bf16.mxu0 0
        %3410 = vmatmul.mubr.bf16.gmra.mxu0 %v3015
        %v3411 = vpop.f32.mrf.mxu0
        %v3412 = vadd.f32 0.0, %v3411
        %v3413 = vpop.f32.mrf.mxu0
        %v3414 = vadd.f32 0.0, %v3413
        %v3415 = vpop.f32.mrf.mxu0
        %v3416 = vpop.f32.mrf.mxu0
        %3417 = vdwg.mxu0
        %s3418 = scalar_lea.vmem [#allocation8], 320
        %v3419 = vld [vmem:[%s3418] sm:$0xff]
        %v3420 = vld [vmem:[%s3418 + $0x8] sm:$0xff]
        %v3421 = vld [vmem:[%s3418 + $0x10] sm:$0xff]
        %v3422 = vld [vmem:[%s3418 + $0x18] sm:$0xff]
        %v3423 = vld [vmem:[%s3418 + $0x20] sm:$0xff]
        %v3424 = vld [vmem:[%s3418 + $0x28] sm:$0xff]
        %v3425 = vld [vmem:[%s3418 + $0x30] sm:$0xff]
        %v3426 = vld [vmem:[%s3418 + $0x38] sm:$0xff]
        %v3435 = vunpack.c.l.b16 %v3419
        %v3436 = vunpack.c.h.b16 %v3419
        %v3437 = vunpack.c.l.b16 %v3420
        %v3438 = vunpack.c.h.b16 %v3420
        %v3439 = vunpack.c.l.b16 %v3421
        %v3440 = vunpack.c.h.b16 %v3421
        %v3441 = vunpack.c.l.b16 %v3422
        %v3442 = vunpack.c.h.b16 %v3422
        %v3443 = vunpack.c.l.b16 %v3423
        %v3444 = vunpack.c.h.b16 %v3423
        %v3445 = vunpack.c.l.b16 %v3424
        %v3446 = vunpack.c.h.b16 %v3424
        %v3447 = vunpack.c.l.b16 %v3425
        %v3448 = vunpack.c.h.b16 %v3425
        %v3449 = vunpack.c.l.b16 %v3426
        %v3450 = vunpack.c.h.b16 %v3426
        %v3451 = vpack.c.b16 %v3437, %v3435
        %v3452 = vpack.c.b16 %v3438, %v3436
        %v3453 = vpack.c.b16 %v3441, %v3439
        %v3454 = vpack.c.b16 %v3442, %v3440
        %v3455 = vpack.c.b16 %v3445, %v3443
        %v3456 = vpack.c.b16 %v3446, %v3444
        %v3457 = vpack.c.b16 %v3449, %v3447
        %v3458 = vpack.c.b16 %v3450, %v3448
        %3467 = vmatprep.subr.bf16.mxu0 0
        %3468 = vmatpush1.bf16.msra.mxu0 0
        %3469 = vmatprep.subr.bf16.mxu0 0
        %3470 = vmatpush1.bf16.msra.mxu0 0
        %3471 = vmatprep.subr.bf16.mxu0 0
        %3472 = vmatpush1.bf16.msra.mxu0 0
        %3473 = vmatprep.subr.bf16.mxu0 0
        %3474 = vmatpush1.bf16.msra.mxu0 0
        %3475 = vmatprep.subr.bf16.mxu0 %v3458
        %3476 = vmatpush1.bf16.msra.mxu0 %v3457
        %3477 = vmatprep.subr.bf16.mxu0 %v3456
        %3478 = vmatpush1.bf16.msra.mxu0 %v3455
        %3479 = vmatprep.subr.bf16.mxu0 %v3454
        %3480 = vmatpush1.bf16.msra.mxu0 %v3453
        %3481 = vmatprep.subr.bf16.mxu0 %v3452
        %3482 = vmatpush1.bf16.msra.mxu0 %v3451
        %3483 = vmatprep.subr.bf16.mxu0 0
        %3484 = vmatpush2.bf16.msra.mxu0 0
        %3485 = vmatprep.subr.bf16.mxu0 0
        %3486 = vmatpush2.bf16.msra.mxu0 0
        %3487 = vmatprep.subr.bf16.mxu0 0
        %3488 = vmatpush2.bf16.msra.mxu0 0
        %3489 = vmatprep.subr.bf16.mxu0 0
        %3490 = vmatpush2.bf16.msra.mxu0 0
        %3491 = vmatprep.subr.bf16.mxu0 0
        %3492 = vmatpush2.bf16.msra.mxu0 0
        %3493 = vmatprep.subr.bf16.mxu0 0
        %3494 = vmatpush2.bf16.msra.mxu0 0
        %3495 = vmatprep.subr.bf16.mxu0 0
        %3496 = vmatpush2.bf16.msra.mxu0 0
        %3497 = vmatprep.subr.bf16.mxu0 0
        %3498 = vmatpush2.bf16.msra.mxu0 0
        %3499 = vmatprep.mubr.bf16.mxu0 0
        %3500 = vmatmul.mubr.bf16.gmra.mxu0 %v3015
        %v3501 = vpop.f32.mrf.mxu0
        %v3502 = vadd.f32 0.0, %v3501
        %v3503 = vpop.f32.mrf.mxu0
        %v3504 = vadd.f32 0.0, %v3503
        %v3505 = vpop.f32.mrf.mxu0
        %v3506 = vpop.f32.mrf.mxu0
        %3507 = vdwg.mxu0
        %s3508 = scalar_lea.vmem [#allocation8], 384
        %v3509 = vld [vmem:[%s3508] sm:$0xff]
        %v3510 = vld [vmem:[%s3508 + $0x8] sm:$0xff]
        %v3511 = vld [vmem:[%s3508 + $0x10] sm:$0xff]
        %v3512 = vld [vmem:[%s3508 + $0x18] sm:$0xff]
        %v3513 = vld [vmem:[%s3508 + $0x20] sm:$0xff]
        %v3514 = vld [vmem:[%s3508 + $0x28] sm:$0xff]
        %v3515 = vld [vmem:[%s3508 + $0x30] sm:$0xff]
        %v3516 = vld [vmem:[%s3508 + $0x38] sm:$0xff]
        %v3525 = vunpack.c.l.b16 %v3509
        %v3526 = vunpack.c.h.b16 %v3509
        %v3527 = vunpack.c.l.b16 %v3510
        %v3528 = vunpack.c.h.b16 %v3510
        %v3529 = vunpack.c.l.b16 %v3511
        %v3530 = vunpack.c.h.b16 %v3511
        %v3531 = vunpack.c.l.b16 %v3512
        %v3532 = vunpack.c.h.b16 %v3512
        %v3533 = vunpack.c.l.b16 %v3513
        %v3534 = vunpack.c.h.b16 %v3513
        %v3535 = vunpack.c.l.b16 %v3514
        %v3536 = vunpack.c.h.b16 %v3514
        %v3537 = vunpack.c.l.b16 %v3515
        %v3538 = vunpack.c.h.b16 %v3515
        %v3539 = vunpack.c.l.b16 %v3516
        %v3540 = vunpack.c.h.b16 %v3516
        %v3541 = vpack.c.b16 %v3527, %v3525
        %v3542 = vpack.c.b16 %v3528, %v3526
        %v3543 = vpack.c.b16 %v3531, %v3529
        %v3544 = vpack.c.b16 %v3532, %v3530
        %v3545 = vpack.c.b16 %v3535, %v3533
        %v3546 = vpack.c.b16 %v3536, %v3534
        %v3547 = vpack.c.b16 %v3539, %v3537
        %v3548 = vpack.c.b16 %v3540, %v3538
        %3557 = vmatprep.subr.bf16.mxu0 0
        %3558 = vmatpush1.bf16.msra.mxu0 0
        %3559 = vmatprep.subr.bf16.mxu0 0
        %3560 = vmatpush1.bf16.msra.mxu0 0
        %3561 = vmatprep.subr.bf16.mxu0 0
        %3562 = vmatpush1.bf16.msra.mxu0 0
        %3563 = vmatprep.subr.bf16.mxu0 0
        %3564 = vmatpush1.bf16.msra.mxu0 0
        %3565 = vmatprep.subr.bf16.mxu0 %v3548
        %3566 = vmatpush1.bf16.msra.mxu0 %v3547
        %3567 = vmatprep.subr.bf16.mxu0 %v3546
        %3568 = vmatpush1.bf16.msra.mxu0 %v3545
        %3569 = vmatprep.subr.bf16.mxu0 %v3544
        %3570 = vmatpush1.bf16.msra.mxu0 %v3543
        %3571 = vmatprep.subr.bf16.mxu0 %v3542
        %3572 = vmatpush1.bf16.msra.mxu0 %v3541
        %3573 = vmatprep.subr.bf16.mxu0 0
        %3574 = vmatpush2.bf16.msra.mxu0 0
        %3575 = vmatprep.subr.bf16.mxu0 0
        %3576 = vmatpush2.bf16.msra.mxu0 0
        %3577 = vmatprep.subr.bf16.mxu0 0
        %3578 = vmatpush2.bf16.msra.mxu0 0
        %3579 = vmatprep.subr.bf16.mxu0 0
        %3580 = vmatpush2.bf16.msra.mxu0 0
        %3581 = vmatprep.subr.bf16.mxu0 0
        %3582 = vmatpush2.bf16.msra.mxu0 0
        %3583 = vmatprep.subr.bf16.mxu0 0
        %3584 = vmatpush2.bf16.msra.mxu0 0
        %3585 = vmatprep.subr.bf16.mxu0 0
        %3586 = vmatpush2.bf16.msra.mxu0 0
        %3587 = vmatprep.subr.bf16.mxu0 0
        %3588 = vmatpush2.bf16.msra.mxu0 0
        %3589 = vmatprep.mubr.bf16.mxu0 0
        %3590 = vmatmul.mubr.bf16.gmra.mxu0 %v3015
        %v3591 = vpop.f32.mrf.mxu0
        %v3592 = vadd.f32 0.0, %v3591
        %v3593 = vpop.f32.mrf.mxu0
        %v3594 = vadd.f32 0.0, %v3593
        %v3595 = vpop.f32.mrf.mxu0
        %v3596 = vpop.f32.mrf.mxu0
        %3597 = vdwg.mxu0
        %v3600 = vrot.slane %v3142, 7
        %v3601 = vrot.slane %v3144, 7
        %v3606 = vrot.slane %v3232, 6
        %v3607 = vrot.slane %v3234, 6
        %v3612 = vrot.slane %v3322, 5
        %v3613 = vrot.slane %v3324, 5
        %v3618 = vrot.slane %v3412, 4
        %v3619 = vrot.slane %v3414, 4
        %v3624 = vrot.slane %v3502, 3
        %v3625 = vrot.slane %v3504, 3
        %v3630 = vrot.slane %v3592, 2
        %v3631 = vrot.slane %v3594, 2
        %v3634 = vsel %vm674, %v3052, %v3600
        %v3635 = vsel %vm674, %v3054, %v3601
        %vm3636 = vcmask 1041408
        %v3637 = vsel %vm3636, %v3634, %v3606
        %v3638 = vsel %vm3636, %v3635, %v3607
        %vm3639 = vcmask 1042432
        %v3640 = vsel %vm3639, %v3637, %v3612
        %v3641 = vsel %vm3639, %v3638, %v3613
        %vm3642 = vcmask 1043456
        %v3643 = vsel %vm3642, %v3640, %v3618
        %v3644 = vsel %vm3642, %v3641, %v3619
        %vm3645 = vcmask 1044480
        %v3646 = vsel %vm3645, %v3643, %v3624
        %v3647 = vsel %vm3645, %v3644, %v3625
        %v3648 = vsel %vm715, %v3646, %v3630
        %v3649 = vsel %vm715, %v3647, %v3631
        %v3650 = vld [vmem:[%s11] sm:$0x3]
        %v3652 = vlaneseq
        %v3653 = vshrl.u32 %v3652, 7
        %v3654 = vsub.s32 0, %v3653
        %v3655 = vrot.slane %v3650, %v3654
        %v3656 = vlaneseq
        %v3657 = vshrl.u32 %v3656, 7
        %v3658 = vsub.s32 1, %v3657
        %v3659 = vrot.slane %v3650, %v3658
        %v3662 = vadd.f32 %v3648, %v3655
        %v3663 = vadd.f32 %v3649, %v3659
        %v3664 = vmax.f32 %v3662, 0.0
        %v3665 = vmax.f32 %v3663, 0.0
        %v3668 = vrot.slane %v3664, 1
        %v3669 = vrot.slane %v3665, 1
        %v3672 = vsel %vm715, %v3668, 0.0
        %v3673 = vsel %vm715, %v3669, 0.0
        %v3674 = vld [vmem:[%s12] sm:$0xff]
        %v3675 = vld [vmem:[%s12 + $0x8] sm:$0xff]
        %v3676 = vld [vmem:[%s12 + $0x10] sm:$0xff]
        %v3677 = vld [vmem:[%s12 + $0x18] sm:$0xff]
        %v3678 = vld [vmem:[%s12 + $0x20] sm:$0xff]
        %v3679 = vld [vmem:[%s12 + $0x28] sm:$0xff]
        %v3680 = vld [vmem:[%s12 + $0x30] sm:$0xff]
        %v3681 = vld [vmem:[%s12 + $0x38] sm:$0xff]
        %v3682 = vld [vmem:[%s12 + $0x40] sm:$0xff]
        %v3683 = vld [vmem:[%s12 + $0x48] sm:$0xff]
        %v3684 = vld [vmem:[%s12 + $0x50] sm:$0xff]
        %v3685 = vld [vmem:[%s12 + $0x58] sm:$0xff]
        %v3686 = vld [vmem:[%s12 + $0x60] sm:$0xff]
        %v3687 = vld [vmem:[%s12 + $0x68] sm:$0xff]
        %v3688 = vld [vmem:[%s12 + $0x70] sm:$0xff]
        %v3689 = vld [vmem:[%s12 + $0x78] sm:$0xff]
        %v3690 = vld [vmem:[%s12 + $0x80] sm:$0xff]
        %v3691 = vld [vmem:[%s12 + $0x88] sm:$0xff]
        %v3692 = vld [vmem:[%s12 + $0x90] sm:$0xff]
        %v3693 = vld [vmem:[%s12 + $0x98] sm:$0xff]
        %v3694 = vld [vmem:[%s12 + $0xa0] sm:$0xff]
        %v3695 = vld [vmem:[%s12 + $0xa8] sm:$0xff]
        %v3696 = vld [vmem:[%s12 + $0xb0] sm:$0xff]
        %v3697 = vld [vmem:[%s12 + $0xb8] sm:$0xff]
        %v3698 = vld [vmem:[%s12 + $0xc0] sm:$0xff]
        %v3699 = vld [vmem:[%s12 + $0xc8] sm:$0xff]
        %v3700 = vld [vmem:[%s12 + $0xd0] sm:$0xff]
        %v3701 = vld [vmem:[%s12 + $0xd8] sm:$0xff]
        %s3702 = scalar_lea.vmem %s12, 224
        %v3703 = vld [vmem:[%s3702] sm:$0xff]
        %v3704 = vld [vmem:[%s3702 + $0x8] sm:$0xff]
        %v3705 = vld [vmem:[%s3702 + $0x10] sm:$0xff]
        %v3706 = vld [vmem:[%s3702 + $0x18] sm:$0xff]
        %v3707 = vld [vmem:[%s3702 + $0x20] sm:$0xff]
        %v3708 = vld [vmem:[%s3702 + $0x28] sm:$0xff]
        %v3709 = vld [vmem:[%s3702 + $0x30] sm:$0xff]
        %v3710 = vld [vmem:[%s3702 + $0x38] sm:$0xff]
        %v3711 = vld [vmem:[%s3702 + $0x40] sm:$0xff]
        %v3712 = vld [vmem:[%s3702 + $0x48] sm:$0xff]
        %v3713 = vld [vmem:[%s3702 + $0x50] sm:$0xff]
        %v3714 = vld [vmem:[%s3702 + $0x58] sm:$0xff]
        %v3715 = vld [vmem:[%s3702 + $0x60] sm:$0xff]
        %v3716 = vld [vmem:[%s3702 + $0x68] sm:$0xff]
        %v3717 = vld [vmem:[%s3702 + $0x70] sm:$0xff]
        %v3718 = vld [vmem:[%s3702 + $0x78] sm:$0xff]
        %v3719 = vld [vmem:[%s3702 + $0x80] sm:$0xff]
        %v3720 = vld [vmem:[%s3702 + $0x88] sm:$0xff]
        %v3721 = vld [vmem:[%s3702 + $0x90] sm:$0xff]
        %v3722 = vld [vmem:[%s3702 + $0x98] sm:$0xff]
        %v3723 = vld [vmem:[%s3702 + $0xa0] sm:$0xff]
        %v3724 = vld [vmem:[%s3702 + $0xa8] sm:$0xff]
        %v3725 = vld [vmem:[%s3702 + $0xb0] sm:$0xff]
        %v3726 = vld [vmem:[%s3702 + $0xb8] sm:$0xff]
        %v3727 = vld [vmem:[%s3702 + $0xc0] sm:$0xff]
        %v3728 = vld [vmem:[%s3702 + $0xc8] sm:$0xff]
        %v3729 = vld [vmem:[%s3702 + $0xd0] sm:$0xff]
        %v3730 = vld [vmem:[%s3702 + $0xd8] sm:$0xff]
        %s3731 = scalar_lea.vmem %s12, 448
        %v3732 = vld [vmem:[%s3731] sm:$0xff]
        %v3733 = vld [vmem:[%s3731 + $0x8] sm:$0xff]
        %v3734 = vld [vmem:[%s3731 + $0x10] sm:$0xff]
        %v3735 = vld [vmem:[%s3731 + $0x18] sm:$0xff]
        %v3736 = vld [vmem:[%s3731 + $0x20] sm:$0xff]
        %v3737 = vld [vmem:[%s3731 + $0x28] sm:$0xff]
        %v3738 = vld [vmem:[%s3731 + $0x30] sm:$0xff]
        %v3739 = vld [vmem:[%s3731 + $0x38] sm:$0xff]
        %v3740 = vld [vmem:[%s3731 + $0x40] sm:$0xff]
        %v3741 = vld [vmem:[%s3731 + $0x48] sm:$0xff]
        %v3742 = vld [vmem:[%s3731 + $0x50] sm:$0xff]
        %v3743 = vld [vmem:[%s3731 + $0x58] sm:$0xff]
        %v3744 = vld [vmem:[%s3731 + $0x60] sm:$0xff]
        %v3745 = vld [vmem:[%s3731 + $0x68] sm:$0xff]
        %v3746 = vld [vmem:[%s3731 + $0x70] sm:$0xff]
        %v3747 = vld [vmem:[%s3731 + $0x78] sm:$0xff]
        %v3748 = vld [vmem:[%s3731 + $0x80] sm:$0xff]
        %v3749 = vld [vmem:[%s3731 + $0x88] sm:$0xff]
        %v3750 = vld [vmem:[%s3731 + $0x90] sm:$0xff]
        %v3751 = vld [vmem:[%s3731 + $0x98] sm:$0xff]
        %v3752 = vld [vmem:[%s3731 + $0xa0] sm:$0xff]
        %v3753 = vld [vmem:[%s3731 + $0xa8] sm:$0xff]
        %v3754 = vld [vmem:[%s3731 + $0xb0] sm:$0xff]
        %v3755 = vld [vmem:[%s3731 + $0xb8] sm:$0xff]
        %v3756 = vld [vmem:[%s3731 + $0xc0] sm:$0xff]
        %v3757 = vld [vmem:[%s3731 + $0xc8] sm:$0xff]
        %v3758 = vld [vmem:[%s3731 + $0xd0] sm:$0xff]
        %v3759 = vld [vmem:[%s3731 + $0xd8] sm:$0xff]
        %v3760 = vld [vmem:[%s13] sm:$0x3]
        %v3761 = vpack.c.bf16 %v3664, %v3664
        %v3762 = vpack.c.bf16 %v3665, %v3665
        %v3764 = vlaneseq
        %v3765 = vshrl.u32 %v3764, 7
        %v3766 = vsub.s32 0, %v3765
        %v3767 = vrot.slane %v3760, %v3766
        %v3768 = vlaneseq
        %v3769 = vshrl.u32 %v3768, 7
        %v3770 = vsub.s32 1, %v3769
        %v3771 = vrot.slane %v3760, %v3770
        %v3802 = vunpack.c.l.b16 %v3703
        %v3803 = vunpack.c.h.b16 %v3703
        %v3804 = vunpack.c.l.b16 %v3704
        %v3805 = vunpack.c.h.b16 %v3704
        %v3806 = vunpack.c.l.b16 %v3705
        %v3807 = vunpack.c.h.b16 %v3705
        %v3808 = vunpack.c.l.b16 %v3706
        %v3809 = vunpack.c.h.b16 %v3706
        %v3810 = vunpack.c.l.b16 %v3707
        %v3811 = vunpack.c.h.b16 %v3707
        %v3812 = vunpack.c.l.b16 %v3708
        %v3813 = vunpack.c.h.b16 %v3708
        %v3814 = vunpack.c.l.b16 %v3709
        %v3815 = vunpack.c.h.b16 %v3709
        %v3816 = vunpack.c.l.b16 %v3710
        %v3817 = vunpack.c.h.b16 %v3710
        %v3818 = vunpack.c.l.b16 %v3711
        %v3819 = vunpack.c.h.b16 %v3711
        %v3820 = vunpack.c.l.b16 %v3712
        %v3821 = vunpack.c.h.b16 %v3712
        %v3822 = vunpack.c.l.b16 %v3713
        %v3823 = vunpack.c.h.b16 %v3713
        %v3824 = vunpack.c.l.b16 %v3714
        %v3825 = vunpack.c.h.b16 %v3714
        %v3826 = vunpack.c.l.b16 %v3715
        %v3827 = vunpack.c.h.b16 %v3715
        %v3828 = vunpack.c.l.b16 %v3716
        %v3829 = vunpack.c.h.b16 %v3716
        %v3830 = vunpack.c.l.b16 %v3717
        %v3831 = vunpack.c.h.b16 %v3717
        %v3832 = vunpack.c.l.b16 %v3718
        %v3833 = vunpack.c.h.b16 %v3718
        %v3834 = vunpack.c.l.b16 %v3719
        %v3835 = vunpack.c.h.b16 %v3719
        %v3836 = vunpack.c.l.b16 %v3720
        %v3837 = vunpack.c.h.b16 %v3720
        %v3838 = vunpack.c.l.b16 %v3721
        %v3839 = vunpack.c.h.b16 %v3721
        %v3840 = vunpack.c.l.b16 %v3722
        %v3841 = vunpack.c.h.b16 %v3722
        %v3842 = vunpack.c.l.b16 %v3723
        %v3843 = vunpack.c.h.b16 %v3723
        %v3844 = vunpack.c.l.b16 %v3724
        %v3845 = vunpack.c.h.b16 %v3724
        %v3846 = vunpack.c.l.b16 %v3725
        %v3847 = vunpack.c.h.b16 %v3725
        %v3848 = vunpack.c.l.b16 %v3726
        %v3849 = vunpack.c.h.b16 %v3726
        %v3850 = vunpack.c.l.b16 %v3727
        %v3851 = vunpack.c.h.b16 %v3727
        %v3852 = vunpack.c.l.b16 %v3728
        %v3853 = vunpack.c.h.b16 %v3728
        %v3854 = vunpack.c.l.b16 %v3729
        %v3855 = vunpack.c.h.b16 %v3729
        %v3856 = vunpack.c.l.b16 %v3730
        %v3857 = vunpack.c.h.b16 %v3730
        %v3858 = vpack.c.b16 %v3804, %v3802
        %v3859 = vpack.c.b16 %v3805, %v3803
        %v3860 = vpack.c.b16 %v3808, %v3806
        %v3861 = vpack.c.b16 %v3809, %v3807
        %v3862 = vpack.c.b16 %v3812, %v3810
        %v3863 = vpack.c.b16 %v3813, %v3811
        %v3864 = vpack.c.b16 %v3816, %v3814
        %v3865 = vpack.c.b16 %v3817, %v3815
        %v3866 = vpack.c.b16 %v3820, %v3818
        %v3867 = vpack.c.b16 %v3821, %v3819
        %v3868 = vpack.c.b16 %v3824, %v3822
        %v3869 = vpack.c.b16 %v3825, %v3823
        %v3870 = vpack.c.b16 %v3828, %v3826
        %v3871 = vpack.c.b16 %v3829, %v3827
        %v3872 = vpack.c.b16 %v3832, %v3830
        %v3873 = vpack.c.b16 %v3833, %v3831
        %v3874 = vpack.c.b16 %v3836, %v3834
        %v3875 = vpack.c.b16 %v3837, %v3835
        %v3876 = vpack.c.b16 %v3840, %v3838
        %v3877 = vpack.c.b16 %v3841, %v3839
        %v3878 = vpack.c.b16 %v3844, %v3842
        %v3879 = vpack.c.b16 %v3845, %v3843
        %v3880 = vpack.c.b16 %v3848, %v3846
        %v3881 = vpack.c.b16 %v3849, %v3847
        %v3882 = vpack.c.b16 %v3852, %v3850
        %v3883 = vpack.c.b16 %v3853, %v3851
        %v3884 = vpack.c.b16 %v3856, %v3854
        %v3885 = vpack.c.b16 %v3857, %v3855
        %v3915 = vsel %vm1292, %v3762, 0
        %3917 = vmatprep.subr.bf16.mxu0 %v3873
        %3918 = vmatpush1.bf16.msra.mxu0 %v3872
        %3919 = vmatprep.subr.bf16.mxu0 %v3871
        %3920 = vmatpush1.bf16.msra.mxu0 %v3870
        %3921 = vmatprep.subr.bf16.mxu0 %v3869
        %3922 = vmatpush1.bf16.msra.mxu0 %v3868
        %3923 = vmatprep.subr.bf16.mxu0 %v3867
        %3924 = vmatpush1.bf16.msra.mxu0 %v3866
        %3925 = vmatprep.subr.bf16.mxu0 %v3865
        %3926 = vmatpush1.bf16.msra.mxu0 %v3864
        %3927 = vmatprep.subr.bf16.mxu0 %v3863
        %3928 = vmatpush1.bf16.msra.mxu0 %v3862
        %3929 = vmatprep.subr.bf16.mxu0 %v3861
        %3930 = vmatpush1.bf16.msra.mxu0 %v3860
        %3931 = vmatprep.subr.bf16.mxu0 %v3859
        %3932 = vmatpush1.bf16.msra.mxu0 %v3858
        %3933 = vmatprep.subr.bf16.mxu0 0
        %3934 = vmatpush2.bf16.msra.mxu0 0
        %3935 = vmatprep.subr.bf16.mxu0 0
        %3936 = vmatpush2.bf16.msra.mxu0 0
        %3937 = vmatprep.subr.bf16.mxu0 %v3885
        %3938 = vmatpush2.bf16.msra.mxu0 %v3884
        %3939 = vmatprep.subr.bf16.mxu0 %v3883
        %3940 = vmatpush2.bf16.msra.mxu0 %v3882
        %3941 = vmatprep.subr.bf16.mxu0 %v3881
        %3942 = vmatpush2.bf16.msra.mxu0 %v3880
        %3943 = vmatprep.subr.bf16.mxu0 %v3879
        %3944 = vmatpush2.bf16.msra.mxu0 %v3878
        %3945 = vmatprep.subr.bf16.mxu0 %v3877
        %3946 = vmatpush2.bf16.msra.mxu0 %v3876
        %3947 = vmatprep.subr.bf16.mxu0 %v3875
        %3948 = vmatpush2.bf16.msra.mxu0 %v3874
        %3949 = vmatprep.mubr.bf16.mxu0 %v3915
        %3950 = vmatmul.mubr.bf16.gmra.mxu0 %v3761
        %v3951 = vpop.f32.mrf.mxu0
        %v3952 = vadd.f32 %v3767, %v3951
        %v3953 = vpop.f32.mrf.mxu0
        %v3954 = vadd.f32 %v3771, %v3953
        %v3955 = vpop.f32.mrf.mxu0
        %v3956 = vpop.f32.mrf.mxu0
        %3957 = vdwg.mxu0
        %v3958 = vmax.f32 %v3952, 0.0
        %v3959 = vmax.f32 %v3954, 0.0
        %v3960 = vpack.c.bf16 %v3672, %v3672
        %v3961 = vpack.c.bf16 %v3673, %v3673
        %v3990 = vunpack.c.l.b16 %v3674
        %v3991 = vunpack.c.h.b16 %v3674
        %v3992 = vunpack.c.l.b16 %v3675
        %v3993 = vunpack.c.h.b16 %v3675
        %v3994 = vunpack.c.l.b16 %v3676
        %v3995 = vunpack.c.h.b16 %v3676
        %v3996 = vunpack.c.l.b16 %v3677
        %v3997 = vunpack.c.h.b16 %v3677
        %v3998 = vunpack.c.l.b16 %v3678
        %v3999 = vunpack.c.h.b16 %v3678
        %v4000 = vunpack.c.l.b16 %v3679
        %v4001 = vunpack.c.h.b16 %v3679
        %v4002 = vunpack.c.l.b16 %v3680
        %v4003 = vunpack.c.h.b16 %v3680
        %v4004 = vunpack.c.l.b16 %v3681
        %v4005 = vunpack.c.h.b16 %v3681
        %v4006 = vunpack.c.l.b16 %v3682
        %v4007 = vunpack.c.h.b16 %v3682
        %v4008 = vunpack.c.l.b16 %v3683
        %v4009 = vunpack.c.h.b16 %v3683
        %v4010 = vunpack.c.l.b16 %v3684
        %v4011 = vunpack.c.h.b16 %v3684
        %v4012 = vunpack.c.l.b16 %v3685
        %v4013 = vunpack.c.h.b16 %v3685
        %v4014 = vunpack.c.l.b16 %v3686
        %v4015 = vunpack.c.h.b16 %v3686
        %v4016 = vunpack.c.l.b16 %v3687
        %v4017 = vunpack.c.h.b16 %v3687
        %v4018 = vunpack.c.l.b16 %v3688
        %v4019 = vunpack.c.h.b16 %v3688
        %v4020 = vunpack.c.l.b16 %v3689
        %v4021 = vunpack.c.h.b16 %v3689
        %v4022 = vunpack.c.l.b16 %v3690
        %v4023 = vunpack.c.h.b16 %v3690
        %v4024 = vunpack.c.l.b16 %v3691
        %v4025 = vunpack.c.h.b16 %v3691
        %v4026 = vunpack.c.l.b16 %v3692
        %v4027 = vunpack.c.h.b16 %v3692
        %v4028 = vunpack.c.l.b16 %v3693
        %v4029 = vunpack.c.h.b16 %v3693
        %v4030 = vunpack.c.l.b16 %v3694
        %v4031 = vunpack.c.h.b16 %v3694
        %v4032 = vunpack.c.l.b16 %v3695
        %v4033 = vunpack.c.h.b16 %v3695
        %v4034 = vunpack.c.l.b16 %v3696
        %v4035 = vunpack.c.h.b16 %v3696
        %v4036 = vunpack.c.l.b16 %v3697
        %v4037 = vunpack.c.h.b16 %v3697
        %v4038 = vunpack.c.l.b16 %v3698
        %v4039 = vunpack.c.h.b16 %v3698
        %v4040 = vunpack.c.l.b16 %v3699
        %v4041 = vunpack.c.h.b16 %v3699
        %v4042 = vunpack.c.l.b16 %v3700
        %v4043 = vunpack.c.h.b16 %v3700
        %v4044 = vunpack.c.l.b16 %v3701
        %v4045 = vunpack.c.h.b16 %v3701
        %v4046 = vpack.c.b16 %v3992, %v3990
        %v4047 = vpack.c.b16 %v3993, %v3991
        %v4048 = vpack.c.b16 %v3996, %v3994
        %v4049 = vpack.c.b16 %v3997, %v3995
        %v4050 = vpack.c.b16 %v4000, %v3998
        %v4051 = vpack.c.b16 %v4001, %v3999
        %v4052 = vpack.c.b16 %v4004, %v4002
        %v4053 = vpack.c.b16 %v4005, %v4003
        %v4054 = vpack.c.b16 %v4008, %v4006
        %v4055 = vpack.c.b16 %v4009, %v4007
        %v4056 = vpack.c.b16 %v4012, %v4010
        %v4057 = vpack.c.b16 %v4013, %v4011
        %v4058 = vpack.c.b16 %v4016, %v4014
        %v4059 = vpack.c.b16 %v4017, %v4015
        %v4060 = vpack.c.b16 %v4020, %v4018
        %v4061 = vpack.c.b16 %v4021, %v4019
        %v4062 = vpack.c.b16 %v4024, %v4022
        %v4063 = vpack.c.b16 %v4025, %v4023
        %v4064 = vpack.c.b16 %v4028, %v4026
        %v4065 = vpack.c.b16 %v4029, %v4027
        %v4066 = vpack.c.b16 %v4032, %v4030
        %v4067 = vpack.c.b16 %v4033, %v4031
        %v4068 = vpack.c.b16 %v4036, %v4034
        %v4069 = vpack.c.b16 %v4037, %v4035
        %v4070 = vpack.c.b16 %v4040, %v4038
        %v4071 = vpack.c.b16 %v4041, %v4039
        %v4072 = vpack.c.b16 %v4044, %v4042
        %v4073 = vpack.c.b16 %v4045, %v4043
        %v4103 = vsel %vm1292, %v3961, 0
        %4105 = vmatprep.subr.bf16.mxu0 %v4061
        %4106 = vmatpush1.bf16.msra.mxu0 %v4060
        %4107 = vmatprep.subr.bf16.mxu0 %v4059
        %4108 = vmatpush1.bf16.msra.mxu0 %v4058
        %4109 = vmatprep.subr.bf16.mxu0 %v4057
        %4110 = vmatpush1.bf16.msra.mxu0 %v4056
        %4111 = vmatprep.subr.bf16.mxu0 %v4055
        %4112 = vmatpush1.bf16.msra.mxu0 %v4054
        %4113 = vmatprep.subr.bf16.mxu0 %v4053
        %4114 = vmatpush1.bf16.msra.mxu0 %v4052
        %4115 = vmatprep.subr.bf16.mxu0 %v4051
        %4116 = vmatpush1.bf16.msra.mxu0 %v4050
        %4117 = vmatprep.subr.bf16.mxu0 %v4049
        %4118 = vmatpush1.bf16.msra.mxu0 %v4048
        %4119 = vmatprep.subr.bf16.mxu0 %v4047
        %4120 = vmatpush1.bf16.msra.mxu0 %v4046
        %4121 = vmatprep.subr.bf16.mxu0 0
        %4122 = vmatpush2.bf16.msra.mxu0 0
        %4123 = vmatprep.subr.bf16.mxu0 0
        %4124 = vmatpush2.bf16.msra.mxu0 0
        %4125 = vmatprep.subr.bf16.mxu0 %v4073
        %4126 = vmatpush2.bf16.msra.mxu0 %v4072
        %4127 = vmatprep.subr.bf16.mxu0 %v4071
        %4128 = vmatpush2.bf16.msra.mxu0 %v4070
        %4129 = vmatprep.subr.bf16.mxu0 %v4069
        %4130 = vmatpush2.bf16.msra.mxu0 %v4068
        %4131 = vmatprep.subr.bf16.mxu0 %v4067
        %4132 = vmatpush2.bf16.msra.mxu0 %v4066
        %4133 = vmatprep.subr.bf16.mxu0 %v4065
        %4134 = vmatpush2.bf16.msra.mxu0 %v4064
        %4135 = vmatprep.subr.bf16.mxu0 %v4063
        %4136 = vmatpush2.bf16.msra.mxu0 %v4062
        %4137 = vmatprep.mubr.bf16.mxu0 %v4103
        %4138 = vmatmul.mubr.bf16.gmra.mxu0 %v3960
        %v4139 = vpop.f32.mrf.mxu0
        %v4140 = vadd.f32 0.0, %v4139
        %v4141 = vpop.f32.mrf.mxu0
        %v4142 = vadd.f32 0.0, %v4141
        %v4143 = vpop.f32.mrf.mxu0
        %v4144 = vpop.f32.mrf.mxu0
        %4145 = vdwg.mxu0
        %v4174 = vunpack.c.l.b16 %v3732
        %v4175 = vunpack.c.h.b16 %v3732
        %v4176 = vunpack.c.l.b16 %v3733
        %v4177 = vunpack.c.h.b16 %v3733
        %v4178 = vunpack.c.l.b16 %v3734
        %v4179 = vunpack.c.h.b16 %v3734
        %v4180 = vunpack.c.l.b16 %v3735
        %v4181 = vunpack.c.h.b16 %v3735
        %v4182 = vunpack.c.l.b16 %v3736
        %v4183 = vunpack.c.h.b16 %v3736
        %v4184 = vunpack.c.l.b16 %v3737
        %v4185 = vunpack.c.h.b16 %v3737
        %v4186 = vunpack.c.l.b16 %v3738
        %v4187 = vunpack.c.h.b16 %v3738
        %v4188 = vunpack.c.l.b16 %v3739
        %v4189 = vunpack.c.h.b16 %v3739
        %v4190 = vunpack.c.l.b16 %v3740
        %v4191 = vunpack.c.h.b16 %v3740
        %v4192 = vunpack.c.l.b16 %v3741
        %v4193 = vunpack.c.h.b16 %v3741
        %v4194 = vunpack.c.l.b16 %v3742
        %v4195 = vunpack.c.h.b16 %v3742
        %v4196 = vunpack.c.l.b16 %v3743
        %v4197 = vunpack.c.h.b16 %v3743
        %v4198 = vunpack.c.l.b16 %v3744
        %v4199 = vunpack.c.h.b16 %v3744
        %v4200 = vunpack.c.l.b16 %v3745
        %v4201 = vunpack.c.h.b16 %v3745
        %v4202 = vunpack.c.l.b16 %v3746
        %v4203 = vunpack.c.h.b16 %v3746
        %v4204 = vunpack.c.l.b16 %v3747
        %v4205 = vunpack.c.h.b16 %v3747
        %v4206 = vunpack.c.l.b16 %v3748
        %v4207 = vunpack.c.h.b16 %v3748
        %v4208 = vunpack.c.l.b16 %v3749
        %v4209 = vunpack.c.h.b16 %v3749
        %v4210 = vunpack.c.l.b16 %v3750
        %v4211 = vunpack.c.h.b16 %v3750
        %v4212 = vunpack.c.l.b16 %v3751
        %v4213 = vunpack.c.h.b16 %v3751
        %v4214 = vunpack.c.l.b16 %v3752
        %v4215 = vunpack.c.h.b16 %v3752
        %v4216 = vunpack.c.l.b16 %v3753
        %v4217 = vunpack.c.h.b16 %v3753
        %v4218 = vunpack.c.l.b16 %v3754
        %v4219 = vunpack.c.h.b16 %v3754
        %v4220 = vunpack.c.l.b16 %v3755
        %v4221 = vunpack.c.h.b16 %v3755
        %v4222 = vunpack.c.l.b16 %v3756
        %v4223 = vunpack.c.h.b16 %v3756
        %v4224 = vunpack.c.l.b16 %v3757
        %v4225 = vunpack.c.h.b16 %v3757
        %v4226 = vunpack.c.l.b16 %v3758
        %v4227 = vunpack.c.h.b16 %v3758
        %v4228 = vunpack.c.l.b16 %v3759
        %v4229 = vunpack.c.h.b16 %v3759
        %v4230 = vpack.c.b16 %v4176, %v4174
        %v4231 = vpack.c.b16 %v4177, %v4175
        %v4232 = vpack.c.b16 %v4180, %v4178
        %v4233 = vpack.c.b16 %v4181, %v4179
        %v4234 = vpack.c.b16 %v4184, %v4182
        %v4235 = vpack.c.b16 %v4185, %v4183
        %v4236 = vpack.c.b16 %v4188, %v4186
        %v4237 = vpack.c.b16 %v4189, %v4187
        %v4238 = vpack.c.b16 %v4192, %v4190
        %v4239 = vpack.c.b16 %v4193, %v4191
        %v4240 = vpack.c.b16 %v4196, %v4194
        %v4241 = vpack.c.b16 %v4197, %v4195
        %v4242 = vpack.c.b16 %v4200, %v4198
        %v4243 = vpack.c.b16 %v4201, %v4199
        %v4244 = vpack.c.b16 %v4204, %v4202
        %v4245 = vpack.c.b16 %v4205, %v4203
        %v4246 = vpack.c.b16 %v4208, %v4206
        %v4247 = vpack.c.b16 %v4209, %v4207
        %v4248 = vpack.c.b16 %v4212, %v4210
        %v4249 = vpack.c.b16 %v4213, %v4211
        %v4250 = vpack.c.b16 %v4216, %v4214
        %v4251 = vpack.c.b16 %v4217, %v4215
        %v4252 = vpack.c.b16 %v4220, %v4218
        %v4253 = vpack.c.b16 %v4221, %v4219
        %v4254 = vpack.c.b16 %v4224, %v4222
        %v4255 = vpack.c.b16 %v4225, %v4223
        %v4256 = vpack.c.b16 %v4228, %v4226
        %v4257 = vpack.c.b16 %v4229, %v4227
        %4286 = vmatprep.subr.bf16.mxu0 %v4245
        %4287 = vmatpush1.bf16.msra.mxu0 %v4244
        %4288 = vmatprep.subr.bf16.mxu0 %v4243
        %4289 = vmatpush1.bf16.msra.mxu0 %v4242
        %4290 = vmatprep.subr.bf16.mxu0 %v4241
        %4291 = vmatpush1.bf16.msra.mxu0 %v4240
        %4292 = vmatprep.subr.bf16.mxu0 %v4239
        %4293 = vmatpush1.bf16.msra.mxu0 %v4238
        %4294 = vmatprep.subr.bf16.mxu0 %v4237
        %4295 = vmatpush1.bf16.msra.mxu0 %v4236
        %4296 = vmatprep.subr.bf16.mxu0 %v4235
        %4297 = vmatpush1.bf16.msra.mxu0 %v4234
        %4298 = vmatprep.subr.bf16.mxu0 %v4233
        %4299 = vmatpush1.bf16.msra.mxu0 %v4232
        %4300 = vmatprep.subr.bf16.mxu0 %v4231
        %4301 = vmatpush1.bf16.msra.mxu0 %v4230
        %4302 = vmatprep.subr.bf16.mxu0 0
        %4303 = vmatpush2.bf16.msra.mxu0 0
        %4304 = vmatprep.subr.bf16.mxu0 0
        %4305 = vmatpush2.bf16.msra.mxu0 0
        %4306 = vmatprep.subr.bf16.mxu0 %v4257
        %4307 = vmatpush2.bf16.msra.mxu0 %v4256
        %4308 = vmatprep.subr.bf16.mxu0 %v4255
        %4309 = vmatpush2.bf16.msra.mxu0 %v4254
        %4310 = vmatprep.subr.bf16.mxu0 %v4253
        %4311 = vmatpush2.bf16.msra.mxu0 %v4252
        %4312 = vmatprep.subr.bf16.mxu0 %v4251
        %4313 = vmatpush2.bf16.msra.mxu0 %v4250
        %4314 = vmatprep.subr.bf16.mxu0 %v4249
        %4315 = vmatpush2.bf16.msra.mxu0 %v4248
        %4316 = vmatprep.subr.bf16.mxu0 %v4247
        %4317 = vmatpush2.bf16.msra.mxu0 %v4246
        %4318 = vmatprep.mubr.bf16.mxu0 %v3915
        %4319 = vmatmul.mubr.bf16.gmra.mxu0 %v3761
        %v4320 = vpop.f32.mrf.mxu0
        %v4321 = vadd.f32 %v4140, %v4320
        %v4322 = vpop.f32.mrf.mxu0
        %v4323 = vadd.f32 %v4142, %v4322
        %v4324 = vpop.f32.mrf.mxu0
        %v4325 = vpop.f32.mrf.mxu0
        %4326 = vdwg.mxu0
        %v4327 = vadd.f32 %v4321, %v3767
        %v4328 = vadd.f32 %v4323, %v3771
        %v4329 = vmax.f32 %v4327, 0.0
        %v4330 = vmax.f32 %v4328, 0.0
        %v4333 = vrot.slane %v3958, 1
        %v4334 = vrot.slane %v3959, 1
        %v4337 = vsel %vm715, %v4333, 0.0
        %v4338 = vsel %vm715, %v4334, 0.0
        %v4339 = vld [vmem:[%s14] sm:$0xf]
        %v4340 = vld [vmem:[%s14 + $0x4] sm:$0xf]
        %v4341 = vld [vmem:[%s14 + $0x8] sm:$0xf]
        %v4342 = vld [vmem:[%s14 + $0xc] sm:$0xf]
        %v4343 = vld [vmem:[%s14 + $0x10] sm:$0xf]
        %v4344 = vld [vmem:[%s14 + $0x14] sm:$0xf]
        %v4345 = vld [vmem:[%s14 + $0x18] sm:$0xf]
        %v4346 = vld [vmem:[%s14 + $0x1c] sm:$0xf]
        %v4347 = vld [vmem:[%s14 + $0x20] sm:$0xf]
        %v4348 = vld [vmem:[%s14 + $0x24] sm:$0xf]
        %v4349 = vld [vmem:[%s14 + $0x28] sm:$0xf]
        %v4350 = vld [vmem:[%s14 + $0x2c] sm:$0xf]
        %v4351 = vld [vmem:[%s14 + $0x30] sm:$0xf]
        %v4352 = vld [vmem:[%s14 + $0x34] sm:$0xf]
        %v4353 = vld [vmem:[%s14 + $0x38] sm:$0xf]
        %v4354 = vld [vmem:[%s14 + $0x3c] sm:$0xf]
        %v4355 = vld [vmem:[%s14 + $0x40] sm:$0xf]
        %v4356 = vld [vmem:[%s14 + $0x44] sm:$0xf]
        %v4357 = vld [vmem:[%s14 + $0x48] sm:$0xf]
        %v4358 = vld [vmem:[%s14 + $0x4c] sm:$0xf]
        %v4359 = vld [vmem:[%s14 + $0x50] sm:$0xf]
        %v4360 = vld [vmem:[%s14 + $0x54] sm:$0xf]
        %v4361 = vld [vmem:[%s14 + $0x58] sm:$0xf]
        %v4362 = vld [vmem:[%s14 + $0x5c] sm:$0xf]
        %v4363 = vld [vmem:[%s14 + $0x60] sm:$0xf]
        %v4364 = vld [vmem:[%s14 + $0x64] sm:$0xf]
        %v4365 = vld [vmem:[%s14 + $0x68] sm:$0xf]
        %v4366 = vld [vmem:[%s14 + $0x6c] sm:$0xf]
        %s4367 = scalar_lea.vmem %s14, 112
        %v4368 = vld [vmem:[%s4367] sm:$0xf]
        %v4369 = vld [vmem:[%s4367 + $0x4] sm:$0xf]
        %v4370 = vld [vmem:[%s4367 + $0x8] sm:$0xf]
        %v4371 = vld [vmem:[%s4367 + $0xc] sm:$0xf]
        %v4372 = vld [vmem:[%s4367 + $0x10] sm:$0xf]
        %v4373 = vld [vmem:[%s4367 + $0x14] sm:$0xf]
        %v4374 = vld [vmem:[%s4367 + $0x18] sm:$0xf]
        %v4375 = vld [vmem:[%s4367 + $0x1c] sm:$0xf]
        %v4376 = vld [vmem:[%s4367 + $0x20] sm:$0xf]
        %v4377 = vld [vmem:[%s4367 + $0x24] sm:$0xf]
        %v4378 = vld [vmem:[%s4367 + $0x28] sm:$0xf]
        %v4379 = vld [vmem:[%s4367 + $0x2c] sm:$0xf]
        %v4380 = vld [vmem:[%s4367 + $0x30] sm:$0xf]
        %v4381 = vld [vmem:[%s4367 + $0x34] sm:$0xf]
        %v4382 = vld [vmem:[%s4367 + $0x38] sm:$0xf]
        %v4383 = vld [vmem:[%s4367 + $0x3c] sm:$0xf]
        %v4384 = vld [vmem:[%s4367 + $0x40] sm:$0xf]
        %v4385 = vld [vmem:[%s4367 + $0x44] sm:$0xf]
        %v4386 = vld [vmem:[%s4367 + $0x48] sm:$0xf]
        %v4387 = vld [vmem:[%s4367 + $0x4c] sm:$0xf]
        %v4388 = vld [vmem:[%s4367 + $0x50] sm:$0xf]
        %v4389 = vld [vmem:[%s4367 + $0x54] sm:$0xf]
        %v4390 = vld [vmem:[%s4367 + $0x58] sm:$0xf]
        %v4391 = vld [vmem:[%s4367 + $0x5c] sm:$0xf]
        %v4392 = vld [vmem:[%s4367 + $0x60] sm:$0xf]
        %v4393 = vld [vmem:[%s4367 + $0x64] sm:$0xf]
        %v4394 = vld [vmem:[%s4367 + $0x68] sm:$0xf]
        %v4395 = vld [vmem:[%s4367 + $0x6c] sm:$0xf]
        %s4396 = scalar_lea.vmem %s14, 224
        %v4397 = vld [vmem:[%s4396] sm:$0xf]
        %v4398 = vld [vmem:[%s4396 + $0x4] sm:$0xf]
        %v4399 = vld [vmem:[%s4396 + $0x8] sm:$0xf]
        %v4400 = vld [vmem:[%s4396 + $0xc] sm:$0xf]
        %v4401 = vld [vmem:[%s4396 + $0x10] sm:$0xf]
        %v4402 = vld [vmem:[%s4396 + $0x14] sm:$0xf]
        %v4403 = vld [vmem:[%s4396 + $0x18] sm:$0xf]
        %v4404 = vld [vmem:[%s4396 + $0x1c] sm:$0xf]
        %v4405 = vld [vmem:[%s4396 + $0x20] sm:$0xf]
        %v4406 = vld [vmem:[%s4396 + $0x24] sm:$0xf]
        %v4407 = vld [vmem:[%s4396 + $0x28] sm:$0xf]
        %v4408 = vld [vmem:[%s4396 + $0x2c] sm:$0xf]
        %v4409 = vld [vmem:[%s4396 + $0x30] sm:$0xf]
        %v4410 = vld [vmem:[%s4396 + $0x34] sm:$0xf]
        %v4411 = vld [vmem:[%s4396 + $0x38] sm:$0xf]
        %v4412 = vld [vmem:[%s4396 + $0x3c] sm:$0xf]
        %v4413 = vld [vmem:[%s4396 + $0x40] sm:$0xf]
        %v4414 = vld [vmem:[%s4396 + $0x44] sm:$0xf]
        %v4415 = vld [vmem:[%s4396 + $0x48] sm:$0xf]
        %v4416 = vld [vmem:[%s4396 + $0x4c] sm:$0xf]
        %v4417 = vld [vmem:[%s4396 + $0x50] sm:$0xf]
        %v4418 = vld [vmem:[%s4396 + $0x54] sm:$0xf]
        %v4419 = vld [vmem:[%s4396 + $0x58] sm:$0xf]
        %v4420 = vld [vmem:[%s4396 + $0x5c] sm:$0xf]
        %v4421 = vld [vmem:[%s4396 + $0x60] sm:$0xf]
        %v4422 = vld [vmem:[%s4396 + $0x64] sm:$0xf]
        %v4423 = vld [vmem:[%s4396 + $0x68] sm:$0xf]
        %v4424 = vld [vmem:[%s4396 + $0x6c] sm:$0xf]
        %v4425 = vpack.c.bf16 %v3958, %v3958
        %v4426 = vpack.c.bf16 %v3959, %v3959
        %v4455 = vunpack.c.l.b16 %v4368
        %v4456 = vunpack.c.l.b16 %v4369
        %v4457 = vunpack.c.l.b16 %v4370
        %v4458 = vunpack.c.l.b16 %v4371
        %v4459 = vunpack.c.l.b16 %v4372
        %v4460 = vunpack.c.l.b16 %v4373
        %v4461 = vunpack.c.l.b16 %v4374
        %v4462 = vunpack.c.l.b16 %v4375
        %v4463 = vunpack.c.l.b16 %v4376
        %v4464 = vunpack.c.l.b16 %v4377
        %v4465 = vunpack.c.l.b16 %v4378
        %v4466 = vunpack.c.l.b16 %v4379
        %v4467 = vunpack.c.l.b16 %v4380
        %v4468 = vunpack.c.l.b16 %v4381
        %v4469 = vunpack.c.l.b16 %v4382
        %v4470 = vunpack.c.l.b16 %v4383
        %v4471 = vunpack.c.l.b16 %v4384
        %v4472 = vunpack.c.l.b16 %v4385
        %v4473 = vunpack.c.l.b16 %v4386
        %v4474 = vunpack.c.l.b16 %v4387
        %v4475 = vunpack.c.l.b16 %v4388
        %v4476 = vunpack.c.l.b16 %v4389
        %v4477 = vunpack.c.l.b16 %v4390
        %v4478 = vunpack.c.l.b16 %v4391
        %v4479 = vunpack.c.l.b16 %v4392
        %v4480 = vunpack.c.l.b16 %v4393
        %v4481 = vunpack.c.l.b16 %v4394
        %v4482 = vunpack.c.l.b16 %v4395
        %v4483 = vpack.c.b16 %v4456, %v4455
        %v4484 = vpack.c.b16 %v4458, %v4457
        %v4485 = vpack.c.b16 %v4460, %v4459
        %v4486 = vpack.c.b16 %v4462, %v4461
        %v4487 = vpack.c.b16 %v4464, %v4463
        %v4488 = vpack.c.b16 %v4466, %v4465
        %v4489 = vpack.c.b16 %v4468, %v4467
        %v4490 = vpack.c.b16 %v4470, %v4469
        %v4491 = vpack.c.b16 %v4472, %v4471
        %v4492 = vpack.c.b16 %v4474, %v4473
        %v4493 = vpack.c.b16 %v4476, %v4475
        %v4494 = vpack.c.b16 %v4478, %v4477
        %v4495 = vpack.c.b16 %v4480, %v4479
        %v4496 = vpack.c.b16 %v4482, %v4481
        %v4512 = vsel %vm1292, %v4426, 0
        %4514 = vmatprep.subr.bf16.mxu0 0
        %4515 = vmatpush1.bf16.msra.mxu0 %v4490
        %4516 = vmatprep.subr.bf16.mxu0 0
        %4517 = vmatpush1.bf16.msra.mxu0 %v4489
        %4518 = vmatprep.subr.bf16.mxu0 0
        %4519 = vmatpush1.bf16.msra.mxu0 %v4488
        %4520 = vmatprep.subr.bf16.mxu0 0
        %4521 = vmatpush1.bf16.msra.mxu0 %v4487
        %4522 = vmatprep.subr.bf16.mxu0 0
        %4523 = vmatpush1.bf16.msra.mxu0 %v4486
        %4524 = vmatprep.subr.bf16.mxu0 0
        %4525 = vmatpush1.bf16.msra.mxu0 %v4485
        %4526 = vmatprep.subr.bf16.mxu0 0
        %4527 = vmatpush1.bf16.msra.mxu0 %v4484
        %4528 = vmatprep.subr.bf16.mxu0 0
        %4529 = vmatpush1.bf16.msra.mxu0 %v4483
        %4530 = vmatprep.subr.bf16.mxu0 0
        %4531 = vmatpush2.bf16.msra.mxu0 0
        %4532 = vmatprep.subr.bf16.mxu0 0
        %4533 = vmatpush2.bf16.msra.mxu0 0
        %4534 = vmatprep.subr.bf16.mxu0 0
        %4535 = vmatpush2.bf16.msra.mxu0 %v4496
        %4536 = vmatprep.subr.bf16.mxu0 0
        %4537 = vmatpush2.bf16.msra.mxu0 %v4495
        %4538 = vmatprep.subr.bf16.mxu0 0
        %4539 = vmatpush2.bf16.msra.mxu0 %v4494
        %4540 = vmatprep.subr.bf16.mxu0 0
        %4541 = vmatpush2.bf16.msra.mxu0 %v4493
        %4542 = vmatprep.subr.bf16.mxu0 0
        %4543 = vmatpush2.bf16.msra.mxu0 %v4492
        %4544 = vmatprep.subr.bf16.mxu0 0
        %4545 = vmatpush2.bf16.msra.mxu0 %v4491
        %4546 = vmatprep.mubr.bf16.mxu0 %v4512
        %4547 = vmatmul.mubr.bf16.gmra.mxu0 %v4425
        %v4548 = vpop.f32.mrf.mxu0
        %v4549 = vadd.f32 0.0, %v4548
        %v4550 = vpop.f32.mrf.mxu0
        %v4551 = vpop.f32.mrf.mxu0
        %v4552 = vpop.f32.mrf.mxu0
        %4553 = vdwg.mxu0
        %v4554 = vpack.c.bf16 %v4329, %v4329
        %v4555 = vpack.c.bf16 %v4330, %v4330
        %v4584 = vunpack.c.l.b16 %v4339
        %v4585 = vunpack.c.l.b16 %v4340
        %v4586 = vunpack.c.l.b16 %v4341
        %v4587 = vunpack.c.l.b16 %v4342
        %v4588 = vunpack.c.l.b16 %v4343
        %v4589 = vunpack.c.l.b16 %v4344
        %v4590 = vunpack.c.l.b16 %v4345
        %v4591 = vunpack.c.l.b16 %v4346
        %v4592 = vunpack.c.l.b16 %v4347
        %v4593 = vunpack.c.l.b16 %v4348
        %v4594 = vunpack.c.l.b16 %v4349
        %v4595 = vunpack.c.l.b16 %v4350
        %v4596 = vunpack.c.l.b16 %v4351
        %v4597 = vunpack.c.l.b16 %v4352
        %v4598 = vunpack.c.l.b16 %v4353
        %v4599 = vunpack.c.l.b16 %v4354
        %v4600 = vunpack.c.l.b16 %v4355
        %v4601 = vunpack.c.l.b16 %v4356
        %v4602 = vunpack.c.l.b16 %v4357
        %v4603 = vunpack.c.l.b16 %v4358
        %v4604 = vunpack.c.l.b16 %v4359
        %v4605 = vunpack.c.l.b16 %v4360
        %v4606 = vunpack.c.l.b16 %v4361
        %v4607 = vunpack.c.l.b16 %v4362
        %v4608 = vunpack.c.l.b16 %v4363
        %v4609 = vunpack.c.l.b16 %v4364
        %v4610 = vunpack.c.l.b16 %v4365
        %v4611 = vunpack.c.l.b16 %v4366
        %v4612 = vpack.c.b16 %v4585, %v4584
        %v4613 = vpack.c.b16 %v4587, %v4586
        %v4614 = vpack.c.b16 %v4589, %v4588
        %v4615 = vpack.c.b16 %v4591, %v4590
        %v4616 = vpack.c.b16 %v4593, %v4592
        %v4617 = vpack.c.b16 %v4595, %v4594
        %v4618 = vpack.c.b16 %v4597, %v4596
        %v4619 = vpack.c.b16 %v4599, %v4598
        %v4620 = vpack.c.b16 %v4601, %v4600
        %v4621 = vpack.c.b16 %v4603, %v4602
        %v4622 = vpack.c.b16 %v4605, %v4604
        %v4623 = vpack.c.b16 %v4607, %v4606
        %v4624 = vpack.c.b16 %v4609, %v4608
        %v4625 = vpack.c.b16 %v4611, %v4610
        %v4641 = vsel %vm1292, %v4555, 0
        %4643 = vmatprep.subr.bf16.mxu0 0
        %4644 = vmatpush1.bf16.msra.mxu0 %v4619
        %4645 = vmatprep.subr.bf16.mxu0 0
        %4646 = vmatpush1.bf16.msra.mxu0 %v4618
        %4647 = vmatprep.subr.bf16.mxu0 0
        %4648 = vmatpush1.bf16.msra.mxu0 %v4617
        %4649 = vmatprep.subr.bf16.mxu0 0
        %4650 = vmatpush1.bf16.msra.mxu0 %v4616
        %4651 = vmatprep.subr.bf16.mxu0 0
        %4652 = vmatpush1.bf16.msra.mxu0 %v4615
        %4653 = vmatprep.subr.bf16.mxu0 0
        %4654 = vmatpush1.bf16.msra.mxu0 %v4614
        %4655 = vmatprep.subr.bf16.mxu0 0
        %4656 = vmatpush1.bf16.msra.mxu0 %v4613
        %4657 = vmatprep.subr.bf16.mxu0 0
        %4658 = vmatpush1.bf16.msra.mxu0 %v4612
        %4659 = vmatprep.subr.bf16.mxu0 0
        %4660 = vmatpush2.bf16.msra.mxu0 0
        %4661 = vmatprep.subr.bf16.mxu0 0
        %4662 = vmatpush2.bf16.msra.mxu0 0
        %4663 = vmatprep.subr.bf16.mxu0 0
        %4664 = vmatpush2.bf16.msra.mxu0 %v4625
        %4665 = vmatprep.subr.bf16.mxu0 0
        %4666 = vmatpush2.bf16.msra.mxu0 %v4624
        %4667 = vmatprep.subr.bf16.mxu0 0
        %4668 = vmatpush2.bf16.msra.mxu0 %v4623
        %4669 = vmatprep.subr.bf16.mxu0 0
        %4670 = vmatpush2.bf16.msra.mxu0 %v4622
        %4671 = vmatprep.subr.bf16.mxu0 0
        %4672 = vmatpush2.bf16.msra.mxu0 %v4621
        %4673 = vmatprep.subr.bf16.mxu0 0
        %4674 = vmatpush2.bf16.msra.mxu0 %v4620
        %4675 = vmatprep.mubr.bf16.mxu0 %v4641
        %4676 = vmatmul.mubr.bf16.gmra.mxu0 %v4554
        %v4677 = vpop.f32.mrf.mxu0
        %v4678 = vadd.f32 0.0, %v4677
        %v4679 = vpop.f32.mrf.mxu0
        %v4680 = vpop.f32.mrf.mxu0
        %v4681 = vpop.f32.mrf.mxu0
        %4682 = vdwg.mxu0
        %v4711 = vunpack.c.l.b16 %v4397
        %v4712 = vunpack.c.l.b16 %v4398
        %v4713 = vunpack.c.l.b16 %v4399
        %v4714 = vunpack.c.l.b16 %v4400
        %v4715 = vunpack.c.l.b16 %v4401
        %v4716 = vunpack.c.l.b16 %v4402
        %v4717 = vunpack.c.l.b16 %v4403
        %v4718 = vunpack.c.l.b16 %v4404
        %v4719 = vunpack.c.l.b16 %v4405
        %v4720 = vunpack.c.l.b16 %v4406
        %v4721 = vunpack.c.l.b16 %v4407
        %v4722 = vunpack.c.l.b16 %v4408
        %v4723 = vunpack.c.l.b16 %v4409
        %v4724 = vunpack.c.l.b16 %v4410
        %v4725 = vunpack.c.l.b16 %v4411
        %v4726 = vunpack.c.l.b16 %v4412
        %v4727 = vunpack.c.l.b16 %v4413
        %v4728 = vunpack.c.l.b16 %v4414
        %v4729 = vunpack.c.l.b16 %v4415
        %v4730 = vunpack.c.l.b16 %v4416
        %v4731 = vunpack.c.l.b16 %v4417
        %v4732 = vunpack.c.l.b16 %v4418
        %v4733 = vunpack.c.l.b16 %v4419
        %v4734 = vunpack.c.l.b16 %v4420
        %v4735 = vunpack.c.l.b16 %v4421
        %v4736 = vunpack.c.l.b16 %v4422
        %v4737 = vunpack.c.l.b16 %v4423
        %v4738 = vunpack.c.l.b16 %v4424
        %v4739 = vpack.c.b16 %v4712, %v4711
        %v4740 = vpack.c.b16 %v4714, %v4713
        %v4741 = vpack.c.b16 %v4716, %v4715
        %v4742 = vpack.c.b16 %v4718, %v4717
        %v4743 = vpack.c.b16 %v4720, %v4719
        %v4744 = vpack.c.b16 %v4722, %v4721
        %v4745 = vpack.c.b16 %v4724, %v4723
        %v4746 = vpack.c.b16 %v4726, %v4725
        %v4747 = vpack.c.b16 %v4728, %v4727
        %v4748 = vpack.c.b16 %v4730, %v4729
        %v4749 = vpack.c.b16 %v4732, %v4731
        %v4750 = vpack.c.b16 %v4734, %v4733
        %v4751 = vpack.c.b16 %v4736, %v4735
        %v4752 = vpack.c.b16 %v4738, %v4737
        %4767 = vmatprep.subr.bf16.mxu0 0
        %4768 = vmatpush1.bf16.msra.mxu0 %v4746
        %4769 = vmatprep.subr.bf16.mxu0 0
        %4770 = vmatpush1.bf16.msra.mxu0 %v4745
        %4771 = vmatprep.subr.bf16.mxu0 0
        %4772 = vmatpush1.bf16.msra.mxu0 %v4744
        %4773 = vmatprep.subr.bf16.mxu0 0
        %4774 = vmatpush1.bf16.msra.mxu0 %v4743
        %4775 = vmatprep.subr.bf16.mxu0 0
        %4776 = vmatpush1.bf16.msra.mxu0 %v4742
        %4777 = vmatprep.subr.bf16.mxu0 0
        %4778 = vmatpush1.bf16.msra.mxu0 %v4741
        %4779 = vmatprep.subr.bf16.mxu0 0
        %4780 = vmatpush1.bf16.msra.mxu0 %v4740
        %4781 = vmatprep.subr.bf16.mxu0 0
        %4782 = vmatpush1.bf16.msra.mxu0 %v4739
        %4783 = vmatprep.subr.bf16.mxu0 0
        %4784 = vmatpush2.bf16.msra.mxu0 0
        %4785 = vmatprep.subr.bf16.mxu0 0
        %4786 = vmatpush2.bf16.msra.mxu0 0
        %4787 = vmatprep.subr.bf16.mxu0 0
        %4788 = vmatpush2.bf16.msra.mxu0 %v4752
        %4789 = vmatprep.subr.bf16.mxu0 0
        %4790 = vmatpush2.bf16.msra.mxu0 %v4751
        %4791 = vmatprep.subr.bf16.mxu0 0
        %4792 = vmatpush2.bf16.msra.mxu0 %v4750
        %4793 = vmatprep.subr.bf16.mxu0 0
        %4794 = vmatpush2.bf16.msra.mxu0 %v4749
        %4795 = vmatprep.subr.bf16.mxu0 0
        %4796 = vmatpush2.bf16.msra.mxu0 %v4748
        %4797 = vmatprep.subr.bf16.mxu0 0
        %4798 = vmatpush2.bf16.msra.mxu0 %v4747
        %4799 = vmatprep.mubr.bf16.mxu0 %v4512
        %4800 = vmatmul.mubr.bf16.gmra.mxu0 %v4425
        %v4801 = vpop.f32.mrf.mxu0
        %v4802 = vadd.f32 %v4678, %v4801
        %v4803 = vpop.f32.mrf.mxu0
        %v4804 = vpop.f32.mrf.mxu0
        %v4805 = vpop.f32.mrf.mxu0
        %4806 = vdwg.mxu0
        %4807 = vmatprep.subr.bf16.mxu0 0
        %4808 = vmatpush1.bf16.msra.mxu0 %v4490
        %4809 = vmatprep.subr.bf16.mxu0 0
        %4810 = vmatpush1.bf16.msra.mxu0 %v4489
        %4811 = vmatprep.subr.bf16.mxu0 0
        %4812 = vmatpush1.bf16.msra.mxu0 %v4488
        %4813 = vmatprep.subr.bf16.mxu0 0
        %4814 = vmatpush1.bf16.msra.mxu0 %v4487
        %4815 = vmatprep.subr.bf16.mxu0 0
        %4816 = vmatpush1.bf16.msra.mxu0 %v4486
        %4817 = vmatprep.subr.bf16.mxu0 0
        %4818 = vmatpush1.bf16.msra.mxu0 %v4485
        %4819 = vmatprep.subr.bf16.mxu0 0
        %4820 = vmatpush1.bf16.msra.mxu0 %v4484
        %4821 = vmatprep.subr.bf16.mxu0 0
        %4822 = vmatpush1.bf16.msra.mxu0 %v4483
        %4823 = vmatprep.subr.bf16.mxu0 0
        %4824 = vmatpush2.bf16.msra.mxu0 0
        %4825 = vmatprep.subr.bf16.mxu0 0
        %4826 = vmatpush2.bf16.msra.mxu0 0
        %4827 = vmatprep.subr.bf16.mxu0 0
        %4828 = vmatpush2.bf16.msra.mxu0 %v4496
        %4829 = vmatprep.subr.bf16.mxu0 0
        %4830 = vmatpush2.bf16.msra.mxu0 %v4495
        %4831 = vmatprep.subr.bf16.mxu0 0
        %4832 = vmatpush2.bf16.msra.mxu0 %v4494
        %4833 = vmatprep.subr.bf16.mxu0 0
        %4834 = vmatpush2.bf16.msra.mxu0 %v4493
        %4835 = vmatprep.subr.bf16.mxu0 0
        %4836 = vmatpush2.bf16.msra.mxu0 %v4492
        %4837 = vmatprep.subr.bf16.mxu0 0
        %4838 = vmatpush2.bf16.msra.mxu0 %v4491
        %4839 = vmatprep.mubr.bf16.mxu0 %v4641
        %4840 = vmatmul.mubr.bf16.gmra.mxu0 %v4554
        %v4841 = vpop.f32.mrf.mxu0
        %v4842 = vadd.f32 0.0, %v4841
        %v4843 = vpop.f32.mrf.mxu0
        %v4844 = vpop.f32.mrf.mxu0
        %v4845 = vpop.f32.mrf.mxu0
        %4846 = vdwg.mxu0
        %v4847 = vpack.c.bf16 %v4337, %v4337
        %v4848 = vpack.c.bf16 %v4338, %v4338
        %v4850 = vsel %vm1292, %v4848, 0
        %4852 = vmatprep.subr.bf16.mxu0 0
        %4853 = vmatpush1.bf16.msra.mxu0 %v4619
        %4854 = vmatprep.subr.bf16.mxu0 0
        %4855 = vmatpush1.bf16.msra.mxu0 %v4618
        %4856 = vmatprep.subr.bf16.mxu0 0
        %4857 = vmatpush1.bf16.msra.mxu0 %v4617
        %4858 = vmatprep.subr.bf16.mxu0 0
        %4859 = vmatpush1.bf16.msra.mxu0 %v4616
        %4860 = vmatprep.subr.bf16.mxu0 0
        %4861 = vmatpush1.bf16.msra.mxu0 %v4615
        %4862 = vmatprep.subr.bf16.mxu0 0
        %4863 = vmatpush1.bf16.msra.mxu0 %v4614
        %4864 = vmatprep.subr.bf16.mxu0 0
        %4865 = vmatpush1.bf16.msra.mxu0 %v4613
        %4866 = vmatprep.subr.bf16.mxu0 0
        %4867 = vmatpush1.bf16.msra.mxu0 %v4612
        %4868 = vmatprep.subr.bf16.mxu0 0
        %4869 = vmatpush2.bf16.msra.mxu0 0
        %4870 = vmatprep.subr.bf16.mxu0 0
        %4871 = vmatpush2.bf16.msra.mxu0 0
        %4872 = vmatprep.subr.bf16.mxu0 0
        %4873 = vmatpush2.bf16.msra.mxu0 %v4625
        %4874 = vmatprep.subr.bf16.mxu0 0
        %4875 = vmatpush2.bf16.msra.mxu0 %v4624
        %4876 = vmatprep.subr.bf16.mxu0 0
        %4877 = vmatpush2.bf16.msra.mxu0 %v4623
        %4878 = vmatprep.subr.bf16.mxu0 0
        %4879 = vmatpush2.bf16.msra.mxu0 %v4622
        %4880 = vmatprep.subr.bf16.mxu0 0
        %4881 = vmatpush2.bf16.msra.mxu0 %v4621
        %4882 = vmatprep.subr.bf16.mxu0 0
        %4883 = vmatpush2.bf16.msra.mxu0 %v4620
        %4884 = vmatprep.mubr.bf16.mxu0 %v4850
        %4885 = vmatmul.mubr.bf16.gmra.mxu0 %v4847
        %v4886 = vpop.f32.mrf.mxu0
        %v4887 = vadd.f32 0.0, %v4886
        %v4888 = vpop.f32.mrf.mxu0
        %v4889 = vpop.f32.mrf.mxu0
        %v4890 = vpop.f32.mrf.mxu0
        %4891 = vdwg.mxu0
        %4892 = vmatprep.subr.bf16.mxu0 0
        %4893 = vmatpush1.bf16.msra.mxu0 %v4746
        %4894 = vmatprep.subr.bf16.mxu0 0
        %4895 = vmatpush1.bf16.msra.mxu0 %v4745
        %4896 = vmatprep.subr.bf16.mxu0 0
        %4897 = vmatpush1.bf16.msra.mxu0 %v4744
        %4898 = vmatprep.subr.bf16.mxu0 0
        %4899 = vmatpush1.bf16.msra.mxu0 %v4743
        %4900 = vmatprep.subr.bf16.mxu0 0
        %4901 = vmatpush1.bf16.msra.mxu0 %v4742
        %4902 = vmatprep.subr.bf16.mxu0 0
        %4903 = vmatpush1.bf16.msra.mxu0 %v4741
        %4904 = vmatprep.subr.bf16.mxu0 0
        %4905 = vmatpush1.bf16.msra.mxu0 %v4740
        %4906 = vmatprep.subr.bf16.mxu0 0
        %4907 = vmatpush1.bf16.msra.mxu0 %v4739
        %4908 = vmatprep.subr.bf16.mxu0 0
        %4909 = vmatpush2.bf16.msra.mxu0 0
        %4910 = vmatprep.subr.bf16.mxu0 0
        %4911 = vmatpush2.bf16.msra.mxu0 0
        %4912 = vmatprep.subr.bf16.mxu0 0
        %4913 = vmatpush2.bf16.msra.mxu0 %v4752
        %4914 = vmatprep.subr.bf16.mxu0 0
        %4915 = vmatpush2.bf16.msra.mxu0 %v4751
        %4916 = vmatprep.subr.bf16.mxu0 0
        %4917 = vmatpush2.bf16.msra.mxu0 %v4750
        %4918 = vmatprep.subr.bf16.mxu0 0
        %4919 = vmatpush2.bf16.msra.mxu0 %v4749
        %4920 = vmatprep.subr.bf16.mxu0 0
        %4921 = vmatpush2.bf16.msra.mxu0 %v4748
        %4922 = vmatprep.subr.bf16.mxu0 0
        %4923 = vmatpush2.bf16.msra.mxu0 %v4747
        %4924 = vmatprep.mubr.bf16.mxu0 %v4641
        %4925 = vmatmul.mubr.bf16.gmra.mxu0 %v4554
        %v4926 = vpop.f32.mrf.mxu0
        %v4927 = vadd.f32 %v4887, %v4926
        %v4928 = vpop.f32.mrf.mxu0
        %v4929 = vpop.f32.mrf.mxu0
        %v4930 = vpop.f32.mrf.mxu0
        %4931 = vdwg.mxu0
        %4933 = vrot.lane.b32.xlu0 %v4802, 28
        %v4934 = vpop.permute.xlu0 %4933
        %4937 = vrot.lane.b32.xlu0 %v4842, 56
        %v4938 = vpop.permute.xlu0 %4937
        %4941 = vrot.lane.b32.xlu0 %v4927, 84
        %v4942 = vpop.permute.xlu0 %4941
        %v4944 = vsel %vm711, %v4549, %v4934
        %vm4945 = vcmask 457728
        %v4946 = vsel %vm4945, %v4944, %v4938
        %vm4947 = vcmask 687104
        %v4948 = vsel %vm4947, %v4946, %v4942
        %v4949 = vld [vmem:[#allocation2] sm:$0x1]
        %v4951 = vlaneseq
        %v4952 = vshrl.u32 %v4951, 7
        %v4953 = vsub.s32 0, %v4952
        %v4954 = vrot.slane %v4949, %v4953
        %4955 = vset.pattern.permute.xlu0 0
        %4956 = vperm.xlu0 %4955, %v4954
        %v4957 = vpop.permute.xlu0 %4956
        %v4959 = vadd.f32 %v4948, %v4957
        %v4960 = vxor.u32 %v4959, 2147483648
        %v4961 = vmul.f32 %v4960, 1.442695
        %v4962 = vpow.pop %v4961
        %v4963 = vadd.f32 %v4962, 1.0
        %v4964 = vrcp.pop %v4963
        %v4965 = vmul.f32 1.0, %v4964
        %vm4966 = vcmask 915456
        %4967 = vst.msk [vmem:[%s662] sm:$0x7f] %vm4966, %v4965
        %p4968 = scmp.lt.s32.totalorder %s33, 1
        %s4969 = scalar_select %p4968, %s33, 1
        %s4970 = scalar_lea.vmem %s16, %s4969
        %p4971 = scmp.lt.s32.totalorder %s33, 1
        %s4972 = scalar_select %p4971, %s33, 1
        %s4973 = smul.addr %s4972, 8
        %s4974 = scalar_lea.vmem %s17, %s4973
        // Predicated region
        $region135: #{vae_forward.1} parent=117 // pred_check
          %p4975 = pneg %p397
        $region136: #{vae_forward.1} parent=117 // pred_check_branch
          %4977 = sbr.rel (%p4975) target = $region138
        $region137: #{vae_forward.1} parent=117 // pred_region
          _
        $region138: #{vae_forward.1} parent=117 // pred_fallthru
          _
        // Predicated region
        $region139: #{vae_forward.1} parent=117 // pred_check
          %p4978 = pneg %p423
        $region140: #{vae_forward.1} parent=117 // pred_check_branch
          %4980 = sbr.rel (%p4978) target = $region142
        $region141: #{vae_forward.1} parent=117 // pred_region
          _
        $region142: #{vae_forward.1} parent=117 // pred_fallthru
          _
      $region118: #{vae_forward.1} parent=5 // pred_fallthru
        _
      %p4981 = scmp.le.s32.totalorder 2, %s28
      // Predicated region
      $region143: #{vae_forward.1} parent=5 // pred_check
        %p4982 = pneg %p4981
      $region144: #{vae_forward.1} parent=5 // pred_check_branch
        %4984 = sbr.rel (%p4982) target = $region146
      $region145: #{vae_forward.1} parent=5 // pred_region
        %s4985 = ssub.s32 %s28, 2
        // Predicated region
        $region147: #{vae_forward.1} parent=145 // pred_check
          %p4986 = pneg %p403
        $region148: #{vae_forward.1} parent=145 // pred_check_branch
          %4988 = sbr.rel (%p4986) target = $region150
        $region149: #{vae_forward.1} parent=145 // pred_region
          %p4989 = scmp.lt.s32.totalorder %s34, 1
          %s4990 = scalar_select %p4989, %s34, 1
          %s4991 = scalar_lea.vmem %s16, %s4990
        $region150: #{vae_forward.1} parent=145 // pred_fallthru
          _
        // Predicated region
        $region151: #{vae_forward.1} parent=145 // pred_check
          %p4992 = pneg %p429
        $region152: #{vae_forward.1} parent=145 // pred_check_branch
          %4994 = sbr.rel (%p4992) target = $region154
        $region153: #{vae_forward.1} parent=145 // pred_region
          %p4995 = scmp.lt.s32.totalorder %s34, 1
          %s4996 = scalar_select %p4995, %s34, 1
          %s4997 = smul.addr %s4996, 8
          %s4998 = scalar_lea.vmem %s17, %s4997
        $region154: #{vae_forward.1} parent=145 // pred_fallthru
          _
      $region146: #{vae_forward.1} parent=5 // pred_fallthru
        _
    $region6: #{vae_forward.1} parent=1 // loop_footer
      %s32 = sadd.s32 1, %s28
    $region7: #{vae_forward.1} parent=1 // loop_footer_branch
      %27 = sbr.rel target = $region3
    $region8: #{vae_forward.1} parent=1 // loop_exit
      _
    %4999 = vsyncpa [#allocation5], 1
    %s5000 = scalar_lea.sflag [#allocation5], 1
    %5001 = vsyncpa %s5000, 1
    %5002 = vsyncpa [#allocation7], 1

</llo_original>
